<compile_context>
chip_gen: v7x
topology: tpu7x:2x2x1
jax: 0.10.0
libtpu: 0.0.40
codegen_flags: <defaults>
</compile_context>

<pallas_src>
import functools

import jax
import jax.numpy as jnp
from jax.experimental import pallas as pl
from jax.experimental.pallas import tpu as pltpu


# -----------------------------------------------------------------------------
# Pallas kernel: one grid step processes TB samples (TB*L lanes).
# -----------------------------------------------------------------------------
def _dis_lin_kernel(x_ref, w1_ref, b1_ref, wcat_ref, bres_ref, wlin_ref,
                    sel_ref, blin_ref, out_ref, *, L, num_res_blocks):
    H = wcat_ref.shape[2]          # hidden channels (sublanes)
    N = x_ref.shape[1]             # TB * L lanes (batch fused on lanes)
    mm_dtype = wcat_ref.dtype      # f32 or bf16 (weights pre-cast host-side)

    # Within-sample position of every lane, built in-kernel (no HBM mask input).
    pos = jax.lax.broadcasted_iota(jnp.int32, (1, N), 1) % L
    tap_valid = [None] * 5
    for k in range(5):
        s = k - 2                  # input offset of tap k relative to output
        if s != 0:
            # lane m (input position p = m % L) contributes to output p - s;
            # valid iff 0 <= p - s < L  <=>  p >= s  and  p < L + s.
            tap_valid[k] = (pos >= s) & (pos < L + s)      # (1, N) bool

    def conv5(z, c):
        # Conv1d(H, H, 5, padding=2): one MXU push, tap shifts are lane rolls.
        p = jnp.dot(wcat_ref[c], z.astype(mm_dtype),
                    preferred_element_type=jnp.float32)     # (5H, N)
        taps = []
        for k in range(5):
            blk = p[k * H:(k + 1) * H, :]                   # sublane-aligned view
            s = k - 2
            if s != 0:
                blk = jnp.where(tap_valid[k], blk, 0.0)     # pad / sample boundary
                blk = pltpu.roll(blk, shift=(-s) % N, axis=1)  # XLU lane rotate
            taps.append(blk)
        acc = (taps[0] + taps[1]) + (taps[2] + taps[3]) + taps[4]  # tree add
        return acc + bres_ref[c]                             # bres_ref[c]: (H, 1)

    # 1x1 conv == per-position matmul over the amino channels.
    y = (jnp.dot(w1_ref[...], x_ref[...].astype(mm_dtype),
                 preferred_element_type=jnp.float32)
         + b1_ref[...])                                      # (H, N)

    # 5 ResBlocks: y + 0.3 * conv5(relu(conv5(relu(y))))
    for rb in range(num_res_blocks):
        h = conv5(jnp.maximum(y, 0.0), 2 * rb)
        h = conv5(jnp.maximum(h, 0.0), 2 * rb + 1)
        y = y + 0.3 * h

    # Linear(max_len*hidden, 1): elementwise weight, per-sample reduction via a
    # tiny per-tile selector matmul, single lane-dense store of (1, TB).
    prod = y * wlin_ref[...]                                 # (H, N)
    per_h = jnp.dot(prod, sel_ref[...],
                    preferred_element_type=jnp.float32)      # (H, TB)
    out_ref[...] = jnp.sum(per_h, axis=0, keepdims=True) + blin_ref[...]


# -----------------------------------------------------------------------------
# Wrapper: host-side re-layouts, tiling, BlockSpecs.
# -----------------------------------------------------------------------------
def _pick_tb(batch, seq_len, target_lanes=1024):
    """Largest divisor of `batch` whose tile (tb*seq_len lanes) fits the target."""
    best = 1
    for cand in range(1, batch + 1):
        if batch % cand == 0 and cand * seq_len <= target_lanes:
            best = cand
    return best


def dis_lin_block_cnn(x, torch_params, *, tb=None, matmul_dtype=jnp.float32):
    conv1_w, conv1_b, res_w, res_b, lin_w, lin_b = torch_params
    B, L, A = x.shape
    H = conv1_w.shape[0]
    n_conv = res_w.shape[0]
    num_res_blocks = n_conv // 2
    assert L > 2, "mask-before-roll requires tap shift magnitude (2) < max_len"

    if tb is None:
        tb = _pick_tb(B, L)
    assert B % tb == 0
    n_tiles = B // tb
    N = tb * L                     # lanes per grid step

    # ---- host-side re-layouts (never inside the kernel) ----
    w1t = conv1_w[:, :, 0].astype(matmul_dtype)                        # (H, A)
    b1 = conv1_b.reshape(H, 1).astype(jnp.float32)                     # (H, 1)
    # torch (c, out, in, k) -> (c, k*H + out, in): tap-major rows for one push.
    wcat = jnp.transpose(res_w, (0, 3, 1, 2)).reshape(n_conv, 5 * H, H)
    wcat = wcat.astype(matmul_dtype)                                   # (c, 5H, H)
    bres = res_b.reshape(n_conv, H, 1).astype(jnp.float32)             # (c, H, 1)
    # Linear weight: torch flatten of contiguous (B, H, L) is channel-major,
    # W[0, h*L + l]  ->  (H, L), tiled along lanes once per tile (resident).
    wlin_t = jnp.tile(lin_w.reshape(H, L), (1, tb)).astype(jnp.float32)  # (H, N)
    blin = lin_b.reshape(1, 1).astype(jnp.float32)                     # (1, 1)

    # Activations: channels on sublanes, (sample, position) on lanes, pre-split
    # into per-tile slabs so every block equals its full last-two dims.
    x3 = jnp.transpose(x, (2, 0, 1)).reshape(A, n_tiles, N)
    x3 = jnp.transpose(x3, (1, 0, 2)).astype(jnp.float32)              # (T, A, N)

    # Per-tile sample selector (identical for every tile, stays resident).
    sel = (jnp.arange(N)[:, None] // L
           == jnp.arange(tb)[None, :]).astype(jnp.float32)             # (N, TB)

    def const_spec(shape):
        nd = len(shape)
        return pl.BlockSpec(shape, lambda i, _nd=nd: (0,) * _nd)

    out3 = pl.pallas_call(
        functools.partial(_dis_lin_kernel, L=L, num_res_blocks=num_res_blocks),
        out_shape=jax.ShapeDtypeStruct((n_tiles, 1, tb), jnp.float32),
        grid=(n_tiles,),
        in_specs=[
            pl.BlockSpec((None, A, N), lambda i: (i, 0, 0)),   # per-tile input
            const_spec(w1t.shape),                             # resident weights
            const_spec(b1.shape),
            const_spec(wcat.shape),
            const_spec(bres.shape),
            const_spec(wlin_t.shape),
            const_spec(sel.shape),
            const_spec(blin.shape),
        ],
        out_specs=pl.BlockSpec((None, 1, tb), lambda i: (i, 0, 0)),
        compiler_params=pltpu.CompilerParams(
            dimension_semantics=("parallel",)),                # v7x megacore
    )(x3, w1t, b1, wcat, bres, wlin_t, sel, blin)

    return out3.reshape(B, 1)


# -----------------------------------------------------------------------------
# Deterministic PyTorch-layout parameters.
# -----------------------------------------------------------------------------
def init_torch_params(key, max_len, amino_num, hidden):
    ks = jax.random.split(key, 6)
    conv1_w = 0.10 * jax.random.normal(ks[0], (hidden, amino_num, 1), jnp.float32)
    conv1_b = 0.10 * jax.random.normal(ks[1], (hidden,), jnp.float32)
    res_w = 0.05 * jax.random.normal(ks[2], (10, hidden, hidden, 5), jnp.float32)
    res_b = 0.05 * jax.random.normal(ks[3], (10, hidden), jnp.float32)
    lin_w = 0.05 * jax.random.normal(ks[4], (1, max_len * hidden), jnp.float32)
    lin_b = 0.05 * jax.random.normal(ks[5], (1,), jnp.float32)
    return (conv1_w, conv1_b, res_w, res_b, lin_w, lin_b)


# -----------------------------------------------------------------------------
# Pure-JAX reference in torch layouts (same math as the PyTorch module).
# -----------------------------------------------------------------------------
def reference_forward(x, torch_params):
    conv1_w, conv1_b, res_w, res_b, lin_w, lin_b = torch_params
    B, L, A = x.shape

    def conv5(z, w, b):            # z: (L, H_in), w: (H_out, H_in, 5)
        zp = jnp.pad(z, ((2, 2), (0, 0)))
        return sum(zp[k:k + L] @ w[:, :, k].T for k in range(5)) + b

    outs = []
    for bi in range(B):
        y = x[bi] @ conv1_w[:, :, 0].T + conv1_b            # (L, H)
        for rb in range(res_w.shape[0] // 2):
            h = conv5(jnp.maximum(y, 0.0), res_w[2 * rb], res_b[2 * rb])
            h = conv5(jnp.maximum(h, 0.0), res_w[2 * rb + 1], res_b[2 * rb + 1])
            y = y + 0.3 * h
        flat = y.T.reshape(-1)     # contiguous (H, L).view -> channel-major
        outs.append(flat @ lin_w[0] + lin_b[0])
    return jnp.stack(outs).reshape(B, 1)


# -----------------------------------------------------------------------------
if __name__ == "__main__":
    B, MAX_LEN, AMINO_NUM, HIDDEN = 2, 16, 8, 32

    key = jax.random.PRNGKey(0)
    k_x, k_p = jax.random.split(key)
    x = jax.random.normal(k_x, (B, MAX_LEN, AMINO_NUM), jnp.float32)
    params = init_torch_params(k_p, MAX_LEN, AMINO_NUM, HIDDEN)

    # Small-shape correctness check (single tile).
    out = jax.block_until_ready(dis_lin_block_cnn(x, params))
    ref = reference_forward(x, params)
    assert out.shape == (B, 1), out.shape
    assert jnp.allclose(out, ref, rtol=1e-4, atol=1e-4), (out, ref)

    # Multi-tile path: 2 grid steps of 8 samples (128 lanes per MXU push),
    # exercising the "parallel" batch axis and resident-weight index maps.
    B2 = 16
    x2 = jax.random.normal(jax.random.PRNGKey(1), (B2, MAX_LEN, AMINO_NUM),
                           jnp.float32)
    out2 = jax.block_until_ready(dis_lin_block_cnn(x2, params, tb=8))
    ref2 = reference_forward(x2, params)
    assert jnp.allclose(out2, ref2, rtol=1e-4, atol=1e-4), (out2, ref2)

    # bf16 MXU operands (f32 accumulation) — compile/run smoke only.
    out_bf16 = jax.block_until_ready(
        dis_lin_block_cnn(x2, params, tb=8, matmul_dtype=jnp.bfloat16))
    assert out_bf16.shape == (B2, 1)
    assert bool(jnp.all(jnp.isfinite(out_bf16)))

    print("KERNEL_OK")
</pallas_src>

<mosaic_0001>
module attributes {stable_mosaic.version = 11 : i64} {
  func.func @_dis_lin_kernel(%arg0: i32, %arg1: memref<1x8x32xf32, #tpu.memory_space<vmem>>, %arg2: memref<32x8xf32, #tpu.memory_space<vmem>>, %arg3: memref<32x1xf32, #tpu.memory_space<vmem>>, %arg4: memref<10x160x32xf32, #tpu.memory_space<vmem>>, %arg5: memref<10x32x1xf32, #tpu.memory_space<vmem>>, %arg6: memref<32x32xf32, #tpu.memory_space<vmem>>, %arg7: memref<32x2xf32, #tpu.memory_space<vmem>>, %arg8: memref<1x1xf32, #tpu.memory_space<vmem>>, %arg9: memref<1x1x2xf32, #tpu.memory_space<vmem>>) attributes {dimension_semantics = [#tpu.dimension_semantics<parallel>], iteration_bounds = array<i64: 1>, scalar_prefetch = 0 : i64, scratch_operands = 0 : i64, tpu.core_type = #tpu.core_type<tc>, window_params = [{transform_indices = @transform_0, window_bounds = array<i64: 1, 8, 32>}, {pipeline_mode = #tpu.pipeline_mode<synchronous>, transform_indices = @transform_1, window_bounds = array<i64: 32, 8>}, {pipeline_mode = #tpu.pipeline_mode<synchronous>, transform_indices = @transform_2, window_bounds = array<i64: 32, 1>}, {pipeline_mode = #tpu.pipeline_mode<synchronous>, transform_indices = @transform_3, window_bounds = array<i64: 10, 160, 32>}, {pipeline_mode = #tpu.pipeline_mode<synchronous>, transform_indices = @transform_4, window_bounds = array<i64: 10, 32, 1>}, {pipeline_mode = #tpu.pipeline_mode<synchronous>, transform_indices = @transform_5, window_bounds = array<i64: 32, 32>}, {pipeline_mode = #tpu.pipeline_mode<synchronous>, transform_indices = @transform_6, window_bounds = array<i64: 32, 2>}, {pipeline_mode = #tpu.pipeline_mode<synchronous>, transform_indices = @transform_7, window_bounds = array<i64: 1, 1>}, {transform_indices = @transform_8, window_bounds = array<i64: 1, 1, 2>}]} {
    %0 = tpu.iota {dimensions = array<i32: 1>} : vector<1x32xi32>
    %c16_i32 = arith.constant 16 : i32
    %c0_i32 = arith.constant 0 : i32
    %1 = arith.cmpi eq, %c16_i32, %c0_i32 : i32
    %c1_i32 = arith.constant 1 : i32
    %2 = arith.select %1, %c1_i32, %c16_i32 : i32
    %3 = vector.broadcast %2 : i32 to vector<1x32xi32>
    %4 = arith.remsi %0, %3 : vector<1x32xi32>
    %c0_i32_0 = arith.constant 0 : i32
    %5 = vector.broadcast %c0_i32_0 : i32 to vector<1x32xi32>
    %6 = arith.cmpi ne, %4, %5 : vector<1x32xi32>
    %c0_i32_1 = arith.constant 0 : i32
    %7 = vector.broadcast %c0_i32_1 : i32 to vector<1x32xi32>
    %8 = arith.cmpi slt, %4, %7 : vector<1x32xi32>
    %c0_i32_2 = arith.constant 0 : i32
    %9 = arith.cmpi slt, %2, %c0_i32_2 : i32
    %10 = vector.broadcast %9 : i1 to vector<1x32xi1>
    %11 = vector.broadcast %10 : vector<1x32xi1> to vector<1x32xi1>
    %12 = arith.xori %8, %11 : vector<1x32xi1>
    %13 = arith.andi %12, %6 : vector<1x32xi1>
    %14 = vector.broadcast %2 : i32 to vector<1x32xi32>
    %15 = arith.addi %4, %14 : vector<1x32xi32>
    %16 = arith.select %13, %15, %4 : vector<1x32xi1>, vector<1x32xi32>
    %c-2_i32 = arith.constant -2 : i32
    %17 = vector.broadcast %c-2_i32 : i32 to vector<1x32xi32>
    %18 = arith.cmpi sge, %16, %17 : vector<1x32xi32>
    %c14_i32 = arith.constant 14 : i32
    %19 = vector.broadcast %c14_i32 : i32 to vector<1x32xi32>
    %20 = arith.cmpi slt, %16, %19 : vector<1x32xi32>
    %21 = arith.andi %18, %20 : vector<1x32xi1>
    %c-1_i32 = arith.constant -1 : i32
    %22 = vector.broadcast %c-1_i32 : i32 to vector<1x32xi32>
    %23 = arith.cmpi sge, %16, %22 : vector<1x32xi32>
    %c15_i32 = arith.constant 15 : i32
    %24 = vector.broadcast %c15_i32 : i32 to vector<1x32xi32>
    %25 = arith.cmpi slt, %16, %24 : vector<1x32xi32>
    %26 = arith.andi %23, %25 : vector<1x32xi1>
    %c1_i32_3 = arith.constant 1 : i32
    %27 = vector.broadcast %c1_i32_3 : i32 to vector<1x32xi32>
    %28 = arith.cmpi sge, %16, %27 : vector<1x32xi32>
    %c17_i32 = arith.constant 17 : i32
    %29 = vector.broadcast %c17_i32 : i32 to vector<1x32xi32>
    %30 = arith.cmpi slt, %16, %29 : vector<1x32xi32>
    %31 = arith.andi %28, %30 : vector<1x32xi1>
    %c2_i32 = arith.constant 2 : i32
    %32 = vector.broadcast %c2_i32 : i32 to vector<1x32xi32>
    %33 = arith.cmpi sge, %16, %32 : vector<1x32xi32>
    %c18_i32 = arith.constant 18 : i32
    %34 = vector.broadcast %c18_i32 : i32 to vector<1x32xi32>
    %35 = arith.cmpi slt, %16, %34 : vector<1x32xi32>
    %36 = arith.andi %33, %35 : vector<1x32xi1>
    %c0 = arith.constant 0 : index
    %c0_4 = arith.constant 0 : index
    %37 = vector.load %arg2[%c0, %c0_4] : memref<32x8xf32, #tpu.memory_space<vmem>>, vector<32x8xf32>
    %c0_5 = arith.constant 0 : index
    %c0_6 = arith.constant 0 : index
    %c0_7 = arith.constant 0 : index
    %38 = vector.load %arg1[%c0_5, %c0_6, %c0_7] : memref<1x8x32xf32, #tpu.memory_space<vmem>>, vector<1x8x32xf32>
    %39 = vector.shape_cast %38 : vector<1x8x32xf32> to vector<8x32xf32>
    %cst = arith.constant dense<0.000000e+00> : vector<32x32xf32>
    %40 = tpu.matmul %37, %39, %cst {dimension_numbers = #tpu.dot_dimension_numbers<[1], [0], [0], [1], [0, 0, 1, 1], [], []>} : vector<32x8xf32>, vector<8x32xf32>, vector<32x32xf32> -> vector<32x32xf32>
    %c0_8 = arith.constant 0 : index
    %c0_9 = arith.constant 0 : index
    %41 = vector.load %arg3[%c0_8, %c0_9] : memref<32x1xf32, #tpu.memory_space<vmem>>, vector<32x1xf32>
    %42 = vector.broadcast %41 : vector<32x1xf32> to vector<32x32xf32>
    %43 = arith.addf %40, %42 : vector<32x32xf32>
    %cst_10 = arith.constant 0.000000e+00 : f32
    %44 = vector.broadcast %cst_10 : f32 to vector<32x32xf32>
    %45 = arith.maximumf %43, %44 : vector<32x32xf32>
    %c0_11 = arith.constant 0 : index
    %c0_12 = arith.constant 0 : index
    %c0_13 = arith.constant 0 : index
    %46 = vector.load %arg4[%c0_11, %c0_12, %c0_13] : memref<10x160x32xf32, #tpu.memory_space<vmem>>, vector<1x160x32xf32>
    %47 = vector.shape_cast %46 : vector<1x160x32xf32> to vector<160x32xf32>
    %cst_14 = arith.constant dense<0.000000e+00> : vector<160x32xf32>
    %48 = tpu.matmul %47, %45, %cst_14 {dimension_numbers = #tpu.dot_dimension_numbers<[1], [0], [0], [1], [0, 0, 1, 1], [], []>} : vector<160x32xf32>, vector<32x32xf32>, vector<160x32xf32> -> vector<160x32xf32>
    %49 = vector.extract_strided_slice %48 {offsets = [0, 0], sizes = [32, 32], strides = [1, 1]} : vector<160x32xf32> to vector<32x32xf32>
    %cst_15 = arith.constant 0.000000e+00 : f32
    %50 = vector.shape_cast %21 : vector<1x32xi1> to vector<1x32xi1>
    %51 = vector.broadcast %50 : vector<1x32xi1> to vector<32x32xi1>
    %52 = vector.broadcast %cst_15 : f32 to vector<32x32xf32>
    %53 = arith.select %51, %49, %52 : vector<32x32xi1>, vector<32x32xf32>
    %c2_i32_16 = arith.constant 2 : i32
    %54 = tpu.dynamic_rotate %53 by %c2_i32_16 dim 1 : vector<32x32xf32>, i32 -> vector<32x32xf32>
    %55 = vector.extract_strided_slice %48 {offsets = [32, 0], sizes = [32, 32], strides = [1, 1]} : vector<160x32xf32> to vector<32x32xf32>
    %cst_17 = arith.constant 0.000000e+00 : f32
    %56 = vector.shape_cast %26 : vector<1x32xi1> to vector<1x32xi1>
    %57 = vector.broadcast %56 : vector<1x32xi1> to vector<32x32xi1>
    %58 = vector.broadcast %cst_17 : f32 to vector<32x32xf32>
    %59 = arith.select %57, %55, %58 : vector<32x32xi1>, vector<32x32xf32>
    %c1_i32_18 = arith.constant 1 : i32
    %60 = tpu.dynamic_rotate %59 by %c1_i32_18 dim 1 : vector<32x32xf32>, i32 -> vector<32x32xf32>
    %61 = vector.extract_strided_slice %48 {offsets = [64, 0], sizes = [32, 32], strides = [1, 1]} : vector<160x32xf32> to vector<32x32xf32>
    %62 = vector.extract_strided_slice %48 {offsets = [96, 0], sizes = [32, 32], strides = [1, 1]} : vector<160x32xf32> to vector<32x32xf32>
    %cst_19 = arith.constant 0.000000e+00 : f32
    %63 = vector.shape_cast %31 : vector<1x32xi1> to vector<1x32xi1>
    %64 = vector.broadcast %63 : vector<1x32xi1> to vector<32x32xi1>
    %65 = vector.broadcast %cst_19 : f32 to vector<32x32xf32>
    %66 = arith.select %64, %62, %65 : vector<32x32xi1>, vector<32x32xf32>
    %c31_i32 = arith.constant 31 : i32
    %67 = tpu.dynamic_rotate %66 by %c31_i32 dim 1 : vector<32x32xf32>, i32 -> vector<32x32xf32>
    %68 = vector.extract_strided_slice %48 {offsets = [128, 0], sizes = [32, 32], strides = [1, 1]} : vector<160x32xf32> to vector<32x32xf32>
    %cst_20 = arith.constant 0.000000e+00 : f32
    %69 = vector.shape_cast %36 : vector<1x32xi1> to vector<1x32xi1>
    %70 = vector.broadcast %69 : vector<1x32xi1> to vector<32x32xi1>
    %71 = vector.broadcast %cst_20 : f32 to vector<32x32xf32>
    %72 = arith.select %70, %68, %71 : vector<32x32xi1>, vector<32x32xf32>
    %c30_i32 = arith.constant 30 : i32
    %73 = tpu.dynamic_rotate %72 by %c30_i32 dim 1 : vector<32x32xf32>, i32 -> vector<32x32xf32>
    %74 = arith.addf %54, %60 : vector<32x32xf32>
    %75 = arith.addf %61, %67 : vector<32x32xf32>
    %76 = arith.addf %74, %75 : vector<32x32xf32>
    %77 = arith.addf %76, %73 : vector<32x32xf32>
    %c0_21 = arith.constant 0 : index
    %c0_22 = arith.constant 0 : index
    %c0_23 = arith.constant 0 : index
    %78 = vector.load %arg5[%c0_21, %c0_22, %c0_23] : memref<10x32x1xf32, #tpu.memory_space<vmem>>, vector<1x32x1xf32>
    %79 = vector.shape_cast %78 : vector<1x32x1xf32> to vector<32x1xf32>
    %80 = vector.broadcast %79 : vector<32x1xf32> to vector<32x32xf32>
    %81 = arith.addf %77, %80 : vector<32x32xf32>
    %cst_24 = arith.constant 0.000000e+00 : f32
    %82 = vector.broadcast %cst_24 : f32 to vector<32x32xf32>
    %83 = arith.maximumf %81, %82 : vector<32x32xf32>
    %c1 = arith.constant 1 : index
    %c0_25 = arith.constant 0 : index
    %c0_26 = arith.constant 0 : index
    %84 = vector.load %arg4[%c1, %c0_25, %c0_26] : memref<10x160x32xf32, #tpu.memory_space<vmem>>, vector<1x160x32xf32>
    %85 = vector.shape_cast %84 : vector<1x160x32xf32> to vector<160x32xf32>
    %cst_27 = arith.constant dense<0.000000e+00> : vector<160x32xf32>
    %86 = tpu.matmul %85, %83, %cst_27 {dimension_numbers = #tpu.dot_dimension_numbers<[1], [0], [0], [1], [0, 0, 1, 1], [], []>} : vector<160x32xf32>, vector<32x32xf32>, vector<160x32xf32> -> vector<160x32xf32>
    %87 = vector.extract_strided_slice %86 {offsets = [0, 0], sizes = [32, 32], strides = [1, 1]} : vector<160x32xf32> to vector<32x32xf32>
    %cst_28 = arith.constant 0.000000e+00 : f32
    %88 = vector.shape_cast %21 : vector<1x32xi1> to vector<1x32xi1>
    %89 = vector.broadcast %88 : vector<1x32xi1> to vector<32x32xi1>
    %90 = vector.broadcast %cst_28 : f32 to vector<32x32xf32>
    %91 = arith.select %89, %87, %90 : vector<32x32xi1>, vector<32x32xf32>
    %c2_i32_29 = arith.constant 2 : i32
    %92 = tpu.dynamic_rotate %91 by %c2_i32_29 dim 1 : vector<32x32xf32>, i32 -> vector<32x32xf32>
    %93 = vector.extract_strided_slice %86 {offsets = [32, 0], sizes = [32, 32], strides = [1, 1]} : vector<160x32xf32> to vector<32x32xf32>
    %cst_30 = arith.constant 0.000000e+00 : f32
    %94 = vector.shape_cast %26 : vector<1x32xi1> to vector<1x32xi1>
    %95 = vector.broadcast %94 : vector<1x32xi1> to vector<32x32xi1>
    %96 = vector.broadcast %cst_30 : f32 to vector<32x32xf32>
    %97 = arith.select %95, %93, %96 : vector<32x32xi1>, vector<32x32xf32>
    %c1_i32_31 = arith.constant 1 : i32
    %98 = tpu.dynamic_rotate %97 by %c1_i32_31 dim 1 : vector<32x32xf32>, i32 -> vector<32x32xf32>
    %99 = vector.extract_strided_slice %86 {offsets = [64, 0], sizes = [32, 32], strides = [1, 1]} : vector<160x32xf32> to vector<32x32xf32>
    %100 = vector.extract_strided_slice %86 {offsets = [96, 0], sizes = [32, 32], strides = [1, 1]} : vector<160x32xf32> to vector<32x32xf32>
    %cst_32 = arith.constant 0.000000e+00 : f32
    %101 = vector.shape_cast %31 : vector<1x32xi1> to vector<1x32xi1>
    %102 = vector.broadcast %101 : vector<1x32xi1> to vector<32x32xi1>
    %103 = vector.broadcast %cst_32 : f32 to vector<32x32xf32>
    %104 = arith.select %102, %100, %103 : vector<32x32xi1>, vector<32x32xf32>
    %c31_i32_33 = arith.constant 31 : i32
    %105 = tpu.dynamic_rotate %104 by %c31_i32_33 dim 1 : vector<32x32xf32>, i32 -> vector<32x32xf32>
    %106 = vector.extract_strided_slice %86 {offsets = [128, 0], sizes = [32, 32], strides = [1, 1]} : vector<160x32xf32> to vector<32x32xf32>
    %cst_34 = arith.constant 0.000000e+00 : f32
    %107 = vector.shape_cast %36 : vector<1x32xi1> to vector<1x32xi1>
    %108 = vector.broadcast %107 : vector<1x32xi1> to vector<32x32xi1>
    %109 = vector.broadcast %cst_34 : f32 to vector<32x32xf32>
    %110 = arith.select %108, %106, %109 : vector<32x32xi1>, vector<32x32xf32>
    %c30_i32_35 = arith.constant 30 : i32
    %111 = tpu.dynamic_rotate %110 by %c30_i32_35 dim 1 : vector<32x32xf32>, i32 -> vector<32x32xf32>
    %112 = arith.addf %92, %98 : vector<32x32xf32>
    %113 = arith.addf %99, %105 : vector<32x32xf32>
    %114 = arith.addf %112, %113 : vector<32x32xf32>
    %115 = arith.addf %114, %111 : vector<32x32xf32>
    %c1_36 = arith.constant 1 : index
    %c0_37 = arith.constant 0 : index
    %c0_38 = arith.constant 0 : index
    %116 = vector.load %arg5[%c1_36, %c0_37, %c0_38] : memref<10x32x1xf32, #tpu.memory_space<vmem>>, vector<1x32x1xf32>
    %117 = vector.shape_cast %116 : vector<1x32x1xf32> to vector<32x1xf32>
    %118 = vector.broadcast %117 : vector<32x1xf32> to vector<32x32xf32>
    %119 = arith.addf %115, %118 : vector<32x32xf32>
    %cst_39 = arith.constant 3.000000e-01 : f32
    %120 = vector.broadcast %cst_39 : f32 to vector<32x32xf32>
    %121 = arith.mulf %120, %119 : vector<32x32xf32>
    %122 = arith.addf %43, %121 : vector<32x32xf32>
    %cst_40 = arith.constant 0.000000e+00 : f32
    %123 = vector.broadcast %cst_40 : f32 to vector<32x32xf32>
    %124 = arith.maximumf %122, %123 : vector<32x32xf32>
    %c2 = arith.constant 2 : index
    %c0_41 = arith.constant 0 : index
    %c0_42 = arith.constant 0 : index
    %125 = vector.load %arg4[%c2, %c0_41, %c0_42] : memref<10x160x32xf32, #tpu.memory_space<vmem>>, vector<1x160x32xf32>
    %126 = vector.shape_cast %125 : vector<1x160x32xf32> to vector<160x32xf32>
    %cst_43 = arith.constant dense<0.000000e+00> : vector<160x32xf32>
    %127 = tpu.matmul %126, %124, %cst_43 {dimension_numbers = #tpu.dot_dimension_numbers<[1], [0], [0], [1], [0, 0, 1, 1], [], []>} : vector<160x32xf32>, vector<32x32xf32>, vector<160x32xf32> -> vector<160x32xf32>
    %128 = vector.extract_strided_slice %127 {offsets = [0, 0], sizes = [32, 32], strides = [1, 1]} : vector<160x32xf32> to vector<32x32xf32>
    %cst_44 = arith.constant 0.000000e+00 : f32
    %129 = vector.shape_cast %21 : vector<1x32xi1> to vector<1x32xi1>
    %130 = vector.broadcast %129 : vector<1x32xi1> to vector<32x32xi1>
    %131 = vector.broadcast %cst_44 : f32 to vector<32x32xf32>
    %132 = arith.select %130, %128, %131 : vector<32x32xi1>, vector<32x32xf32>
    %c2_i32_45 = arith.constant 2 : i32
    %133 = tpu.dynamic_rotate %132 by %c2_i32_45 dim 1 : vector<32x32xf32>, i32 -> vector<32x32xf32>
    %134 = vector.extract_strided_slice %127 {offsets = [32, 0], sizes = [32, 32], strides = [1, 1]} : vector<160x32xf32> to vector<32x32xf32>
    %cst_46 = arith.constant 0.000000e+00 : f32
    %135 = vector.shape_cast %26 : vector<1x32xi1> to vector<1x32xi1>
    %136 = vector.broadcast %135 : vector<1x32xi1> to vector<32x32xi1>
    %137 = vector.broadcast %cst_46 : f32 to vector<32x32xf32>
    %138 = arith.select %136, %134, %137 : vector<32x32xi1>, vector<32x32xf32>
    %c1_i32_47 = arith.constant 1 : i32
    %139 = tpu.dynamic_rotate %138 by %c1_i32_47 dim 1 : vector<32x32xf32>, i32 -> vector<32x32xf32>
    %140 = vector.extract_strided_slice %127 {offsets = [64, 0], sizes = [32, 32], strides = [1, 1]} : vector<160x32xf32> to vector<32x32xf32>
    %141 = vector.extract_strided_slice %127 {offsets = [96, 0], sizes = [32, 32], strides = [1, 1]} : vector<160x32xf32> to vector<32x32xf32>
    %cst_48 = arith.constant 0.000000e+00 : f32
    %142 = vector.shape_cast %31 : vector<1x32xi1> to vector<1x32xi1>
    %143 = vector.broadcast %142 : vector<1x32xi1> to vector<32x32xi1>
    %144 = vector.broadcast %cst_48 : f32 to vector<32x32xf32>
    %145 = arith.select %143, %141, %144 : vector<32x32xi1>, vector<32x32xf32>
    %c31_i32_49 = arith.constant 31 : i32
    %146 = tpu.dynamic_rotate %145 by %c31_i32_49 dim 1 : vector<32x32xf32>, i32 -> vector<32x32xf32>
    %147 = vector.extract_strided_slice %127 {offsets = [128, 0], sizes = [32, 32], strides = [1, 1]} : vector<160x32xf32> to vector<32x32xf32>
    %cst_50 = arith.constant 0.000000e+00 : f32
    %148 = vector.shape_cast %36 : vector<1x32xi1> to vector<1x32xi1>
    %149 = vector.broadcast %148 : vector<1x32xi1> to vector<32x32xi1>
    %150 = vector.broadcast %cst_50 : f32 to vector<32x32xf32>
    %151 = arith.select %149, %147, %150 : vector<32x32xi1>, vector<32x32xf32>
    %c30_i32_51 = arith.constant 30 : i32
    %152 = tpu.dynamic_rotate %151 by %c30_i32_51 dim 1 : vector<32x32xf32>, i32 -> vector<32x32xf32>
    %153 = arith.addf %133, %139 : vector<32x32xf32>
    %154 = arith.addf %140, %146 : vector<32x32xf32>
    %155 = arith.addf %153, %154 : vector<32x32xf32>
    %156 = arith.addf %155, %152 : vector<32x32xf32>
    %c2_52 = arith.constant 2 : index
    %c0_53 = arith.constant 0 : index
    %c0_54 = arith.constant 0 : index
    %157 = vector.load %arg5[%c2_52, %c0_53, %c0_54] : memref<10x32x1xf32, #tpu.memory_space<vmem>>, vector<1x32x1xf32>
    %158 = vector.shape_cast %157 : vector<1x32x1xf32> to vector<32x1xf32>
    %159 = vector.broadcast %158 : vector<32x1xf32> to vector<32x32xf32>
    %160 = arith.addf %156, %159 : vector<32x32xf32>
    %cst_55 = arith.constant 0.000000e+00 : f32
    %161 = vector.broadcast %cst_55 : f32 to vector<32x32xf32>
    %162 = arith.maximumf %160, %161 : vector<32x32xf32>
    %c3 = arith.constant 3 : index
    %c0_56 = arith.constant 0 : index
    %c0_57 = arith.constant 0 : index
    %163 = vector.load %arg4[%c3, %c0_56, %c0_57] : memref<10x160x32xf32, #tpu.memory_space<vmem>>, vector<1x160x32xf32>
    %164 = vector.shape_cast %163 : vector<1x160x32xf32> to vector<160x32xf32>
    %cst_58 = arith.constant dense<0.000000e+00> : vector<160x32xf32>
    %165 = tpu.matmul %164, %162, %cst_58 {dimension_numbers = #tpu.dot_dimension_numbers<[1], [0], [0], [1], [0, 0, 1, 1], [], []>} : vector<160x32xf32>, vector<32x32xf32>, vector<160x32xf32> -> vector<160x32xf32>
    %166 = vector.extract_strided_slice %165 {offsets = [0, 0], sizes = [32, 32], strides = [1, 1]} : vector<160x32xf32> to vector<32x32xf32>
    %cst_59 = arith.constant 0.000000e+00 : f32
    %167 = vector.shape_cast %21 : vector<1x32xi1> to vector<1x32xi1>
    %168 = vector.broadcast %167 : vector<1x32xi1> to vector<32x32xi1>
    %169 = vector.broadcast %cst_59 : f32 to vector<32x32xf32>
    %170 = arith.select %168, %166, %169 : vector<32x32xi1>, vector<32x32xf32>
    %c2_i32_60 = arith.constant 2 : i32
    %171 = tpu.dynamic_rotate %170 by %c2_i32_60 dim 1 : vector<32x32xf32>, i32 -> vector<32x32xf32>
    %172 = vector.extract_strided_slice %165 {offsets = [32, 0], sizes = [32, 32], strides = [1, 1]} : vector<160x32xf32> to vector<32x32xf32>
    %cst_61 = arith.constant 0.000000e+00 : f32
    %173 = vector.shape_cast %26 : vector<1x32xi1> to vector<1x32xi1>
    %174 = vector.broadcast %173 : vector<1x32xi1> to vector<32x32xi1>
    %175 = vector.broadcast %cst_61 : f32 to vector<32x32xf32>
    %176 = arith.select %174, %172, %175 : vector<32x32xi1>, vector<32x32xf32>
    %c1_i32_62 = arith.constant 1 : i32
    %177 = tpu.dynamic_rotate %176 by %c1_i32_62 dim 1 : vector<32x32xf32>, i32 -> vector<32x32xf32>
    %178 = vector.extract_strided_slice %165 {offsets = [64, 0], sizes = [32, 32], strides = [1, 1]} : vector<160x32xf32> to vector<32x32xf32>
    %179 = vector.extract_strided_slice %165 {offsets = [96, 0], sizes = [32, 32], strides = [1, 1]} : vector<160x32xf32> to vector<32x32xf32>
    %cst_63 = arith.constant 0.000000e+00 : f32
    %180 = vector.shape_cast %31 : vector<1x32xi1> to vector<1x32xi1>
    %181 = vector.broadcast %180 : vector<1x32xi1> to vector<32x32xi1>
    %182 = vector.broadcast %cst_63 : f32 to vector<32x32xf32>
    %183 = arith.select %181, %179, %182 : vector<32x32xi1>, vector<32x32xf32>
    %c31_i32_64 = arith.constant 31 : i32
    %184 = tpu.dynamic_rotate %183 by %c31_i32_64 dim 1 : vector<32x32xf32>, i32 -> vector<32x32xf32>
    %185 = vector.extract_strided_slice %165 {offsets = [128, 0], sizes = [32, 32], strides = [1, 1]} : vector<160x32xf32> to vector<32x32xf32>
    %cst_65 = arith.constant 0.000000e+00 : f32
    %186 = vector.shape_cast %36 : vector<1x32xi1> to vector<1x32xi1>
    %187 = vector.broadcast %186 : vector<1x32xi1> to vector<32x32xi1>
    %188 = vector.broadcast %cst_65 : f32 to vector<32x32xf32>
    %189 = arith.select %187, %185, %188 : vector<32x32xi1>, vector<32x32xf32>
    %c30_i32_66 = arith.constant 30 : i32
    %190 = tpu.dynamic_rotate %189 by %c30_i32_66 dim 1 : vector<32x32xf32>, i32 -> vector<32x32xf32>
    %191 = arith.addf %171, %177 : vector<32x32xf32>
    %192 = arith.addf %178, %184 : vector<32x32xf32>
    %193 = arith.addf %191, %192 : vector<32x32xf32>
    %194 = arith.addf %193, %190 : vector<32x32xf32>
    %c3_67 = arith.constant 3 : index
    %c0_68 = arith.constant 0 : index
    %c0_69 = arith.constant 0 : index
    %195 = vector.load %arg5[%c3_67, %c0_68, %c0_69] : memref<10x32x1xf32, #tpu.memory_space<vmem>>, vector<1x32x1xf32>
    %196 = vector.shape_cast %195 : vector<1x32x1xf32> to vector<32x1xf32>
    %197 = vector.broadcast %196 : vector<32x1xf32> to vector<32x32xf32>
    %198 = arith.addf %194, %197 : vector<32x32xf32>
    %cst_70 = arith.constant 3.000000e-01 : f32
    %199 = vector.broadcast %cst_70 : f32 to vector<32x32xf32>
    %200 = arith.mulf %199, %198 : vector<32x32xf32>
    %201 = arith.addf %122, %200 : vector<32x32xf32>
    %cst_71 = arith.constant 0.000000e+00 : f32
    %202 = vector.broadcast %cst_71 : f32 to vector<32x32xf32>
    %203 = arith.maximumf %201, %202 : vector<32x32xf32>
    %c4 = arith.constant 4 : index
    %c0_72 = arith.constant 0 : index
    %c0_73 = arith.constant 0 : index
    %204 = vector.load %arg4[%c4, %c0_72, %c0_73] : memref<10x160x32xf32, #tpu.memory_space<vmem>>, vector<1x160x32xf32>
    %205 = vector.shape_cast %204 : vector<1x160x32xf32> to vector<160x32xf32>
    %cst_74 = arith.constant dense<0.000000e+00> : vector<160x32xf32>
    %206 = tpu.matmul %205, %203, %cst_74 {dimension_numbers = #tpu.dot_dimension_numbers<[1], [0], [0], [1], [0, 0, 1, 1], [], []>} : vector<160x32xf32>, vector<32x32xf32>, vector<160x32xf32> -> vector<160x32xf32>
    %207 = vector.extract_strided_slice %206 {offsets = [0, 0], sizes = [32, 32], strides = [1, 1]} : vector<160x32xf32> to vector<32x32xf32>
    %cst_75 = arith.constant 0.000000e+00 : f32
    %208 = vector.shape_cast %21 : vector<1x32xi1> to vector<1x32xi1>
    %209 = vector.broadcast %208 : vector<1x32xi1> to vector<32x32xi1>
    %210 = vector.broadcast %cst_75 : f32 to vector<32x32xf32>
    %211 = arith.select %209, %207, %210 : vector<32x32xi1>, vector<32x32xf32>
    %c2_i32_76 = arith.constant 2 : i32
    %212 = tpu.dynamic_rotate %211 by %c2_i32_76 dim 1 : vector<32x32xf32>, i32 -> vector<32x32xf32>
    %213 = vector.extract_strided_slice %206 {offsets = [32, 0], sizes = [32, 32], strides = [1, 1]} : vector<160x32xf32> to vector<32x32xf32>
    %cst_77 = arith.constant 0.000000e+00 : f32
    %214 = vector.shape_cast %26 : vector<1x32xi1> to vector<1x32xi1>
    %215 = vector.broadcast %214 : vector<1x32xi1> to vector<32x32xi1>
    %216 = vector.broadcast %cst_77 : f32 to vector<32x32xf32>
    %217 = arith.select %215, %213, %216 : vector<32x32xi1>, vector<32x32xf32>
    %c1_i32_78 = arith.constant 1 : i32
    %218 = tpu.dynamic_rotate %217 by %c1_i32_78 dim 1 : vector<32x32xf32>, i32 -> vector<32x32xf32>
    %219 = vector.extract_strided_slice %206 {offsets = [64, 0], sizes = [32, 32], strides = [1, 1]} : vector<160x32xf32> to vector<32x32xf32>
    %220 = vector.extract_strided_slice %206 {offsets = [96, 0], sizes = [32, 32], strides = [1, 1]} : vector<160x32xf32> to vector<32x32xf32>
    %cst_79 = arith.constant 0.000000e+00 : f32
    %221 = vector.shape_cast %31 : vector<1x32xi1> to vector<1x32xi1>
    %222 = vector.broadcast %221 : vector<1x32xi1> to vector<32x32xi1>
    %223 = vector.broadcast %cst_79 : f32 to vector<32x32xf32>
    %224 = arith.select %222, %220, %223 : vector<32x32xi1>, vector<32x32xf32>
    %c31_i32_80 = arith.constant 31 : i32
    %225 = tpu.dynamic_rotate %224 by %c31_i32_80 dim 1 : vector<32x32xf32>, i32 -> vector<32x32xf32>
    %226 = vector.extract_strided_slice %206 {offsets = [128, 0], sizes = [32, 32], strides = [1, 1]} : vector<160x32xf32> to vector<32x32xf32>
    %cst_81 = arith.constant 0.000000e+00 : f32
    %227 = vector.shape_cast %36 : vector<1x32xi1> to vector<1x32xi1>
    %228 = vector.broadcast %227 : vector<1x32xi1> to vector<32x32xi1>
    %229 = vector.broadcast %cst_81 : f32 to vector<32x32xf32>
    %230 = arith.select %228, %226, %229 : vector<32x32xi1>, vector<32x32xf32>
    %c30_i32_82 = arith.constant 30 : i32
    %231 = tpu.dynamic_rotate %230 by %c30_i32_82 dim 1 : vector<32x32xf32>, i32 -> vector<32x32xf32>
    %232 = arith.addf %212, %218 : vector<32x32xf32>
    %233 = arith.addf %219, %225 : vector<32x32xf32>
    %234 = arith.addf %232, %233 : vector<32x32xf32>
    %235 = arith.addf %234, %231 : vector<32x32xf32>
    %c4_83 = arith.constant 4 : index
    %c0_84 = arith.constant 0 : index
    %c0_85 = arith.constant 0 : index
    %236 = vector.load %arg5[%c4_83, %c0_84, %c0_85] : memref<10x32x1xf32, #tpu.memory_space<vmem>>, vector<1x32x1xf32>
    %237 = vector.shape_cast %236 : vector<1x32x1xf32> to vector<32x1xf32>
    %238 = vector.broadcast %237 : vector<32x1xf32> to vector<32x32xf32>
    %239 = arith.addf %235, %238 : vector<32x32xf32>
    %cst_86 = arith.constant 0.000000e+00 : f32
    %240 = vector.broadcast %cst_86 : f32 to vector<32x32xf32>
    %241 = arith.maximumf %239, %240 : vector<32x32xf32>
    %c5 = arith.constant 5 : index
    %c0_87 = arith.constant 0 : index
    %c0_88 = arith.constant 0 : index
    %242 = vector.load %arg4[%c5, %c0_87, %c0_88] : memref<10x160x32xf32, #tpu.memory_space<vmem>>, vector<1x160x32xf32>
    %243 = vector.shape_cast %242 : vector<1x160x32xf32> to vector<160x32xf32>
    %cst_89 = arith.constant dense<0.000000e+00> : vector<160x32xf32>
    %244 = tpu.matmul %243, %241, %cst_89 {dimension_numbers = #tpu.dot_dimension_numbers<[1], [0], [0], [1], [0, 0, 1, 1], [], []>} : vector<160x32xf32>, vector<32x32xf32>, vector<160x32xf32> -> vector<160x32xf32>
    %245 = vector.extract_strided_slice %244 {offsets = [0, 0], sizes = [32, 32], strides = [1, 1]} : vector<160x32xf32> to vector<32x32xf32>
    %cst_90 = arith.constant 0.000000e+00 : f32
    %246 = vector.shape_cast %21 : vector<1x32xi1> to vector<1x32xi1>
    %247 = vector.broadcast %246 : vector<1x32xi1> to vector<32x32xi1>
    %248 = vector.broadcast %cst_90 : f32 to vector<32x32xf32>
    %249 = arith.select %247, %245, %248 : vector<32x32xi1>, vector<32x32xf32>
    %c2_i32_91 = arith.constant 2 : i32
    %250 = tpu.dynamic_rotate %249 by %c2_i32_91 dim 1 : vector<32x32xf32>, i32 -> vector<32x32xf32>
    %251 = vector.extract_strided_slice %244 {offsets = [32, 0], sizes = [32, 32], strides = [1, 1]} : vector<160x32xf32> to vector<32x32xf32>
    %cst_92 = arith.constant 0.000000e+00 : f32
    %252 = vector.shape_cast %26 : vector<1x32xi1> to vector<1x32xi1>
    %253 = vector.broadcast %252 : vector<1x32xi1> to vector<32x32xi1>
    %254 = vector.broadcast %cst_92 : f32 to vector<32x32xf32>
    %255 = arith.select %253, %251, %254 : vector<32x32xi1>, vector<32x32xf32>
    %c1_i32_93 = arith.constant 1 : i32
    %256 = tpu.dynamic_rotate %255 by %c1_i32_93 dim 1 : vector<32x32xf32>, i32 -> vector<32x32xf32>
    %257 = vector.extract_strided_slice %244 {offsets = [64, 0], sizes = [32, 32], strides = [1, 1]} : vector<160x32xf32> to vector<32x32xf32>
    %258 = vector.extract_strided_slice %244 {offsets = [96, 0], sizes = [32, 32], strides = [1, 1]} : vector<160x32xf32> to vector<32x32xf32>
    %cst_94 = arith.constant 0.000000e+00 : f32
    %259 = vector.shape_cast %31 : vector<1x32xi1> to vector<1x32xi1>
    %260 = vector.broadcast %259 : vector<1x32xi1> to vector<32x32xi1>
    %261 = vector.broadcast %cst_94 : f32 to vector<32x32xf32>
    %262 = arith.select %260, %258, %261 : vector<32x32xi1>, vector<32x32xf32>
    %c31_i32_95 = arith.constant 31 : i32
    %263 = tpu.dynamic_rotate %262 by %c31_i32_95 dim 1 : vector<32x32xf32>, i32 -> vector<32x32xf32>
    %264 = vector.extract_strided_slice %244 {offsets = [128, 0], sizes = [32, 32], strides = [1, 1]} : vector<160x32xf32> to vector<32x32xf32>
    %cst_96 = arith.constant 0.000000e+00 : f32
    %265 = vector.shape_cast %36 : vector<1x32xi1> to vector<1x32xi1>
    %266 = vector.broadcast %265 : vector<1x32xi1> to vector<32x32xi1>
    %267 = vector.broadcast %cst_96 : f32 to vector<32x32xf32>
    %268 = arith.select %266, %264, %267 : vector<32x32xi1>, vector<32x32xf32>
    %c30_i32_97 = arith.constant 30 : i32
    %269 = tpu.dynamic_rotate %268 by %c30_i32_97 dim 1 : vector<32x32xf32>, i32 -> vector<32x32xf32>
    %270 = arith.addf %250, %256 : vector<32x32xf32>
    %271 = arith.addf %257, %263 : vector<32x32xf32>
    %272 = arith.addf %270, %271 : vector<32x32xf32>
    %273 = arith.addf %272, %269 : vector<32x32xf32>
    %c5_98 = arith.constant 5 : index
    %c0_99 = arith.constant 0 : index
    %c0_100 = arith.constant 0 : index
    %274 = vector.load %arg5[%c5_98, %c0_99, %c0_100] : memref<10x32x1xf32, #tpu.memory_space<vmem>>, vector<1x32x1xf32>
    %275 = vector.shape_cast %274 : vector<1x32x1xf32> to vector<32x1xf32>
    %276 = vector.broadcast %275 : vector<32x1xf32> to vector<32x32xf32>
    %277 = arith.addf %273, %276 : vector<32x32xf32>
    %cst_101 = arith.constant 3.000000e-01 : f32
    %278 = vector.broadcast %cst_101 : f32 to vector<32x32xf32>
    %279 = arith.mulf %278, %277 : vector<32x32xf32>
    %280 = arith.addf %201, %279 : vector<32x32xf32>
    %cst_102 = arith.constant 0.000000e+00 : f32
    %281 = vector.broadcast %cst_102 : f32 to vector<32x32xf32>
    %282 = arith.maximumf %280, %281 : vector<32x32xf32>
    %c6 = arith.constant 6 : index
    %c0_103 = arith.constant 0 : index
    %c0_104 = arith.constant 0 : index
    %283 = vector.load %arg4[%c6, %c0_103, %c0_104] : memref<10x160x32xf32, #tpu.memory_space<vmem>>, vector<1x160x32xf32>
    %284 = vector.shape_cast %283 : vector<1x160x32xf32> to vector<160x32xf32>
    %cst_105 = arith.constant dense<0.000000e+00> : vector<160x32xf32>
    %285 = tpu.matmul %284, %282, %cst_105 {dimension_numbers = #tpu.dot_dimension_numbers<[1], [0], [0], [1], [0, 0, 1, 1], [], []>} : vector<160x32xf32>, vector<32x32xf32>, vector<160x32xf32> -> vector<160x32xf32>
    %286 = vector.extract_strided_slice %285 {offsets = [0, 0], sizes = [32, 32], strides = [1, 1]} : vector<160x32xf32> to vector<32x32xf32>
    %cst_106 = arith.constant 0.000000e+00 : f32
    %287 = vector.shape_cast %21 : vector<1x32xi1> to vector<1x32xi1>
    %288 = vector.broadcast %287 : vector<1x32xi1> to vector<32x32xi1>
    %289 = vector.broadcast %cst_106 : f32 to vector<32x32xf32>
    %290 = arith.select %288, %286, %289 : vector<32x32xi1>, vector<32x32xf32>
    %c2_i32_107 = arith.constant 2 : i32
    %291 = tpu.dynamic_rotate %290 by %c2_i32_107 dim 1 : vector<32x32xf32>, i32 -> vector<32x32xf32>
    %292 = vector.extract_strided_slice %285 {offsets = [32, 0], sizes = [32, 32], strides = [1, 1]} : vector<160x32xf32> to vector<32x32xf32>
    %cst_108 = arith.constant 0.000000e+00 : f32
    %293 = vector.shape_cast %26 : vector<1x32xi1> to vector<1x32xi1>
    %294 = vector.broadcast %293 : vector<1x32xi1> to vector<32x32xi1>
    %295 = vector.broadcast %cst_108 : f32 to vector<32x32xf32>
    %296 = arith.select %294, %292, %295 : vector<32x32xi1>, vector<32x32xf32>
    %c1_i32_109 = arith.constant 1 : i32
    %297 = tpu.dynamic_rotate %296 by %c1_i32_109 dim 1 : vector<32x32xf32>, i32 -> vector<32x32xf32>
    %298 = vector.extract_strided_slice %285 {offsets = [64, 0], sizes = [32, 32], strides = [1, 1]} : vector<160x32xf32> to vector<32x32xf32>
    %299 = vector.extract_strided_slice %285 {offsets = [96, 0], sizes = [32, 32], strides = [1, 1]} : vector<160x32xf32> to vector<32x32xf32>
    %cst_110 = arith.constant 0.000000e+00 : f32
    %300 = vector.shape_cast %31 : vector<1x32xi1> to vector<1x32xi1>
    %301 = vector.broadcast %300 : vector<1x32xi1> to vector<32x32xi1>
    %302 = vector.broadcast %cst_110 : f32 to vector<32x32xf32>
    %303 = arith.select %301, %299, %302 : vector<32x32xi1>, vector<32x32xf32>
    %c31_i32_111 = arith.constant 31 : i32
    %304 = tpu.dynamic_rotate %303 by %c31_i32_111 dim 1 : vector<32x32xf32>, i32 -> vector<32x32xf32>
    %305 = vector.extract_strided_slice %285 {offsets = [128, 0], sizes = [32, 32], strides = [1, 1]} : vector<160x32xf32> to vector<32x32xf32>
    %cst_112 = arith.constant 0.000000e+00 : f32
    %306 = vector.shape_cast %36 : vector<1x32xi1> to vector<1x32xi1>
    %307 = vector.broadcast %306 : vector<1x32xi1> to vector<32x32xi1>
    %308 = vector.broadcast %cst_112 : f32 to vector<32x32xf32>
    %309 = arith.select %307, %305, %308 : vector<32x32xi1>, vector<32x32xf32>
    %c30_i32_113 = arith.constant 30 : i32
    %310 = tpu.dynamic_rotate %309 by %c30_i32_113 dim 1 : vector<32x32xf32>, i32 -> vector<32x32xf32>
    %311 = arith.addf %291, %297 : vector<32x32xf32>
    %312 = arith.addf %298, %304 : vector<32x32xf32>
    %313 = arith.addf %311, %312 : vector<32x32xf32>
    %314 = arith.addf %313, %310 : vector<32x32xf32>
    %c6_114 = arith.constant 6 : index
    %c0_115 = arith.constant 0 : index
    %c0_116 = arith.constant 0 : index
    %315 = vector.load %arg5[%c6_114, %c0_115, %c0_116] : memref<10x32x1xf32, #tpu.memory_space<vmem>>, vector<1x32x1xf32>
    %316 = vector.shape_cast %315 : vector<1x32x1xf32> to vector<32x1xf32>
    %317 = vector.broadcast %316 : vector<32x1xf32> to vector<32x32xf32>
    %318 = arith.addf %314, %317 : vector<32x32xf32>
    %cst_117 = arith.constant 0.000000e+00 : f32
    %319 = vector.broadcast %cst_117 : f32 to vector<32x32xf32>
    %320 = arith.maximumf %318, %319 : vector<32x32xf32>
    %c7 = arith.constant 7 : index
    %c0_118 = arith.constant 0 : index
    %c0_119 = arith.constant 0 : index
    %321 = vector.load %arg4[%c7, %c0_118, %c0_119] : memref<10x160x32xf32, #tpu.memory_space<vmem>>, vector<1x160x32xf32>
    %322 = vector.shape_cast %321 : vector<1x160x32xf32> to vector<160x32xf32>
    %cst_120 = arith.constant dense<0.000000e+00> : vector<160x32xf32>
    %323 = tpu.matmul %322, %320, %cst_120 {dimension_numbers = #tpu.dot_dimension_numbers<[1], [0], [0], [1], [0, 0, 1, 1], [], []>} : vector<160x32xf32>, vector<32x32xf32>, vector<160x32xf32> -> vector<160x32xf32>
    %324 = vector.extract_strided_slice %323 {offsets = [0, 0], sizes = [32, 32], strides = [1, 1]} : vector<160x32xf32> to vector<32x32xf32>
    %cst_121 = arith.constant 0.000000e+00 : f32
    %325 = vector.shape_cast %21 : vector<1x32xi1> to vector<1x32xi1>
    %326 = vector.broadcast %325 : vector<1x32xi1> to vector<32x32xi1>
    %327 = vector.broadcast %cst_121 : f32 to vector<32x32xf32>
    %328 = arith.select %326, %324, %327 : vector<32x32xi1>, vector<32x32xf32>
    %c2_i32_122 = arith.constant 2 : i32
    %329 = tpu.dynamic_rotate %328 by %c2_i32_122 dim 1 : vector<32x32xf32>, i32 -> vector<32x32xf32>
    %330 = vector.extract_strided_slice %323 {offsets = [32, 0], sizes = [32, 32], strides = [1, 1]} : vector<160x32xf32> to vector<32x32xf32>
    %cst_123 = arith.constant 0.000000e+00 : f32
    %331 = vector.shape_cast %26 : vector<1x32xi1> to vector<1x32xi1>
    %332 = vector.broadcast %331 : vector<1x32xi1> to vector<32x32xi1>
    %333 = vector.broadcast %cst_123 : f32 to vector<32x32xf32>
    %334 = arith.select %332, %330, %333 : vector<32x32xi1>, vector<32x32xf32>
    %c1_i32_124 = arith.constant 1 : i32
    %335 = tpu.dynamic_rotate %334 by %c1_i32_124 dim 1 : vector<32x32xf32>, i32 -> vector<32x32xf32>
    %336 = vector.extract_strided_slice %323 {offsets = [64, 0], sizes = [32, 32], strides = [1, 1]} : vector<160x32xf32> to vector<32x32xf32>
    %337 = vector.extract_strided_slice %323 {offsets = [96, 0], sizes = [32, 32], strides = [1, 1]} : vector<160x32xf32> to vector<32x32xf32>
    %cst_125 = arith.constant 0.000000e+00 : f32
    %338 = vector.shape_cast %31 : vector<1x32xi1> to vector<1x32xi1>
    %339 = vector.broadcast %338 : vector<1x32xi1> to vector<32x32xi1>
    %340 = vector.broadcast %cst_125 : f32 to vector<32x32xf32>
    %341 = arith.select %339, %337, %340 : vector<32x32xi1>, vector<32x32xf32>
    %c31_i32_126 = arith.constant 31 : i32
    %342 = tpu.dynamic_rotate %341 by %c31_i32_126 dim 1 : vector<32x32xf32>, i32 -> vector<32x32xf32>
    %343 = vector.extract_strided_slice %323 {offsets = [128, 0], sizes = [32, 32], strides = [1, 1]} : vector<160x32xf32> to vector<32x32xf32>
    %cst_127 = arith.constant 0.000000e+00 : f32
    %344 = vector.shape_cast %36 : vector<1x32xi1> to vector<1x32xi1>
    %345 = vector.broadcast %344 : vector<1x32xi1> to vector<32x32xi1>
    %346 = vector.broadcast %cst_127 : f32 to vector<32x32xf32>
    %347 = arith.select %345, %343, %346 : vector<32x32xi1>, vector<32x32xf32>
    %c30_i32_128 = arith.constant 30 : i32
    %348 = tpu.dynamic_rotate %347 by %c30_i32_128 dim 1 : vector<32x32xf32>, i32 -> vector<32x32xf32>
    %349 = arith.addf %329, %335 : vector<32x32xf32>
    %350 = arith.addf %336, %342 : vector<32x32xf32>
    %351 = arith.addf %349, %350 : vector<32x32xf32>
    %352 = arith.addf %351, %348 : vector<32x32xf32>
    %c7_129 = arith.constant 7 : index
    %c0_130 = arith.constant 0 : index
    %c0_131 = arith.constant 0 : index
    %353 = vector.load %arg5[%c7_129, %c0_130, %c0_131] : memref<10x32x1xf32, #tpu.memory_space<vmem>>, vector<1x32x1xf32>
    %354 = vector.shape_cast %353 : vector<1x32x1xf32> to vector<32x1xf32>
    %355 = vector.broadcast %354 : vector<32x1xf32> to vector<32x32xf32>
    %356 = arith.addf %352, %355 : vector<32x32xf32>
    %cst_132 = arith.constant 3.000000e-01 : f32
    %357 = vector.broadcast %cst_132 : f32 to vector<32x32xf32>
    %358 = arith.mulf %357, %356 : vector<32x32xf32>
    %359 = arith.addf %280, %358 : vector<32x32xf32>
    %cst_133 = arith.constant 0.000000e+00 : f32
    %360 = vector.broadcast %cst_133 : f32 to vector<32x32xf32>
    %361 = arith.maximumf %359, %360 : vector<32x32xf32>
    %c8 = arith.constant 8 : index
    %c0_134 = arith.constant 0 : index
    %c0_135 = arith.constant 0 : index
    %362 = vector.load %arg4[%c8, %c0_134, %c0_135] : memref<10x160x32xf32, #tpu.memory_space<vmem>>, vector<1x160x32xf32>
    %363 = vector.shape_cast %362 : vector<1x160x32xf32> to vector<160x32xf32>
    %cst_136 = arith.constant dense<0.000000e+00> : vector<160x32xf32>
    %364 = tpu.matmul %363, %361, %cst_136 {dimension_numbers = #tpu.dot_dimension_numbers<[1], [0], [0], [1], [0, 0, 1, 1], [], []>} : vector<160x32xf32>, vector<32x32xf32>, vector<160x32xf32> -> vector<160x32xf32>
    %365 = vector.extract_strided_slice %364 {offsets = [0, 0], sizes = [32, 32], strides = [1, 1]} : vector<160x32xf32> to vector<32x32xf32>
    %cst_137 = arith.constant 0.000000e+00 : f32
    %366 = vector.shape_cast %21 : vector<1x32xi1> to vector<1x32xi1>
    %367 = vector.broadcast %366 : vector<1x32xi1> to vector<32x32xi1>
    %368 = vector.broadcast %cst_137 : f32 to vector<32x32xf32>
    %369 = arith.select %367, %365, %368 : vector<32x32xi1>, vector<32x32xf32>
    %c2_i32_138 = arith.constant 2 : i32
    %370 = tpu.dynamic_rotate %369 by %c2_i32_138 dim 1 : vector<32x32xf32>, i32 -> vector<32x32xf32>
    %371 = vector.extract_strided_slice %364 {offsets = [32, 0], sizes = [32, 32], strides = [1, 1]} : vector<160x32xf32> to vector<32x32xf32>
    %cst_139 = arith.constant 0.000000e+00 : f32
    %372 = vector.shape_cast %26 : vector<1x32xi1> to vector<1x32xi1>
    %373 = vector.broadcast %372 : vector<1x32xi1> to vector<32x32xi1>
    %374 = vector.broadcast %cst_139 : f32 to vector<32x32xf32>
    %375 = arith.select %373, %371, %374 : vector<32x32xi1>, vector<32x32xf32>
    %c1_i32_140 = arith.constant 1 : i32
    %376 = tpu.dynamic_rotate %375 by %c1_i32_140 dim 1 : vector<32x32xf32>, i32 -> vector<32x32xf32>
    %377 = vector.extract_strided_slice %364 {offsets = [64, 0], sizes = [32, 32], strides = [1, 1]} : vector<160x32xf32> to vector<32x32xf32>
    %378 = vector.extract_strided_slice %364 {offsets = [96, 0], sizes = [32, 32], strides = [1, 1]} : vector<160x32xf32> to vector<32x32xf32>
    %cst_141 = arith.constant 0.000000e+00 : f32
    %379 = vector.shape_cast %31 : vector<1x32xi1> to vector<1x32xi1>
    %380 = vector.broadcast %379 : vector<1x32xi1> to vector<32x32xi1>
    %381 = vector.broadcast %cst_141 : f32 to vector<32x32xf32>
    %382 = arith.select %380, %378, %381 : vector<32x32xi1>, vector<32x32xf32>
    %c31_i32_142 = arith.constant 31 : i32
    %383 = tpu.dynamic_rotate %382 by %c31_i32_142 dim 1 : vector<32x32xf32>, i32 -> vector<32x32xf32>
    %384 = vector.extract_strided_slice %364 {offsets = [128, 0], sizes = [32, 32], strides = [1, 1]} : vector<160x32xf32> to vector<32x32xf32>
    %cst_143 = arith.constant 0.000000e+00 : f32
    %385 = vector.shape_cast %36 : vector<1x32xi1> to vector<1x32xi1>
    %386 = vector.broadcast %385 : vector<1x32xi1> to vector<32x32xi1>
    %387 = vector.broadcast %cst_143 : f32 to vector<32x32xf32>
    %388 = arith.select %386, %384, %387 : vector<32x32xi1>, vector<32x32xf32>
    %c30_i32_144 = arith.constant 30 : i32
    %389 = tpu.dynamic_rotate %388 by %c30_i32_144 dim 1 : vector<32x32xf32>, i32 -> vector<32x32xf32>
    %390 = arith.addf %370, %376 : vector<32x32xf32>
    %391 = arith.addf %377, %383 : vector<32x32xf32>
    %392 = arith.addf %390, %391 : vector<32x32xf32>
    %393 = arith.addf %392, %389 : vector<32x32xf32>
    %c8_145 = arith.constant 8 : index
    %c0_146 = arith.constant 0 : index
    %c0_147 = arith.constant 0 : index
    %394 = vector.load %arg5[%c8_145, %c0_146, %c0_147] : memref<10x32x1xf32, #tpu.memory_space<vmem>>, vector<1x32x1xf32>
    %395 = vector.shape_cast %394 : vector<1x32x1xf32> to vector<32x1xf32>
    %396 = vector.broadcast %395 : vector<32x1xf32> to vector<32x32xf32>
    %397 = arith.addf %393, %396 : vector<32x32xf32>
    %cst_148 = arith.constant 0.000000e+00 : f32
    %398 = vector.broadcast %cst_148 : f32 to vector<32x32xf32>
    %399 = arith.maximumf %397, %398 : vector<32x32xf32>
    %c9 = arith.constant 9 : index
    %c0_149 = arith.constant 0 : index
    %c0_150 = arith.constant 0 : index
    %400 = vector.load %arg4[%c9, %c0_149, %c0_150] : memref<10x160x32xf32, #tpu.memory_space<vmem>>, vector<1x160x32xf32>
    %401 = vector.shape_cast %400 : vector<1x160x32xf32> to vector<160x32xf32>
    %cst_151 = arith.constant dense<0.000000e+00> : vector<160x32xf32>
    %402 = tpu.matmul %401, %399, %cst_151 {dimension_numbers = #tpu.dot_dimension_numbers<[1], [0], [0], [1], [0, 0, 1, 1], [], []>} : vector<160x32xf32>, vector<32x32xf32>, vector<160x32xf32> -> vector<160x32xf32>
    %403 = vector.extract_strided_slice %402 {offsets = [0, 0], sizes = [32, 32], strides = [1, 1]} : vector<160x32xf32> to vector<32x32xf32>
    %cst_152 = arith.constant 0.000000e+00 : f32
    %404 = vector.shape_cast %21 : vector<1x32xi1> to vector<1x32xi1>
    %405 = vector.broadcast %404 : vector<1x32xi1> to vector<32x32xi1>
    %406 = vector.broadcast %cst_152 : f32 to vector<32x32xf32>
    %407 = arith.select %405, %403, %406 : vector<32x32xi1>, vector<32x32xf32>
    %c2_i32_153 = arith.constant 2 : i32
    %408 = tpu.dynamic_rotate %407 by %c2_i32_153 dim 1 : vector<32x32xf32>, i32 -> vector<32x32xf32>
    %409 = vector.extract_strided_slice %402 {offsets = [32, 0], sizes = [32, 32], strides = [1, 1]} : vector<160x32xf32> to vector<32x32xf32>
    %cst_154 = arith.constant 0.000000e+00 : f32
    %410 = vector.shape_cast %26 : vector<1x32xi1> to vector<1x32xi1>
    %411 = vector.broadcast %410 : vector<1x32xi1> to vector<32x32xi1>
    %412 = vector.broadcast %cst_154 : f32 to vector<32x32xf32>
    %413 = arith.select %411, %409, %412 : vector<32x32xi1>, vector<32x32xf32>
    %c1_i32_155 = arith.constant 1 : i32
    %414 = tpu.dynamic_rotate %413 by %c1_i32_155 dim 1 : vector<32x32xf32>, i32 -> vector<32x32xf32>
    %415 = vector.extract_strided_slice %402 {offsets = [64, 0], sizes = [32, 32], strides = [1, 1]} : vector<160x32xf32> to vector<32x32xf32>
    %416 = vector.extract_strided_slice %402 {offsets = [96, 0], sizes = [32, 32], strides = [1, 1]} : vector<160x32xf32> to vector<32x32xf32>
    %cst_156 = arith.constant 0.000000e+00 : f32
    %417 = vector.shape_cast %31 : vector<1x32xi1> to vector<1x32xi1>
    %418 = vector.broadcast %417 : vector<1x32xi1> to vector<32x32xi1>
    %419 = vector.broadcast %cst_156 : f32 to vector<32x32xf32>
    %420 = arith.select %418, %416, %419 : vector<32x32xi1>, vector<32x32xf32>
    %c31_i32_157 = arith.constant 31 : i32
    %421 = tpu.dynamic_rotate %420 by %c31_i32_157 dim 1 : vector<32x32xf32>, i32 -> vector<32x32xf32>
    %422 = vector.extract_strided_slice %402 {offsets = [128, 0], sizes = [32, 32], strides = [1, 1]} : vector<160x32xf32> to vector<32x32xf32>
    %cst_158 = arith.constant 0.000000e+00 : f32
    %423 = vector.shape_cast %36 : vector<1x32xi1> to vector<1x32xi1>
    %424 = vector.broadcast %423 : vector<1x32xi1> to vector<32x32xi1>
    %425 = vector.broadcast %cst_158 : f32 to vector<32x32xf32>
    %426 = arith.select %424, %422, %425 : vector<32x32xi1>, vector<32x32xf32>
    %c30_i32_159 = arith.constant 30 : i32
    %427 = tpu.dynamic_rotate %426 by %c30_i32_159 dim 1 : vector<32x32xf32>, i32 -> vector<32x32xf32>
    %428 = arith.addf %408, %414 : vector<32x32xf32>
    %429 = arith.addf %415, %421 : vector<32x32xf32>
    %430 = arith.addf %428, %429 : vector<32x32xf32>
    %431 = arith.addf %430, %427 : vector<32x32xf32>
    %c9_160 = arith.constant 9 : index
    %c0_161 = arith.constant 0 : index
    %c0_162 = arith.constant 0 : index
    %432 = vector.load %arg5[%c9_160, %c0_161, %c0_162] : memref<10x32x1xf32, #tpu.memory_space<vmem>>, vector<1x32x1xf32>
    %433 = vector.shape_cast %432 : vector<1x32x1xf32> to vector<32x1xf32>
    %434 = vector.broadcast %433 : vector<32x1xf32> to vector<32x32xf32>
    %435 = arith.addf %431, %434 : vector<32x32xf32>
    %cst_163 = arith.constant 3.000000e-01 : f32
    %436 = vector.broadcast %cst_163 : f32 to vector<32x32xf32>
    %437 = arith.mulf %436, %435 : vector<32x32xf32>
    %438 = arith.addf %359, %437 : vector<32x32xf32>
    %c0_164 = arith.constant 0 : index
    %c0_165 = arith.constant 0 : index
    %439 = vector.load %arg6[%c0_164, %c0_165] : memref<32x32xf32, #tpu.memory_space<vmem>>, vector<32x32xf32>
    %440 = arith.mulf %438, %439 : vector<32x32xf32>
    %c0_166 = arith.constant 0 : index
    %c0_167 = arith.constant 0 : index
    %441 = vector.load %arg7[%c0_166, %c0_167] : memref<32x2xf32, #tpu.memory_space<vmem>>, vector<32x2xf32>
    %cst_168 = arith.constant dense<0.000000e+00> : vector<32x2xf32>
    %442 = tpu.matmul %440, %441, %cst_168 {dimension_numbers = #tpu.dot_dimension_numbers<[1], [0], [0], [1], [0, 0, 1, 1], [], []>} : vector<32x32xf32>, vector<32x2xf32>, vector<32x2xf32> -> vector<32x2xf32>
    %cst_169 = arith.constant dense<0.000000e+00> : vector<2xf32>
    %443 = vector.multi_reduction <add>, %442, %cst_169 [0] : vector<32x2xf32> to vector<2xf32>
    %444 = vector.shape_cast %443 : vector<2xf32> to vector<1x2xf32>
    %c0_170 = arith.constant 0 : index
    %c0_171 = arith.constant 0 : index
    %445 = vector.load %arg8[%c0_170, %c0_171] : memref<1x1xf32, #tpu.memory_space<vmem>>, vector<1x1xf32>
    %446 = vector.broadcast %445 : vector<1x1xf32> to vector<1x2xf32>
    %447 = arith.addf %444, %446 : vector<1x2xf32>
    %c0_172 = arith.constant 0 : index
    %c0_173 = arith.constant 0 : index
    %c0_174 = arith.constant 0 : index
    %448 = vector.load %arg9[%c0_172, %c0_173, %c0_174] : memref<1x1x2xf32, #tpu.memory_space<vmem>>, vector<1x1x2xf32>
    %449 = vector.shape_cast %448 : vector<1x1x2xf32> to vector<1x2xf32>
    %450 = vector.shape_cast %447 : vector<1x2xf32> to vector<1x1x2xf32>
    tpu.vector_store %arg9[%c0_172, %c0_173, %c0_174], %450 {strides = array<i32>} : memref<1x1x2xf32, #tpu.memory_space<vmem>>, vector<1x1x2xf32>,
    return
  }
  func.func @transform_0(%arg0: i32) -> (i32, i32, i32) {
    %c0_i32 = arith.constant 0 : i32
    %c0_i32_0 = arith.constant 0 : i32
    %c0_i32_1 = arith.constant 0 : i32
    return %arg0, %c0_i32, %c0_i32_0 : i32, i32, i32
  }
  func.func @transform_1(%arg0: i32) -> (i32, i32) {
    %c0_i32 = arith.constant 0 : i32
    %c0_i32_0 = arith.constant 0 : i32
    %c0_i32_1 = arith.constant 0 : i32
    return %c0_i32, %c0_i32_0 : i32, i32
  }
  func.func @transform_2(%arg0: i32) -> (i32, i32) {
    %c0_i32 = arith.constant 0 : i32
    %c0_i32_0 = arith.constant 0 : i32
    %c0_i32_1 = arith.constant 0 : i32
    return %c0_i32, %c0_i32_0 : i32, i32
  }
  func.func @transform_3(%arg0: i32) -> (i32, i32, i32) {
    %c0_i32 = arith.constant 0 : i32
    %c0_i32_0 = arith.constant 0 : i32
    %c0_i32_1 = arith.constant 0 : i32
    %c0_i32_2 = arith.constant 0 : i32
    return %c0_i32, %c0_i32_0, %c0_i32_1 : i32, i32, i32
  }
  func.func @transform_4(%arg0: i32) -> (i32, i32, i32) {
    %c0_i32 = arith.constant 0 : i32
    %c0_i32_0 = arith.constant 0 : i32
    %c0_i32_1 = arith.constant 0 : i32
    %c0_i32_2 = arith.constant 0 : i32
    return %c0_i32, %c0_i32_0, %c0_i32_1 : i32, i32, i32
  }
  func.func @transform_5(%arg0: i32) -> (i32, i32) {
    %c0_i32 = arith.constant 0 : i32
    %c0_i32_0 = arith.constant 0 : i32
    %c0_i32_1 = arith.constant 0 : i32
    return %c0_i32, %c0_i32_0 : i32, i32
  }
  func.func @transform_6(%arg0: i32) -> (i32, i32) {
    %c0_i32 = arith.constant 0 : i32
    %c0_i32_0 = arith.constant 0 : i32
    %c0_i32_1 = arith.constant 0 : i32
    return %c0_i32, %c0_i32_0 : i32, i32
  }
  func.func @transform_7(%arg0: i32) -> (i32, i32) {
    %c0_i32 = arith.constant 0 : i32
    %c0_i32_0 = arith.constant 0 : i32
    %c0_i32_1 = arith.constant 0 : i32
    return %c0_i32, %c0_i32_0 : i32, i32
  }
  func.func @transform_8(%arg0: i32) -> (i32, i32, i32) {
    %c0_i32 = arith.constant 0 : i32
    %c0_i32_0 = arith.constant 0 : i32
    %c0_i32_1 = arith.constant 0 : i32
    return %arg0, %c0_i32, %c0_i32_0 : i32, i32, i32
  }
}

</mosaic_0001>

<llo_original>
// kernel: tpu_custom_call.1
$region0: #{tpu_custom_call.1}
  #allocation0 [shape = 'u32[]', space=smem, size = 0x4, offset = 0x4, fixed_abs, tag = 'smem constant byte address 0x4 - core index']
  #allocation1 [shape = 'u32[144,128]{1,0:T(1,128)}', space=vmem, size = 0x12000, scoped, tag = 'internal scratch']
  #allocation2 [shape = 'f32[1,1]{1,0:T(1,128)S(1)}', space=vmem, size = 0x200, scoped, tag = 'scoped memory for tpu_custom_call.1']
  %s0 = inlined_call_operand.vmem [shape: f32[1,8,32], index: 0, kind: input, shape index: {}]
  %s1 = inlined_call_operand.vmem [shape: f32[32,8], index: 1, kind: input, shape index: {}]
  %s2 = inlined_call_operand.vmem [shape: f32[32,1], index: 2, kind: input, shape index: {}]
  %s3 = inlined_call_operand.vmem [shape: f32[10,160,32], index: 3, kind: input, shape index: {}]
  %s4 = inlined_call_operand.vmem [shape: f32[10,32,1], index: 4, kind: input, shape index: {}]
  %s5 = inlined_call_operand.vmem [shape: f32[32,32], index: 5, kind: input, shape index: {}]
  %s6 = inlined_call_operand.vmem [shape: f32[32,2], index: 6, kind: input, shape index: {}]
  %s7 = inlined_call_operand.<no memory space> [shape: f32[1,1], index: 7, kind: input, shape index: {}]
  %s8 = inlined_call_operand.hbm [shape: f32[1,1,2], index: 8, kind: output, shape index: {}]
  %s9 = sld [smem:[#allocation0]]
  $region42: #{tpu_custom_call.1} parent=0
    _
  %s11 = ssub.s32 1, %s9
  %s12 = scalar_select 0, %s11, %s9
  %v13 = vstv %s7
  %14 = vst [vmem:[#allocation2] sm:$0x1] %v13
  $region1: #{tpu_custom_call.1} parent=0
    #allocation3 [shape = 'u8[512]{0}', space=vmem, size = 0x400, scoped, tag = 'output window, operand 0, single buffered']
    #allocation4 [shape = 's32[1]{0}', space=sflag, size = 0x4, scoped, tag = 'scoped memory for tpu_custom_call.1']
    %15 = vsyncpa [#allocation4], 0
    // Predicated region
    $region2: #{tpu_custom_call.1} parent=1 // pred_check
      _
    $region3: #{tpu_custom_call.1} parent=1 // pred_check_branch
      %17 = sbr.rel (0) target = $region5
    $region4: #{tpu_custom_call.1} parent=1 // pred_region
      _
    $region5: #{tpu_custom_call.1} parent=1 // pred_fallthru
      _
    // Predicated region
    $region6: #{tpu_custom_call.1} parent=1 // pred_check
      _
    $region7: #{tpu_custom_call.1} parent=1 // pred_check_branch
      %19 = sbr.rel (0) target = $region9
    $region8: #{tpu_custom_call.1} parent=1 // pred_region
      _
    $region9: #{tpu_custom_call.1} parent=1 // pred_fallthru
      _
    // Predicated region
    $region10: #{tpu_custom_call.1} parent=1 // pred_check
      _
    $region11: #{tpu_custom_call.1} parent=1 // pred_check_branch
      %21 = sbr.rel (0) target = $region13
    $region12: #{tpu_custom_call.1} parent=1 // pred_region
      _
    $region13: #{tpu_custom_call.1} parent=1 // pred_fallthru
      _
    // Predicated region
    $region14: #{tpu_custom_call.1} parent=1 // pred_check
      _
    $region15: #{tpu_custom_call.1} parent=1 // pred_check_branch
      %23 = sbr.rel (0) target = $region17
    $region16: #{tpu_custom_call.1} parent=1 // pred_region
      _
    $region17: #{tpu_custom_call.1} parent=1 // pred_fallthru
      _
    // Predicated region
    $region18: #{tpu_custom_call.1} parent=1 // pred_check
      _
    $region19: #{tpu_custom_call.1} parent=1 // pred_check_branch
      %25 = sbr.rel (0) target = $region21
    $region20: #{tpu_custom_call.1} parent=1 // pred_region
      _
    $region21: #{tpu_custom_call.1} parent=1 // pred_fallthru
      _
    // Predicated region
    $region22: #{tpu_custom_call.1} parent=1 // pred_check
      _
    $region23: #{tpu_custom_call.1} parent=1 // pred_check_branch
      %27 = sbr.rel (0) target = $region25
    $region24: #{tpu_custom_call.1} parent=1 // pred_region
      _
    $region25: #{tpu_custom_call.1} parent=1 // pred_fallthru
      _
    // Predicated region
    $region26: #{tpu_custom_call.1} parent=1 // pred_check
      _
    $region27: #{tpu_custom_call.1} parent=1 // pred_check_branch
      %29 = sbr.rel (0) target = $region29
    $region28: #{tpu_custom_call.1} parent=1 // pred_region
      _
    $region29: #{tpu_custom_call.1} parent=1 // pred_fallthru
      _
    // Predicated region
    $region30: #{tpu_custom_call.1} parent=1 // pred_check
      _
    $region31: #{tpu_custom_call.1} parent=1 // pred_check_branch
      %31 = sbr.rel (0) target = $region33
    $region32: #{tpu_custom_call.1} parent=1 // pred_region
      _
    $region33: #{tpu_custom_call.1} parent=1 // pred_fallthru
      _
    %v32 = vlaneseq
    %v33 = vand.u32 %v32, 127
    %vm34 = vcmp.lt.s32.totalorder %v33, 0
    %v35 = vsub.s32 0, %v33
    %v36 = vsel %vm34, %v35, %v33
    %v37 = vshrl.u32 %v36, 4
    %v38 = vand.u32 %v36, 15
    %v39 = vsub.s32 0, %v38
    %v40 = vsel %vm34, %v39, %v38
    %vm41 = vcmp.ne.s32.totalorder %v40, 0
    %vm42 = vcmp.lt.s32.totalorder %v40, 0
    %vm43 = vmand %vm42, %vm41
    %v44 = vadd.s32 %v40, 16
    %v45 = vsel %vm43, %v44, %v40
    %vm46 = vcmp.ge.s32.totalorder %v45, 4294967294
    %vm47 = vcmp.lt.s32.totalorder %v45, 14
    %vm48 = vmand %vm46, %vm47
    %vm49 = vcmp.ge.s32.totalorder %v45, 4294967295
    %vm50 = vcmp.lt.s32.totalorder %v45, 15
    %vm51 = vmand %vm49, %vm50
    %vm52 = vcmp.ge.s32.totalorder %v45, 1
    %vm53 = vcmp.lt.s32.totalorder %v45, 17
    %vm54 = vmand %vm52, %vm53
    %vm55 = vcmp.ge.s32.totalorder %v45, 2
    %vm56 = vcmp.lt.s32.totalorder %v45, 18
    %vm57 = vmand %vm55, %vm56
    %v58 = vld [vmem:[%s1] sm:$0xff]
    %v59 = vld [vmem:[%s1 + $0x8] sm:$0xff]
    %v60 = vld [vmem:[%s1 + $0x10] sm:$0xff]
    %v61 = vld [vmem:[%s1 + $0x18] sm:$0xff]
    %v62 = vld [vmem:[%s0] sm:$0xff]
    %v63 = vld [vmem:[%s2] sm:$0xff]
    %v64 = vld [vmem:[%s2 + $0x8] sm:$0xff]
    %v65 = vld [vmem:[%s2 + $0x10] sm:$0xff]
    %v66 = vld [vmem:[%s2 + $0x18] sm:$0xff]
    %68 = vset.pattern.permute.xlu0 0
    %69 = vperm.xlu0 %68, %v63
    %v70 = vpop.permute.xlu0 %69
    %73 = vset.pattern.permute.xlu0 0
    %74 = vperm.xlu0 %73, %v64
    %v75 = vpop.permute.xlu0 %74
    %78 = vset.pattern.permute.xlu0 0
    %79 = vperm.xlu0 %78, %v65
    %v80 = vpop.permute.xlu0 %79
    %83 = vset.pattern.permute.xlu0 0
    %84 = vperm.xlu0 %83, %v66
    %v85 = vpop.permute.xlu0 %84
    %vm87 = vcmask 64512
    %v89 = vsel %vm87, %v58, 0
    %v92 = vsel %vm87, %v59, 0
    %v95 = vsel %vm87, %v60, 0
    %v98 = vsel %vm87, %v61, 0
    %100 = vmatprep.subr.mxu0 0.0
    %101 = vmatpush1.msra.mxu0 %v62
    %102 = vmatprep.subr.mxu0 0.0
    %103 = vmatpush1.msra.mxu0 0.0
    %104 = vmatprep.subr.mxu0 0.0
    %105 = vmatpush1.msra.mxu0 0.0
    %106 = vmatprep.subr.mxu0 0.0
    %107 = vmatpush1.msra.mxu0 0.0
    %108 = vmatprep.subr.mxu0 0.0
    %109 = vmatpush1.msra.mxu0 0.0
    %110 = vmatprep.subr.mxu0 0.0
    %111 = vmatpush1.msra.mxu0 0.0
    %112 = vmatprep.subr.mxu0 0.0
    %113 = vmatpush1.msra.mxu0 0.0
    %114 = vmatprep.subr.mxu0 0.0
    %115 = vmatpush1.msra.mxu0 0.0
    %116 = vmatprep.subr.mxu0 0.0
    %117 = vmatpush1.msra.mxu0 0.0
    %118 = vmatprep.subr.mxu0 0.0
    %119 = vmatpush1.msra.mxu0 0.0
    %120 = vmatprep.subr.mxu0 0.0
    %121 = vmatpush1.msra.mxu0 0.0
    %122 = vmatprep.subr.mxu0 0.0
    %123 = vmatpush1.msra.mxu0 0.0
    %124 = vmatprep.subr.mxu0 0.0
    %125 = vmatpush1.msra.mxu0 0.0
    %126 = vmatprep.subr.mxu0 0.0
    %127 = vmatpush1.msra.mxu0 0.0
    %128 = vmatprep.subr.mxu0 0.0
    %129 = vmatpush1.msra.mxu0 0.0
    %130 = vmatprep.subr.mxu0 0.0
    %131 = vmatpush1.msra.mxu0 0.0
    %132 = vmatprep.subr.mxu0 0.0
    %133 = vmatpush1.msra.mxu0 0.0
    %134 = vmatprep.subr.mxu0 0.0
    %135 = vmatpush1.msra.mxu0 0.0
    %136 = vmatprep.subr.mxu0 0.0
    %137 = vmatpush1.msra.mxu0 0.0
    %138 = vmatprep.subr.mxu0 0.0
    %139 = vmatpush1.msra.mxu0 0.0
    %140 = vmatprep.subr.mxu0 0.0
    %141 = vmatpush1.msra.mxu0 0.0
    %142 = vmatprep.subr.mxu0 0.0
    %143 = vmatpush1.msra.mxu0 0.0
    %144 = vmatprep.subr.mxu0 0.0
    %145 = vmatpush1.msra.mxu0 0.0
    %146 = vmatprep.subr.mxu0 0.0
    %147 = vmatpush1.msra.mxu0 0.0
    %148 = vmatprep.subr.mxu0 0.0
    %149 = vmatpush1.msra.mxu0 0.0
    %150 = vmatprep.subr.mxu0 0.0
    %151 = vmatpush1.msra.mxu0 0.0
    %152 = vmatprep.subr.mxu0 0.0
    %153 = vmatpush1.msra.mxu0 0.0
    %154 = vmatprep.subr.mxu0 0.0
    %155 = vmatpush1.msra.mxu0 0.0
    %156 = vmatprep.subr.mxu0 0.0
    %157 = vmatpush1.msra.mxu0 0.0
    %158 = vmatprep.subr.mxu0 0.0
    %159 = vmatpush1.msra.mxu0 0.0
    %160 = vmatprep.subr.mxu0 0.0
    %161 = vmatpush1.msra.mxu0 0.0
    %162 = vmatprep.subr.mxu0 0.0
    %163 = vmatpush1.msra.mxu0 0.0
    %164 = vmatprep.mubr.f32.mxu0 0.0
    %165 = vmatmul.mubr.f32.gmra.mrb[0].mxu0 %v89
    %v166 = vpop.f32.mrb[0].mxu0
    %v167 = vadd.f32 %v70, %v166
    %v168 = vpop.f32.mrb[0].mxu0
    %169 = vmatprep.mubr.f32.mxu0 0.0
    %170 = vmatmul.mubr.f32.gmra.mrb[0].mxu0 %v92
    %v171 = vpop.f32.mrb[0].mxu0
    %v172 = vadd.f32 %v75, %v171
    %v173 = vpop.f32.mrb[0].mxu0
    %174 = vmatprep.mubr.f32.mxu0 0.0
    %175 = vmatmul.mubr.f32.gmra.mrb[0].mxu0 %v95
    %v176 = vpop.f32.mrb[0].mxu0
    %v177 = vadd.f32 %v80, %v176
    %v178 = vpop.f32.mrb[0].mxu0
    %179 = vmatprep.mubr.f32.mxu0 0.0
    %180 = vmatmul.mubr.f32.gmra.mrb[0].mxu0 %v98
    %v181 = vpop.f32.mrb[0].mxu0
    %v182 = vadd.f32 %v85, %v181
    %v183 = vpop.f32.mrb[0].mxu0
    %184 = vdwg.mxu0
    %v185 = vmax.f32 %v167, 0.0
    %v186 = vmax.f32 %v172, 0.0
    %v187 = vmax.f32 %v177, 0.0
    %v188 = vmax.f32 %v182, 0.0
    %v189 = vld [vmem:[%s3] sm:$0xff]
    %v190 = vld [vmem:[%s3 + $0x8] sm:$0xff]
    %v191 = vld [vmem:[%s3 + $0x10] sm:$0xff]
    %v192 = vld [vmem:[%s3 + $0x18] sm:$0xff]
    %v193 = vld [vmem:[%s3 + $0x20] sm:$0xff]
    %v194 = vld [vmem:[%s3 + $0x28] sm:$0xff]
    %v195 = vld [vmem:[%s3 + $0x30] sm:$0xff]
    %v196 = vld [vmem:[%s3 + $0x38] sm:$0xff]
    %v197 = vld [vmem:[%s3 + $0x40] sm:$0xff]
    %v198 = vld [vmem:[%s3 + $0x48] sm:$0xff]
    %v199 = vld [vmem:[%s3 + $0x50] sm:$0xff]
    %v200 = vld [vmem:[%s3 + $0x58] sm:$0xff]
    %v201 = vld [vmem:[%s3 + $0x60] sm:$0xff]
    %v202 = vld [vmem:[%s3 + $0x68] sm:$0xff]
    %v203 = vld [vmem:[%s3 + $0x70] sm:$0xff]
    %v204 = vld [vmem:[%s3 + $0x78] sm:$0xff]
    %v205 = vld [vmem:[%s3 + $0x80] sm:$0xff]
    %v206 = vld [vmem:[%s3 + $0x88] sm:$0xff]
    %v207 = vld [vmem:[%s3 + $0x90] sm:$0xff]
    %v208 = vld [vmem:[%s3 + $0x98] sm:$0xff]
    %vm209 = vcmask 261120
    %v211 = vsel %vm209, %v189, 0
    %v214 = vsel %vm209, %v190, 0
    %v217 = vsel %vm209, %v191, 0
    %v220 = vsel %vm209, %v192, 0
    %v223 = vsel %vm209, %v193, 0
    %v226 = vsel %vm209, %v194, 0
    %v229 = vsel %vm209, %v195, 0
    %v232 = vsel %vm209, %v196, 0
    %v235 = vsel %vm209, %v197, 0
    %v238 = vsel %vm209, %v198, 0
    %v241 = vsel %vm209, %v199, 0
    %v244 = vsel %vm209, %v200, 0
    %v247 = vsel %vm209, %v201, 0
    %v250 = vsel %vm209, %v202, 0
    %v253 = vsel %vm209, %v203, 0
    %v256 = vsel %vm209, %v204, 0
    %v259 = vsel %vm209, %v205, 0
    %v262 = vsel %vm209, %v206, 0
    %v265 = vsel %vm209, %v207, 0
    %v268 = vsel %vm209, %v208, 0
    %270 = vmatprep.subr.mxu0 0.0
    %271 = vmatpush1.msra.mxu0 %v185
    %272 = vmatprep.subr.mxu0 0.0
    %273 = vmatpush1.msra.mxu0 %v186
    %274 = vmatprep.subr.mxu0 0.0
    %275 = vmatpush1.msra.mxu0 %v187
    %276 = vmatprep.subr.mxu0 0.0
    %277 = vmatpush1.msra.mxu0 %v188
    %278 = vmatprep.subr.mxu0 0.0
    %279 = vmatpush1.msra.mxu0 0.0
    %280 = vmatprep.subr.mxu0 0.0
    %281 = vmatpush1.msra.mxu0 0.0
    %282 = vmatprep.subr.mxu0 0.0
    %283 = vmatpush1.msra.mxu0 0.0
    %284 = vmatprep.subr.mxu0 0.0
    %285 = vmatpush1.msra.mxu0 0.0
    %286 = vmatprep.subr.mxu0 0.0
    %287 = vmatpush1.msra.mxu0 0.0
    %288 = vmatprep.subr.mxu0 0.0
    %289 = vmatpush1.msra.mxu0 0.0
    %290 = vmatprep.subr.mxu0 0.0
    %291 = vmatpush1.msra.mxu0 0.0
    %292 = vmatprep.subr.mxu0 0.0
    %293 = vmatpush1.msra.mxu0 0.0
    %294 = vmatprep.subr.mxu0 0.0
    %295 = vmatpush1.msra.mxu0 0.0
    %296 = vmatprep.subr.mxu0 0.0
    %297 = vmatpush1.msra.mxu0 0.0
    %298 = vmatprep.subr.mxu0 0.0
    %299 = vmatpush1.msra.mxu0 0.0
    %300 = vmatprep.subr.mxu0 0.0
    %301 = vmatpush1.msra.mxu0 0.0
    %302 = vmatprep.subr.mxu0 0.0
    %303 = vmatpush1.msra.mxu0 0.0
    %304 = vmatprep.subr.mxu0 0.0
    %305 = vmatpush1.msra.mxu0 0.0
    %306 = vmatprep.subr.mxu0 0.0
    %307 = vmatpush1.msra.mxu0 0.0
    %308 = vmatprep.subr.mxu0 0.0
    %309 = vmatpush1.msra.mxu0 0.0
    %310 = vmatprep.subr.mxu0 0.0
    %311 = vmatpush1.msra.mxu0 0.0
    %312 = vmatprep.subr.mxu0 0.0
    %313 = vmatpush1.msra.mxu0 0.0
    %314 = vmatprep.subr.mxu0 0.0
    %315 = vmatpush1.msra.mxu0 0.0
    %316 = vmatprep.subr.mxu0 0.0
    %317 = vmatpush1.msra.mxu0 0.0
    %318 = vmatprep.subr.mxu0 0.0
    %319 = vmatpush1.msra.mxu0 0.0
    %320 = vmatprep.subr.mxu0 0.0
    %321 = vmatpush1.msra.mxu0 0.0
    %322 = vmatprep.subr.mxu0 0.0
    %323 = vmatpush1.msra.mxu0 0.0
    %324 = vmatprep.subr.mxu0 0.0
    %325 = vmatpush1.msra.mxu0 0.0
    %326 = vmatprep.subr.mxu0 0.0
    %327 = vmatpush1.msra.mxu0 0.0
    %328 = vmatprep.subr.mxu0 0.0
    %329 = vmatpush1.msra.mxu0 0.0
    %330 = vmatprep.subr.mxu0 0.0
    %331 = vmatpush1.msra.mxu0 0.0
    %332 = vmatprep.subr.mxu0 0.0
    %333 = vmatpush1.msra.mxu0 0.0
    %334 = vmatprep.mubr.f32.mxu0 0.0
    %335 = vmatmul.mubr.f32.gmra.mrb[0].mxu0 %v211
    %v336 = vpop.f32.mrb[0].mxu0
    %v337 = vadd.f32 0.0, %v336
    %v338 = vpop.f32.mrb[0].mxu0
    %339 = vmatprep.mubr.f32.mxu0 0.0
    %340 = vmatmul.mubr.f32.gmra.mrb[0].mxu0 %v214
    %v341 = vpop.f32.mrb[0].mxu0
    %v342 = vadd.f32 0.0, %v341
    %v343 = vpop.f32.mrb[0].mxu0
    %344 = vmatprep.mubr.f32.mxu0 0.0
    %345 = vmatmul.mubr.f32.gmra.mrb[0].mxu0 %v217
    %v346 = vpop.f32.mrb[0].mxu0
    %v347 = vadd.f32 0.0, %v346
    %v348 = vpop.f32.mrb[0].mxu0
    %349 = vmatprep.mubr.f32.mxu0 0.0
    %350 = vmatmul.mubr.f32.gmra.mrb[0].mxu0 %v220
    %v351 = vpop.f32.mrb[0].mxu0
    %v352 = vadd.f32 0.0, %v351
    %v353 = vpop.f32.mrb[0].mxu0
    %354 = vmatprep.mubr.f32.mxu0 0.0
    %355 = vmatmul.mubr.f32.gmra.mrb[0].mxu0 %v223
    %v356 = vpop.f32.mrb[0].mxu0
    %v357 = vadd.f32 0.0, %v356
    %v358 = vpop.f32.mrb[0].mxu0
    %359 = vmatprep.mubr.f32.mxu0 0.0
    %360 = vmatmul.mubr.f32.gmra.mrb[0].mxu0 %v226
    %v361 = vpop.f32.mrb[0].mxu0
    %v362 = vadd.f32 0.0, %v361
    %v363 = vpop.f32.mrb[0].mxu0
    %364 = vmatprep.mubr.f32.mxu0 0.0
    %365 = vmatmul.mubr.f32.gmra.mrb[0].mxu0 %v229
    %v366 = vpop.f32.mrb[0].mxu0
    %v367 = vadd.f32 0.0, %v366
    %v368 = vpop.f32.mrb[0].mxu0
    %369 = vmatprep.mubr.f32.mxu0 0.0
    %370 = vmatmul.mubr.f32.gmra.mrb[0].mxu0 %v232
    %v371 = vpop.f32.mrb[0].mxu0
    %v372 = vadd.f32 0.0, %v371
    %v373 = vpop.f32.mrb[0].mxu0
    %374 = vmatprep.mubr.f32.mxu0 0.0
    %375 = vmatmul.mubr.f32.gmra.mrb[0].mxu0 %v235
    %v376 = vpop.f32.mrb[0].mxu0
    %v377 = vadd.f32 0.0, %v376
    %v378 = vpop.f32.mrb[0].mxu0
    %379 = vmatprep.mubr.f32.mxu0 0.0
    %380 = vmatmul.mubr.f32.gmra.mrb[0].mxu0 %v238
    %v381 = vpop.f32.mrb[0].mxu0
    %v382 = vadd.f32 0.0, %v381
    %v383 = vpop.f32.mrb[0].mxu0
    %384 = vmatprep.mubr.f32.mxu0 0.0
    %385 = vmatmul.mubr.f32.gmra.mrb[0].mxu0 %v241
    %v386 = vpop.f32.mrb[0].mxu0
    %v387 = vadd.f32 0.0, %v386
    %v388 = vpop.f32.mrb[0].mxu0
    %389 = vmatprep.mubr.f32.mxu0 0.0
    %390 = vmatmul.mubr.f32.gmra.mrb[0].mxu0 %v244
    %v391 = vpop.f32.mrb[0].mxu0
    %v392 = vadd.f32 0.0, %v391
    %v393 = vpop.f32.mrb[0].mxu0
    %394 = vmatprep.mubr.f32.mxu0 0.0
    %395 = vmatmul.mubr.f32.gmra.mrb[0].mxu0 %v247
    %v396 = vpop.f32.mrb[0].mxu0
    %v397 = vadd.f32 0.0, %v396
    %v398 = vpop.f32.mrb[0].mxu0
    %399 = vmatprep.mubr.f32.mxu0 0.0
    %400 = vmatmul.mubr.f32.gmra.mrb[0].mxu0 %v250
    %v401 = vpop.f32.mrb[0].mxu0
    %v402 = vadd.f32 0.0, %v401
    %v403 = vpop.f32.mrb[0].mxu0
    %404 = vmatprep.mubr.f32.mxu0 0.0
    %405 = vmatmul.mubr.f32.gmra.mrb[0].mxu0 %v253
    %v406 = vpop.f32.mrb[0].mxu0
    %v407 = vadd.f32 0.0, %v406
    %v408 = vpop.f32.mrb[0].mxu0
    %409 = vmatprep.mubr.f32.mxu0 0.0
    %410 = vmatmul.mubr.f32.gmra.mrb[0].mxu0 %v256
    %v411 = vpop.f32.mrb[0].mxu0
    %v412 = vadd.f32 0.0, %v411
    %v413 = vpop.f32.mrb[0].mxu0
    %414 = vmatprep.mubr.f32.mxu0 0.0
    %415 = vmatmul.mubr.f32.gmra.mrb[0].mxu0 %v259
    %v416 = vpop.f32.mrb[0].mxu0
    %v417 = vadd.f32 0.0, %v416
    %v418 = vpop.f32.mrb[0].mxu0
    %419 = vmatprep.mubr.f32.mxu0 0.0
    %420 = vmatmul.mubr.f32.gmra.mrb[0].mxu0 %v262
    %v421 = vpop.f32.mrb[0].mxu0
    %v422 = vadd.f32 0.0, %v421
    %v423 = vpop.f32.mrb[0].mxu0
    %424 = vmatprep.mubr.f32.mxu0 0.0
    %425 = vmatmul.mubr.f32.gmra.mrb[0].mxu0 %v265
    %v426 = vpop.f32.mrb[0].mxu0
    %v427 = vadd.f32 0.0, %v426
    %v428 = vpop.f32.mrb[0].mxu0
    %429 = vmatprep.mubr.f32.mxu0 0.0
    %430 = vmatmul.mubr.f32.gmra.mrb[0].mxu0 %v268
    %v431 = vpop.f32.mrb[0].mxu0
    %v432 = vadd.f32 0.0, %v431
    %v433 = vpop.f32.mrb[0].mxu0
    %434 = vdwg.mxu0
    %v435 = vsel %vm48, 1, 0
    %vm436 = vcmp.eq.s32.totalorder %v435, 1
    %v437 = vsel %vm436, %v337, 0.0
    %v438 = vsel %vm436, %v342, 0.0
    %v439 = vsel %vm436, %v347, 0.0
    %v440 = vsel %vm436, %v352, 0.0
    %vm441 = vcmask 1047808
    %442 = vrot.lane.b32.xlu0 %v437, 32
    %v443 = vpop.permute.xlu0 %442
    %v444 = vsel %vm441, %v443, %v437
    %445 = vrot.lane.b32.xlu0 %v438, 32
    %v446 = vpop.permute.xlu0 %445
    %v447 = vsel %vm441, %v446, %v438
    %448 = vrot.lane.b32.xlu0 %v439, 32
    %v449 = vpop.permute.xlu0 %448
    %v450 = vsel %vm441, %v449, %v439
    %451 = vrot.lane.b32.xlu0 %v440, 32
    %v452 = vpop.permute.xlu0 %451
    %v453 = vsel %vm441, %v452, %v440
    %454 = vrot.lane.b32.xlu0 %v444, 32
    %v455 = vpop.permute.xlu0 %454
    %456 = vrot.lane.b32.xlu0 %v447, 32
    %v457 = vpop.permute.xlu0 %456
    %458 = vrot.lane.b32.xlu0 %v450, 32
    %v459 = vpop.permute.xlu0 %458
    %460 = vrot.lane.b32.xlu0 %v453, 32
    %v461 = vpop.permute.xlu0 %460
    %v462 = vsel %vm441, %v455, %v437
    %v463 = vsel %vm441, %v457, %v438
    %v464 = vsel %vm441, %v459, %v439
    %v465 = vsel %vm441, %v461, %v440
    %v466 = vsel %vm51, 1, 0
    %vm467 = vcmp.eq.s32.totalorder %v466, 1
    %v468 = vsel %vm467, %v357, 0.0
    %v469 = vsel %vm467, %v362, 0.0
    %v470 = vsel %vm467, %v367, 0.0
    %v471 = vsel %vm467, %v372, 0.0
    %472 = vrot.lane.b32.xlu0 %v468, 32
    %v473 = vpop.permute.xlu0 %472
    %v474 = vsel %vm441, %v473, %v468
    %475 = vrot.lane.b32.xlu0 %v469, 32
    %v476 = vpop.permute.xlu0 %475
    %v477 = vsel %vm441, %v476, %v469
    %478 = vrot.lane.b32.xlu0 %v470, 32
    %v479 = vpop.permute.xlu0 %478
    %v480 = vsel %vm441, %v479, %v470
    %481 = vrot.lane.b32.xlu0 %v471, 32
    %v482 = vpop.permute.xlu0 %481
    %v483 = vsel %vm441, %v482, %v471
    %484 = vrot.lane.b32.xlu0 %v474, 32
    %v485 = vpop.permute.xlu0 %484
    %486 = vrot.lane.b32.xlu0 %v477, 32
    %v487 = vpop.permute.xlu0 %486
    %488 = vrot.lane.b32.xlu0 %v480, 32
    %v489 = vpop.permute.xlu0 %488
    %490 = vrot.lane.b32.xlu0 %v483, 32
    %v491 = vpop.permute.xlu0 %490
    %v492 = vsel %vm441, %v485, %v468
    %v493 = vsel %vm441, %v487, %v469
    %v494 = vsel %vm441, %v489, %v470
    %v495 = vsel %vm441, %v491, %v471
    %v496 = vsel %vm54, 1, 0
    %vm497 = vcmp.eq.s32.totalorder %v496, 1
    %v498 = vsel %vm497, %v397, 0.0
    %v499 = vsel %vm497, %v402, 0.0
    %v500 = vsel %vm497, %v407, 0.0
    %v501 = vsel %vm497, %v412, 0.0
    %502 = vrot.lane.b32.xlu0 %v498, 32
    %v503 = vpop.permute.xlu0 %502
    %v504 = vsel %vm441, %v503, %v498
    %505 = vrot.lane.b32.xlu0 %v499, 32
    %v506 = vpop.permute.xlu0 %505
    %v507 = vsel %vm441, %v506, %v499
    %508 = vrot.lane.b32.xlu0 %v500, 32
    %v509 = vpop.permute.xlu0 %508
    %v510 = vsel %vm441, %v509, %v500
    %511 = vrot.lane.b32.xlu0 %v501, 32
    %v512 = vpop.permute.xlu0 %511
    %v513 = vsel %vm441, %v512, %v501
    %514 = vrot.lane.b32.xlu0 %v504, 32
    %v515 = vpop.permute.xlu0 %514
    %516 = vrot.lane.b32.xlu0 %v507, 32
    %v517 = vpop.permute.xlu0 %516
    %518 = vrot.lane.b32.xlu0 %v510, 32
    %v519 = vpop.permute.xlu0 %518
    %520 = vrot.lane.b32.xlu0 %v513, 32
    %v521 = vpop.permute.xlu0 %520
    %v522 = vsel %vm441, %v515, %v498
    %v523 = vsel %vm441, %v517, %v499
    %v524 = vsel %vm441, %v519, %v500
    %v525 = vsel %vm441, %v521, %v501
    %v526 = vsel %vm57, 1, 0
    %vm527 = vcmp.eq.s32.totalorder %v526, 1
    %v528 = vsel %vm527, %v417, 0.0
    %v529 = vsel %vm527, %v422, 0.0
    %v530 = vsel %vm527, %v427, 0.0
    %v531 = vsel %vm527, %v432, 0.0
    %532 = vrot.lane.b32.xlu0 %v528, 32
    %v533 = vpop.permute.xlu0 %532
    %v534 = vsel %vm441, %v533, %v528
    %535 = vrot.lane.b32.xlu0 %v529, 32
    %v536 = vpop.permute.xlu0 %535
    %v537 = vsel %vm441, %v536, %v529
    %538 = vrot.lane.b32.xlu0 %v530, 32
    %v539 = vpop.permute.xlu0 %538
    %v540 = vsel %vm441, %v539, %v530
    %541 = vrot.lane.b32.xlu0 %v531, 32
    %v542 = vpop.permute.xlu0 %541
    %v543 = vsel %vm441, %v542, %v531
    %544 = vrot.lane.b32.xlu0 %v534, 32
    %v545 = vpop.permute.xlu0 %544
    %546 = vrot.lane.b32.xlu0 %v537, 32
    %v547 = vpop.permute.xlu0 %546
    %548 = vrot.lane.b32.xlu0 %v540, 32
    %v549 = vpop.permute.xlu0 %548
    %550 = vrot.lane.b32.xlu0 %v543, 32
    %v551 = vpop.permute.xlu0 %550
    %v552 = vsel %vm441, %v545, %v528
    %v553 = vsel %vm441, %v547, %v529
    %v554 = vsel %vm441, %v549, %v530
    %v555 = vsel %vm441, %v551, %v531
    %560 = vrot.lane.b32.xlu0 %v492, 127
    %v561 = vpop.permute.xlu0 %560
    %562 = vrot.lane.b32.xlu0 %v493, 127
    %v563 = vpop.permute.xlu0 %562
    %564 = vrot.lane.b32.xlu0 %v494, 127
    %v565 = vpop.permute.xlu0 %564
    %566 = vrot.lane.b32.xlu0 %v495, 127
    %v567 = vpop.permute.xlu0 %566
    %v572 = vadd.f32 %v462, %v561
    %v573 = vadd.f32 %v463, %v563
    %v574 = vadd.f32 %v464, %v565
    %v575 = vadd.f32 %v465, %v567
    %580 = vrot.lane.b32.xlu0 %v522, 127
    %v581 = vpop.permute.xlu0 %580
    %582 = vrot.lane.b32.xlu0 %v523, 127
    %v583 = vpop.permute.xlu0 %582
    %584 = vrot.lane.b32.xlu0 %v524, 127
    %v585 = vpop.permute.xlu0 %584
    %586 = vrot.lane.b32.xlu0 %v525, 127
    %v587 = vpop.permute.xlu0 %586
    %v592 = vadd.f32 %v377, %v581
    %v593 = vadd.f32 %v382, %v583
    %v594 = vadd.f32 %v387, %v585
    %v595 = vadd.f32 %v392, %v587
    %600 = vrot.lane.b32.xlu0 %v592, 30
    %v601 = vpop.permute.xlu0 %600
    %602 = vrot.lane.b32.xlu0 %v593, 30
    %v603 = vpop.permute.xlu0 %602
    %604 = vrot.lane.b32.xlu0 %v594, 30
    %v605 = vpop.permute.xlu0 %604
    %606 = vrot.lane.b32.xlu0 %v595, 30
    %v607 = vpop.permute.xlu0 %606
    %v612 = vadd.f32 %v572, %v601
    %v613 = vadd.f32 %v573, %v603
    %v614 = vadd.f32 %v574, %v605
    %v615 = vadd.f32 %v575, %v607
    %620 = vrot.lane.b32.xlu0 %v552, 28
    %v621 = vpop.permute.xlu0 %620
    %622 = vrot.lane.b32.xlu0 %v553, 28
    %v623 = vpop.permute.xlu0 %622
    %624 = vrot.lane.b32.xlu0 %v554, 28
    %v625 = vpop.permute.xlu0 %624
    %626 = vrot.lane.b32.xlu0 %v555, 28
    %v627 = vpop.permute.xlu0 %626
    %v632 = vadd.f32 %v612, %v621
    %v633 = vadd.f32 %v613, %v623
    %v634 = vadd.f32 %v614, %v625
    %v635 = vadd.f32 %v615, %v627
    %v636 = vld [vmem:[%s4] sm:$0xff]
    %v637 = vld [vmem:[%s4 + $0x8] sm:$0xff]
    %v638 = vld [vmem:[%s4 + $0x10] sm:$0xff]
    %v639 = vld [vmem:[%s4 + $0x18] sm:$0xff]
    %641 = vset.pattern.permute.xlu0 0
    %642 = vperm.xlu0 %641, %v636
    %v643 = vpop.permute.xlu0 %642
    %646 = vset.pattern.permute.xlu0 0
    %647 = vperm.xlu0 %646, %v637
    %v648 = vpop.permute.xlu0 %647
    %651 = vset.pattern.permute.xlu0 0
    %652 = vperm.xlu0 %651, %v638
    %v653 = vpop.permute.xlu0 %652
    %656 = vset.pattern.permute.xlu0 0
    %657 = vperm.xlu0 %656, %v639
    %v658 = vpop.permute.xlu0 %657
    %v660 = vadd.f32 %v632, %v643
    %v661 = vadd.f32 %v633, %v648
    %v662 = vadd.f32 %v634, %v653
    %v663 = vadd.f32 %v635, %v658
    %v664 = vmax.f32 %v660, 0.0
    %v665 = vmax.f32 %v661, 0.0
    %v666 = vmax.f32 %v662, 0.0
    %v667 = vmax.f32 %v663, 0.0
    %s668 = scalar_lea.vmem %s3, 160
    %v669 = vld [vmem:[%s668] sm:$0xff]
    %v670 = vld [vmem:[%s668 + $0x8] sm:$0xff]
    %v671 = vld [vmem:[%s668 + $0x10] sm:$0xff]
    %v672 = vld [vmem:[%s668 + $0x18] sm:$0xff]
    %v673 = vld [vmem:[%s668 + $0x20] sm:$0xff]
    %v674 = vld [vmem:[%s668 + $0x28] sm:$0xff]
    %v675 = vld [vmem:[%s668 + $0x30] sm:$0xff]
    %v676 = vld [vmem:[%s668 + $0x38] sm:$0xff]
    %v677 = vld [vmem:[%s668 + $0x40] sm:$0xff]
    %v678 = vld [vmem:[%s668 + $0x48] sm:$0xff]
    %v679 = vld [vmem:[%s668 + $0x50] sm:$0xff]
    %v680 = vld [vmem:[%s668 + $0x58] sm:$0xff]
    %v681 = vld [vmem:[%s668 + $0x60] sm:$0xff]
    %v682 = vld [vmem:[%s668 + $0x68] sm:$0xff]
    %v683 = vld [vmem:[%s668 + $0x70] sm:$0xff]
    %v684 = vld [vmem:[%s668 + $0x78] sm:$0xff]
    %v685 = vld [vmem:[%s668 + $0x80] sm:$0xff]
    %v686 = vld [vmem:[%s668 + $0x88] sm:$0xff]
    %v687 = vld [vmem:[%s668 + $0x90] sm:$0xff]
    %v688 = vld [vmem:[%s668 + $0x98] sm:$0xff]
    %693 = vrot.lane.b32.xlu0 %v664, 98
    %v694 = vpop.permute.xlu0 %693
    %695 = vrot.lane.b32.xlu0 %v665, 98
    %v696 = vpop.permute.xlu0 %695
    %697 = vrot.lane.b32.xlu0 %v666, 98
    %v698 = vpop.permute.xlu0 %697
    %699 = vrot.lane.b32.xlu0 %v667, 98
    %v700 = vpop.permute.xlu0 %699
    %v706 = vsel %vm209, %v669, 0
    %v709 = vsel %vm209, %v670, 0
    %v712 = vsel %vm209, %v671, 0
    %v715 = vsel %vm209, %v672, 0
    %v718 = vsel %vm209, %v673, 0
    %v721 = vsel %vm209, %v674, 0
    %v724 = vsel %vm209, %v675, 0
    %v727 = vsel %vm209, %v676, 0
    %v730 = vsel %vm209, %v677, 0
    %v733 = vsel %vm209, %v678, 0
    %v736 = vsel %vm209, %v679, 0
    %v739 = vsel %vm209, %v680, 0
    %v742 = vsel %vm209, %v681, 0
    %v745 = vsel %vm209, %v682, 0
    %v748 = vsel %vm209, %v683, 0
    %v751 = vsel %vm209, %v684, 0
    %v754 = vsel %vm209, %v685, 0
    %v757 = vsel %vm209, %v686, 0
    %v760 = vsel %vm209, %v687, 0
    %v763 = vsel %vm209, %v688, 0
    %765 = vmatprep.subr.mxu0 0.0
    %766 = vmatpush1.msra.mxu0 %v694
    %767 = vmatprep.subr.mxu0 0.0
    %768 = vmatpush1.msra.mxu0 %v696
    %769 = vmatprep.subr.mxu0 0.0
    %770 = vmatpush1.msra.mxu0 %v698
    %771 = vmatprep.subr.mxu0 0.0
    %772 = vmatpush1.msra.mxu0 %v700
    %773 = vmatprep.subr.mxu0 0.0
    %774 = vmatpush1.msra.mxu0 0.0
    %775 = vmatprep.subr.mxu0 0.0
    %776 = vmatpush1.msra.mxu0 0.0
    %777 = vmatprep.subr.mxu0 0.0
    %778 = vmatpush1.msra.mxu0 0.0
    %779 = vmatprep.subr.mxu0 0.0
    %780 = vmatpush1.msra.mxu0 0.0
    %781 = vmatprep.subr.mxu0 0.0
    %782 = vmatpush1.msra.mxu0 0.0
    %783 = vmatprep.subr.mxu0 0.0
    %784 = vmatpush1.msra.mxu0 0.0
    %785 = vmatprep.subr.mxu0 0.0
    %786 = vmatpush1.msra.mxu0 0.0
    %787 = vmatprep.subr.mxu0 0.0
    %788 = vmatpush1.msra.mxu0 0.0
    %789 = vmatprep.subr.mxu0 0.0
    %790 = vmatpush1.msra.mxu0 0.0
    %791 = vmatprep.subr.mxu0 0.0
    %792 = vmatpush1.msra.mxu0 0.0
    %793 = vmatprep.subr.mxu0 0.0
    %794 = vmatpush1.msra.mxu0 0.0
    %795 = vmatprep.subr.mxu0 0.0
    %796 = vmatpush1.msra.mxu0 0.0
    %797 = vmatprep.subr.mxu0 0.0
    %798 = vmatpush1.msra.mxu0 0.0
    %799 = vmatprep.subr.mxu0 0.0
    %800 = vmatpush1.msra.mxu0 0.0
    %801 = vmatprep.subr.mxu0 0.0
    %802 = vmatpush1.msra.mxu0 0.0
    %803 = vmatprep.subr.mxu0 0.0
    %804 = vmatpush1.msra.mxu0 0.0
    %805 = vmatprep.subr.mxu0 0.0
    %806 = vmatpush1.msra.mxu0 0.0
    %807 = vmatprep.subr.mxu0 0.0
    %808 = vmatpush1.msra.mxu0 0.0
    %809 = vmatprep.subr.mxu0 0.0
    %810 = vmatpush1.msra.mxu0 0.0
    %811 = vmatprep.subr.mxu0 0.0
    %812 = vmatpush1.msra.mxu0 0.0
    %813 = vmatprep.subr.mxu0 0.0
    %814 = vmatpush1.msra.mxu0 0.0
    %815 = vmatprep.subr.mxu0 0.0
    %816 = vmatpush1.msra.mxu0 0.0
    %817 = vmatprep.subr.mxu0 0.0
    %818 = vmatpush1.msra.mxu0 0.0
    %819 = vmatprep.subr.mxu0 0.0
    %820 = vmatpush1.msra.mxu0 0.0
    %821 = vmatprep.subr.mxu0 0.0
    %822 = vmatpush1.msra.mxu0 0.0
    %823 = vmatprep.subr.mxu0 0.0
    %824 = vmatpush1.msra.mxu0 0.0
    %825 = vmatprep.subr.mxu0 0.0
    %826 = vmatpush1.msra.mxu0 0.0
    %827 = vmatprep.subr.mxu0 0.0
    %828 = vmatpush1.msra.mxu0 0.0
    %829 = vmatprep.mubr.f32.mxu0 0.0
    %830 = vmatmul.mubr.f32.gmra.mrb[0].mxu0 %v706
    %v831 = vpop.f32.mrb[0].mxu0
    %v832 = vadd.f32 0.0, %v831
    %v833 = vpop.f32.mrb[0].mxu0
    %834 = vmatprep.mubr.f32.mxu0 0.0
    %835 = vmatmul.mubr.f32.gmra.mrb[0].mxu0 %v709
    %v836 = vpop.f32.mrb[0].mxu0
    %v837 = vadd.f32 0.0, %v836
    %v838 = vpop.f32.mrb[0].mxu0
    %839 = vmatprep.mubr.f32.mxu0 0.0
    %840 = vmatmul.mubr.f32.gmra.mrb[0].mxu0 %v712
    %v841 = vpop.f32.mrb[0].mxu0
    %v842 = vadd.f32 0.0, %v841
    %v843 = vpop.f32.mrb[0].mxu0
    %844 = vmatprep.mubr.f32.mxu0 0.0
    %845 = vmatmul.mubr.f32.gmra.mrb[0].mxu0 %v715
    %v846 = vpop.f32.mrb[0].mxu0
    %v847 = vadd.f32 0.0, %v846
    %v848 = vpop.f32.mrb[0].mxu0
    %849 = vmatprep.mubr.f32.mxu0 0.0
    %850 = vmatmul.mubr.f32.gmra.mrb[0].mxu0 %v718
    %v851 = vpop.f32.mrb[0].mxu0
    %v852 = vadd.f32 0.0, %v851
    %v853 = vpop.f32.mrb[0].mxu0
    %854 = vmatprep.mubr.f32.mxu0 0.0
    %855 = vmatmul.mubr.f32.gmra.mrb[0].mxu0 %v721
    %v856 = vpop.f32.mrb[0].mxu0
    %v857 = vadd.f32 0.0, %v856
    %v858 = vpop.f32.mrb[0].mxu0
    %859 = vmatprep.mubr.f32.mxu0 0.0
    %860 = vmatmul.mubr.f32.gmra.mrb[0].mxu0 %v724
    %v861 = vpop.f32.mrb[0].mxu0
    %v862 = vadd.f32 0.0, %v861
    %v863 = vpop.f32.mrb[0].mxu0
    %864 = vmatprep.mubr.f32.mxu0 0.0
    %865 = vmatmul.mubr.f32.gmra.mrb[0].mxu0 %v727
    %v866 = vpop.f32.mrb[0].mxu0
    %v867 = vadd.f32 0.0, %v866
    %v868 = vpop.f32.mrb[0].mxu0
    %869 = vmatprep.mubr.f32.mxu0 0.0
    %870 = vmatmul.mubr.f32.gmra.mrb[0].mxu0 %v730
    %v871 = vpop.f32.mrb[0].mxu0
    %v872 = vadd.f32 0.0, %v871
    %v873 = vpop.f32.mrb[0].mxu0
    %874 = vmatprep.mubr.f32.mxu0 0.0
    %875 = vmatmul.mubr.f32.gmra.mrb[0].mxu0 %v733
    %v876 = vpop.f32.mrb[0].mxu0
    %v877 = vadd.f32 0.0, %v876
    %v878 = vpop.f32.mrb[0].mxu0
    %879 = vmatprep.mubr.f32.mxu0 0.0
    %880 = vmatmul.mubr.f32.gmra.mrb[0].mxu0 %v736
    %v881 = vpop.f32.mrb[0].mxu0
    %v882 = vadd.f32 0.0, %v881
    %v883 = vpop.f32.mrb[0].mxu0
    %884 = vmatprep.mubr.f32.mxu0 0.0
    %885 = vmatmul.mubr.f32.gmra.mrb[0].mxu0 %v739
    %v886 = vpop.f32.mrb[0].mxu0
    %v887 = vadd.f32 0.0, %v886
    %v888 = vpop.f32.mrb[0].mxu0
    %889 = vmatprep.mubr.f32.mxu0 0.0
    %890 = vmatmul.mubr.f32.gmra.mrb[0].mxu0 %v742
    %v891 = vpop.f32.mrb[0].mxu0
    %v892 = vadd.f32 0.0, %v891
    %v893 = vpop.f32.mrb[0].mxu0
    %894 = vmatprep.mubr.f32.mxu0 0.0
    %895 = vmatmul.mubr.f32.gmra.mrb[0].mxu0 %v745
    %v896 = vpop.f32.mrb[0].mxu0
    %v897 = vadd.f32 0.0, %v896
    %v898 = vpop.f32.mrb[0].mxu0
    %899 = vmatprep.mubr.f32.mxu0 0.0
    %900 = vmatmul.mubr.f32.gmra.mrb[0].mxu0 %v748
    %v901 = vpop.f32.mrb[0].mxu0
    %v902 = vadd.f32 0.0, %v901
    %v903 = vpop.f32.mrb[0].mxu0
    %904 = vmatprep.mubr.f32.mxu0 0.0
    %905 = vmatmul.mubr.f32.gmra.mrb[0].mxu0 %v751
    %v906 = vpop.f32.mrb[0].mxu0
    %v907 = vadd.f32 0.0, %v906
    %v908 = vpop.f32.mrb[0].mxu0
    %909 = vmatprep.mubr.f32.mxu0 0.0
    %910 = vmatmul.mubr.f32.gmra.mrb[0].mxu0 %v754
    %v911 = vpop.f32.mrb[0].mxu0
    %v912 = vadd.f32 0.0, %v911
    %v913 = vpop.f32.mrb[0].mxu0
    %914 = vmatprep.mubr.f32.mxu0 0.0
    %915 = vmatmul.mubr.f32.gmra.mrb[0].mxu0 %v757
    %v916 = vpop.f32.mrb[0].mxu0
    %v917 = vadd.f32 0.0, %v916
    %v918 = vpop.f32.mrb[0].mxu0
    %919 = vmatprep.mubr.f32.mxu0 0.0
    %920 = vmatmul.mubr.f32.gmra.mrb[0].mxu0 %v760
    %v921 = vpop.f32.mrb[0].mxu0
    %v922 = vadd.f32 0.0, %v921
    %v923 = vpop.f32.mrb[0].mxu0
    %924 = vmatprep.mubr.f32.mxu0 0.0
    %925 = vmatmul.mubr.f32.gmra.mrb[0].mxu0 %v763
    %v926 = vpop.f32.mrb[0].mxu0
    %v927 = vadd.f32 0.0, %v926
    %v928 = vpop.f32.mrb[0].mxu0
    %929 = vdwg.mxu0
    %v930 = vsel %vm436, %v832, 0.0
    %v931 = vsel %vm436, %v837, 0.0
    %v932 = vsel %vm436, %v842, 0.0
    %v933 = vsel %vm436, %v847, 0.0
    %934 = vrot.lane.b32.xlu0 %v930, 32
    %v935 = vpop.permute.xlu0 %934
    %v936 = vsel %vm441, %v935, %v930
    %937 = vrot.lane.b32.xlu0 %v931, 32
    %v938 = vpop.permute.xlu0 %937
    %v939 = vsel %vm441, %v938, %v931
    %940 = vrot.lane.b32.xlu0 %v932, 32
    %v941 = vpop.permute.xlu0 %940
    %v942 = vsel %vm441, %v941, %v932
    %943 = vrot.lane.b32.xlu0 %v933, 32
    %v944 = vpop.permute.xlu0 %943
    %v945 = vsel %vm441, %v944, %v933
    %946 = vrot.lane.b32.xlu0 %v936, 32
    %v947 = vpop.permute.xlu0 %946
    %948 = vrot.lane.b32.xlu0 %v939, 32
    %v949 = vpop.permute.xlu0 %948
    %950 = vrot.lane.b32.xlu0 %v942, 32
    %v951 = vpop.permute.xlu0 %950
    %952 = vrot.lane.b32.xlu0 %v945, 32
    %v953 = vpop.permute.xlu0 %952
    %v954 = vsel %vm441, %v947, %v930
    %v955 = vsel %vm441, %v949, %v931
    %v956 = vsel %vm441, %v951, %v932
    %v957 = vsel %vm441, %v953, %v933
    %v958 = vsel %vm467, %v852, 0.0
    %v959 = vsel %vm467, %v857, 0.0
    %v960 = vsel %vm467, %v862, 0.0
    %v961 = vsel %vm467, %v867, 0.0
    %962 = vrot.lane.b32.xlu0 %v958, 32
    %v963 = vpop.permute.xlu0 %962
    %v964 = vsel %vm441, %v963, %v958
    %965 = vrot.lane.b32.xlu0 %v959, 32
    %v966 = vpop.permute.xlu0 %965
    %v967 = vsel %vm441, %v966, %v959
    %968 = vrot.lane.b32.xlu0 %v960, 32
    %v969 = vpop.permute.xlu0 %968
    %v970 = vsel %vm441, %v969, %v960
    %971 = vrot.lane.b32.xlu0 %v961, 32
    %v972 = vpop.permute.xlu0 %971
    %v973 = vsel %vm441, %v972, %v961
    %974 = vrot.lane.b32.xlu0 %v964, 32
    %v975 = vpop.permute.xlu0 %974
    %976 = vrot.lane.b32.xlu0 %v967, 32
    %v977 = vpop.permute.xlu0 %976
    %978 = vrot.lane.b32.xlu0 %v970, 32
    %v979 = vpop.permute.xlu0 %978
    %980 = vrot.lane.b32.xlu0 %v973, 32
    %v981 = vpop.permute.xlu0 %980
    %v982 = vsel %vm441, %v975, %v958
    %v983 = vsel %vm441, %v977, %v959
    %v984 = vsel %vm441, %v979, %v960
    %v985 = vsel %vm441, %v981, %v961
    %v986 = vsel %vm497, %v892, 0.0
    %v987 = vsel %vm497, %v897, 0.0
    %v988 = vsel %vm497, %v902, 0.0
    %v989 = vsel %vm497, %v907, 0.0
    %990 = vrot.lane.b32.xlu0 %v986, 32
    %v991 = vpop.permute.xlu0 %990
    %v992 = vsel %vm441, %v991, %v986
    %993 = vrot.lane.b32.xlu0 %v987, 32
    %v994 = vpop.permute.xlu0 %993
    %v995 = vsel %vm441, %v994, %v987
    %996 = vrot.lane.b32.xlu0 %v988, 32
    %v997 = vpop.permute.xlu0 %996
    %v998 = vsel %vm441, %v997, %v988
    %999 = vrot.lane.b32.xlu0 %v989, 32
    %v1000 = vpop.permute.xlu0 %999
    %v1001 = vsel %vm441, %v1000, %v989
    %1002 = vrot.lane.b32.xlu0 %v992, 32
    %v1003 = vpop.permute.xlu0 %1002
    %1004 = vrot.lane.b32.xlu0 %v995, 32
    %v1005 = vpop.permute.xlu0 %1004
    %1006 = vrot.lane.b32.xlu0 %v998, 32
    %v1007 = vpop.permute.xlu0 %1006
    %1008 = vrot.lane.b32.xlu0 %v1001, 32
    %v1009 = vpop.permute.xlu0 %1008
    %v1010 = vsel %vm441, %v1003, %v986
    %v1011 = vsel %vm441, %v1005, %v987
    %v1012 = vsel %vm441, %v1007, %v988
    %v1013 = vsel %vm441, %v1009, %v989
    %v1014 = vsel %vm527, %v912, 0.0
    %v1015 = vsel %vm527, %v917, 0.0
    %v1016 = vsel %vm527, %v922, 0.0
    %v1017 = vsel %vm527, %v927, 0.0
    %1018 = vrot.lane.b32.xlu0 %v1014, 32
    %v1019 = vpop.permute.xlu0 %1018
    %v1020 = vsel %vm441, %v1019, %v1014
    %1021 = vrot.lane.b32.xlu0 %v1015, 32
    %v1022 = vpop.permute.xlu0 %1021
    %v1023 = vsel %vm441, %v1022, %v1015
    %1024 = vrot.lane.b32.xlu0 %v1016, 32
    %v1025 = vpop.permute.xlu0 %1024
    %v1026 = vsel %vm441, %v1025, %v1016
    %1027 = vrot.lane.b32.xlu0 %v1017, 32
    %v1028 = vpop.permute.xlu0 %1027
    %v1029 = vsel %vm441, %v1028, %v1017
    %1030 = vrot.lane.b32.xlu0 %v1020, 32
    %v1031 = vpop.permute.xlu0 %1030
    %1032 = vrot.lane.b32.xlu0 %v1023, 32
    %v1033 = vpop.permute.xlu0 %1032
    %1034 = vrot.lane.b32.xlu0 %v1026, 32
    %v1035 = vpop.permute.xlu0 %1034
    %1036 = vrot.lane.b32.xlu0 %v1029, 32
    %v1037 = vpop.permute.xlu0 %1036
    %v1038 = vsel %vm441, %v1031, %v1014
    %v1039 = vsel %vm441, %v1033, %v1015
    %v1040 = vsel %vm441, %v1035, %v1016
    %v1041 = vsel %vm441, %v1037, %v1017
    %1046 = vrot.lane.b32.xlu0 %v982, 127
    %v1047 = vpop.permute.xlu0 %1046
    %1048 = vrot.lane.b32.xlu0 %v983, 127
    %v1049 = vpop.permute.xlu0 %1048
    %1050 = vrot.lane.b32.xlu0 %v984, 127
    %v1051 = vpop.permute.xlu0 %1050
    %1052 = vrot.lane.b32.xlu0 %v985, 127
    %v1053 = vpop.permute.xlu0 %1052
    %v1058 = vadd.f32 %v954, %v1047
    %v1059 = vadd.f32 %v955, %v1049
    %v1060 = vadd.f32 %v956, %v1051
    %v1061 = vadd.f32 %v957, %v1053
    %1066 = vrot.lane.b32.xlu0 %v1010, 127
    %v1067 = vpop.permute.xlu0 %1066
    %1068 = vrot.lane.b32.xlu0 %v1011, 127
    %v1069 = vpop.permute.xlu0 %1068
    %1070 = vrot.lane.b32.xlu0 %v1012, 127
    %v1071 = vpop.permute.xlu0 %1070
    %1072 = vrot.lane.b32.xlu0 %v1013, 127
    %v1073 = vpop.permute.xlu0 %1072
    %v1078 = vadd.f32 %v872, %v1067
    %v1079 = vadd.f32 %v877, %v1069
    %v1080 = vadd.f32 %v882, %v1071
    %v1081 = vadd.f32 %v887, %v1073
    %1086 = vrot.lane.b32.xlu0 %v1078, 30
    %v1087 = vpop.permute.xlu0 %1086
    %1088 = vrot.lane.b32.xlu0 %v1079, 30
    %v1089 = vpop.permute.xlu0 %1088
    %1090 = vrot.lane.b32.xlu0 %v1080, 30
    %v1091 = vpop.permute.xlu0 %1090
    %1092 = vrot.lane.b32.xlu0 %v1081, 30
    %v1093 = vpop.permute.xlu0 %1092
    %v1098 = vadd.f32 %v1058, %v1087
    %v1099 = vadd.f32 %v1059, %v1089
    %v1100 = vadd.f32 %v1060, %v1091
    %v1101 = vadd.f32 %v1061, %v1093
    %1106 = vrot.lane.b32.xlu0 %v1038, 28
    %v1107 = vpop.permute.xlu0 %1106
    %1108 = vrot.lane.b32.xlu0 %v1039, 28
    %v1109 = vpop.permute.xlu0 %1108
    %1110 = vrot.lane.b32.xlu0 %v1040, 28
    %v1111 = vpop.permute.xlu0 %1110
    %1112 = vrot.lane.b32.xlu0 %v1041, 28
    %v1113 = vpop.permute.xlu0 %1112
    %v1118 = vadd.f32 %v1098, %v1107
    %v1119 = vadd.f32 %v1099, %v1109
    %v1120 = vadd.f32 %v1100, %v1111
    %v1121 = vadd.f32 %v1101, %v1113
    %s1122 = scalar_lea.vmem %s4, 32
    %v1123 = vld [vmem:[%s1122] sm:$0xff]
    %v1124 = vld [vmem:[%s1122 + $0x8] sm:$0xff]
    %v1125 = vld [vmem:[%s1122 + $0x10] sm:$0xff]
    %v1126 = vld [vmem:[%s1122 + $0x18] sm:$0xff]
    %1128 = vset.pattern.permute.xlu0 0
    %1129 = vperm.xlu0 %1128, %v1123
    %v1130 = vpop.permute.xlu0 %1129
    %1133 = vset.pattern.permute.xlu0 0
    %1134 = vperm.xlu0 %1133, %v1124
    %v1135 = vpop.permute.xlu0 %1134
    %1138 = vset.pattern.permute.xlu0 0
    %1139 = vperm.xlu0 %1138, %v1125
    %v1140 = vpop.permute.xlu0 %1139
    %1143 = vset.pattern.permute.xlu0 0
    %1144 = vperm.xlu0 %1143, %v1126
    %v1145 = vpop.permute.xlu0 %1144
    %v1147 = vadd.f32 %v1118, %v1130
    %v1148 = vadd.f32 %v1119, %v1135
    %v1149 = vadd.f32 %v1120, %v1140
    %v1150 = vadd.f32 %v1121, %v1145
    %v1151 = vmul.f32 %v1147, 0.3
    %v1152 = vmul.f32 %v1148, 0.3
    %v1153 = vmul.f32 %v1149, 0.3
    %v1154 = vmul.f32 %v1150, 0.3
    %1159 = vrot.lane.b32.xlu0 %v1151, 98
    %v1160 = vpop.permute.xlu0 %1159
    %1161 = vrot.lane.b32.xlu0 %v1152, 98
    %v1162 = vpop.permute.xlu0 %1161
    %1163 = vrot.lane.b32.xlu0 %v1153, 98
    %v1164 = vpop.permute.xlu0 %1163
    %1165 = vrot.lane.b32.xlu0 %v1154, 98
    %v1166 = vpop.permute.xlu0 %1165
    %v1171 = vadd.f32 %v167, %v1160
    %v1172 = vadd.f32 %v172, %v1162
    %v1173 = vadd.f32 %v177, %v1164
    %v1174 = vadd.f32 %v182, %v1166
    %v1175 = vmax.f32 %v1171, 0.0
    %v1176 = vmax.f32 %v1172, 0.0
    %v1177 = vmax.f32 %v1173, 0.0
    %v1178 = vmax.f32 %v1174, 0.0
    %s1179 = scalar_lea.vmem %s3, 320
    %v1180 = vld [vmem:[%s1179] sm:$0xff]
    %v1181 = vld [vmem:[%s1179 + $0x8] sm:$0xff]
    %v1182 = vld [vmem:[%s1179 + $0x10] sm:$0xff]
    %v1183 = vld [vmem:[%s1179 + $0x18] sm:$0xff]
    %v1184 = vld [vmem:[%s1179 + $0x20] sm:$0xff]
    %v1185 = vld [vmem:[%s1179 + $0x28] sm:$0xff]
    %v1186 = vld [vmem:[%s1179 + $0x30] sm:$0xff]
    %v1187 = vld [vmem:[%s1179 + $0x38] sm:$0xff]
    %v1188 = vld [vmem:[%s1179 + $0x40] sm:$0xff]
    %v1189 = vld [vmem:[%s1179 + $0x48] sm:$0xff]
    %v1190 = vld [vmem:[%s1179 + $0x50] sm:$0xff]
    %v1191 = vld [vmem:[%s1179 + $0x58] sm:$0xff]
    %v1192 = vld [vmem:[%s1179 + $0x60] sm:$0xff]
    %v1193 = vld [vmem:[%s1179 + $0x68] sm:$0xff]
    %v1194 = vld [vmem:[%s1179 + $0x70] sm:$0xff]
    %v1195 = vld [vmem:[%s1179 + $0x78] sm:$0xff]
    %v1196 = vld [vmem:[%s1179 + $0x80] sm:$0xff]
    %v1197 = vld [vmem:[%s1179 + $0x88] sm:$0xff]
    %v1198 = vld [vmem:[%s1179 + $0x90] sm:$0xff]
    %v1199 = vld [vmem:[%s1179 + $0x98] sm:$0xff]
    %v1201 = vsel %vm209, %v1180, 0
    %v1204 = vsel %vm209, %v1181, 0
    %v1207 = vsel %vm209, %v1182, 0
    %v1210 = vsel %vm209, %v1183, 0
    %v1213 = vsel %vm209, %v1184, 0
    %v1216 = vsel %vm209, %v1185, 0
    %v1219 = vsel %vm209, %v1186, 0
    %v1222 = vsel %vm209, %v1187, 0
    %v1225 = vsel %vm209, %v1188, 0
    %v1228 = vsel %vm209, %v1189, 0
    %v1231 = vsel %vm209, %v1190, 0
    %v1234 = vsel %vm209, %v1191, 0
    %v1237 = vsel %vm209, %v1192, 0
    %v1240 = vsel %vm209, %v1193, 0
    %v1243 = vsel %vm209, %v1194, 0
    %v1246 = vsel %vm209, %v1195, 0
    %v1249 = vsel %vm209, %v1196, 0
    %v1252 = vsel %vm209, %v1197, 0
    %v1255 = vsel %vm209, %v1198, 0
    %v1258 = vsel %vm209, %v1199, 0
    %1260 = vmatprep.subr.mxu0 0.0
    %1261 = vmatpush1.msra.mxu0 %v1175
    %1262 = vmatprep.subr.mxu0 0.0
    %1263 = vmatpush1.msra.mxu0 %v1176
    %1264 = vmatprep.subr.mxu0 0.0
    %1265 = vmatpush1.msra.mxu0 %v1177
    %1266 = vmatprep.subr.mxu0 0.0
    %1267 = vmatpush1.msra.mxu0 %v1178
    %1268 = vmatprep.subr.mxu0 0.0
    %1269 = vmatpush1.msra.mxu0 0.0
    %1270 = vmatprep.subr.mxu0 0.0
    %1271 = vmatpush1.msra.mxu0 0.0
    %1272 = vmatprep.subr.mxu0 0.0
    %1273 = vmatpush1.msra.mxu0 0.0
    %1274 = vmatprep.subr.mxu0 0.0
    %1275 = vmatpush1.msra.mxu0 0.0
    %1276 = vmatprep.subr.mxu0 0.0
    %1277 = vmatpush1.msra.mxu0 0.0
    %1278 = vmatprep.subr.mxu0 0.0
    %1279 = vmatpush1.msra.mxu0 0.0
    %1280 = vmatprep.subr.mxu0 0.0
    %1281 = vmatpush1.msra.mxu0 0.0
    %1282 = vmatprep.subr.mxu0 0.0
    %1283 = vmatpush1.msra.mxu0 0.0
    %1284 = vmatprep.subr.mxu0 0.0
    %1285 = vmatpush1.msra.mxu0 0.0
    %1286 = vmatprep.subr.mxu0 0.0
    %1287 = vmatpush1.msra.mxu0 0.0
    %1288 = vmatprep.subr.mxu0 0.0
    %1289 = vmatpush1.msra.mxu0 0.0
    %1290 = vmatprep.subr.mxu0 0.0
    %1291 = vmatpush1.msra.mxu0 0.0
    %1292 = vmatprep.subr.mxu0 0.0
    %1293 = vmatpush1.msra.mxu0 0.0
    %1294 = vmatprep.subr.mxu0 0.0
    %1295 = vmatpush1.msra.mxu0 0.0
    %1296 = vmatprep.subr.mxu0 0.0
    %1297 = vmatpush1.msra.mxu0 0.0
    %1298 = vmatprep.subr.mxu0 0.0
    %1299 = vmatpush1.msra.mxu0 0.0
    %1300 = vmatprep.subr.mxu0 0.0
    %1301 = vmatpush1.msra.mxu0 0.0
    %1302 = vmatprep.subr.mxu0 0.0
    %1303 = vmatpush1.msra.mxu0 0.0
    %1304 = vmatprep.subr.mxu0 0.0
    %1305 = vmatpush1.msra.mxu0 0.0
    %1306 = vmatprep.subr.mxu0 0.0
    %1307 = vmatpush1.msra.mxu0 0.0
    %1308 = vmatprep.subr.mxu0 0.0
    %1309 = vmatpush1.msra.mxu0 0.0
    %1310 = vmatprep.subr.mxu0 0.0
    %1311 = vmatpush1.msra.mxu0 0.0
    %1312 = vmatprep.subr.mxu0 0.0
    %1313 = vmatpush1.msra.mxu0 0.0
    %1314 = vmatprep.subr.mxu0 0.0
    %1315 = vmatpush1.msra.mxu0 0.0
    %1316 = vmatprep.subr.mxu0 0.0
    %1317 = vmatpush1.msra.mxu0 0.0
    %1318 = vmatprep.subr.mxu0 0.0
    %1319 = vmatpush1.msra.mxu0 0.0
    %1320 = vmatprep.subr.mxu0 0.0
    %1321 = vmatpush1.msra.mxu0 0.0
    %1322 = vmatprep.subr.mxu0 0.0
    %1323 = vmatpush1.msra.mxu0 0.0
    %1324 = vmatprep.mubr.f32.mxu0 0.0
    %1325 = vmatmul.mubr.f32.gmra.mrb[0].mxu0 %v1201
    %v1326 = vpop.f32.mrb[0].mxu0
    %v1327 = vadd.f32 0.0, %v1326
    %v1328 = vpop.f32.mrb[0].mxu0
    %1329 = vmatprep.mubr.f32.mxu0 0.0
    %1330 = vmatmul.mubr.f32.gmra.mrb[0].mxu0 %v1204
    %v1331 = vpop.f32.mrb[0].mxu0
    %v1332 = vadd.f32 0.0, %v1331
    %v1333 = vpop.f32.mrb[0].mxu0
    %1334 = vmatprep.mubr.f32.mxu0 0.0
    %1335 = vmatmul.mubr.f32.gmra.mrb[0].mxu0 %v1207
    %v1336 = vpop.f32.mrb[0].mxu0
    %v1337 = vadd.f32 0.0, %v1336
    %v1338 = vpop.f32.mrb[0].mxu0
    %1339 = vmatprep.mubr.f32.mxu0 0.0
    %1340 = vmatmul.mubr.f32.gmra.mrb[0].mxu0 %v1210
    %v1341 = vpop.f32.mrb[0].mxu0
    %v1342 = vadd.f32 0.0, %v1341
    %v1343 = vpop.f32.mrb[0].mxu0
    %1344 = vmatprep.mubr.f32.mxu0 0.0
    %1345 = vmatmul.mubr.f32.gmra.mrb[0].mxu0 %v1213
    %v1346 = vpop.f32.mrb[0].mxu0
    %v1347 = vadd.f32 0.0, %v1346
    %v1348 = vpop.f32.mrb[0].mxu0
    %1349 = vmatprep.mubr.f32.mxu0 0.0
    %1350 = vmatmul.mubr.f32.gmra.mrb[0].mxu0 %v1216
    %v1351 = vpop.f32.mrb[0].mxu0
    %v1352 = vadd.f32 0.0, %v1351
    %v1353 = vpop.f32.mrb[0].mxu0
    %1354 = vmatprep.mubr.f32.mxu0 0.0
    %1355 = vmatmul.mubr.f32.gmra.mrb[0].mxu0 %v1219
    %v1356 = vpop.f32.mrb[0].mxu0
    %v1357 = vadd.f32 0.0, %v1356
    %v1358 = vpop.f32.mrb[0].mxu0
    %1359 = vmatprep.mubr.f32.mxu0 0.0
    %1360 = vmatmul.mubr.f32.gmra.mrb[0].mxu0 %v1222
    %v1361 = vpop.f32.mrb[0].mxu0
    %v1362 = vadd.f32 0.0, %v1361
    %v1363 = vpop.f32.mrb[0].mxu0
    %1364 = vmatprep.mubr.f32.mxu0 0.0
    %1365 = vmatmul.mubr.f32.gmra.mrb[0].mxu0 %v1225
    %v1366 = vpop.f32.mrb[0].mxu0
    %v1367 = vadd.f32 0.0, %v1366
    %v1368 = vpop.f32.mrb[0].mxu0
    %1369 = vmatprep.mubr.f32.mxu0 0.0
    %1370 = vmatmul.mubr.f32.gmra.mrb[0].mxu0 %v1228
    %v1371 = vpop.f32.mrb[0].mxu0
    %v1372 = vadd.f32 0.0, %v1371
    %v1373 = vpop.f32.mrb[0].mxu0
    %1374 = vmatprep.mubr.f32.mxu0 0.0
    %1375 = vmatmul.mubr.f32.gmra.mrb[0].mxu0 %v1231
    %v1376 = vpop.f32.mrb[0].mxu0
    %v1377 = vadd.f32 0.0, %v1376
    %v1378 = vpop.f32.mrb[0].mxu0
    %1379 = vmatprep.mubr.f32.mxu0 0.0
    %1380 = vmatmul.mubr.f32.gmra.mrb[0].mxu0 %v1234
    %v1381 = vpop.f32.mrb[0].mxu0
    %v1382 = vadd.f32 0.0, %v1381
    %v1383 = vpop.f32.mrb[0].mxu0
    %1384 = vmatprep.mubr.f32.mxu0 0.0
    %1385 = vmatmul.mubr.f32.gmra.mrb[0].mxu0 %v1237
    %v1386 = vpop.f32.mrb[0].mxu0
    %v1387 = vadd.f32 0.0, %v1386
    %v1388 = vpop.f32.mrb[0].mxu0
    %1389 = vmatprep.mubr.f32.mxu0 0.0
    %1390 = vmatmul.mubr.f32.gmra.mrb[0].mxu0 %v1240
    %v1391 = vpop.f32.mrb[0].mxu0
    %v1392 = vadd.f32 0.0, %v1391
    %v1393 = vpop.f32.mrb[0].mxu0
    %1394 = vmatprep.mubr.f32.mxu0 0.0
    %1395 = vmatmul.mubr.f32.gmra.mrb[0].mxu0 %v1243
    %v1396 = vpop.f32.mrb[0].mxu0
    %v1397 = vadd.f32 0.0, %v1396
    %v1398 = vpop.f32.mrb[0].mxu0
    %1399 = vmatprep.mubr.f32.mxu0 0.0
    %1400 = vmatmul.mubr.f32.gmra.mrb[0].mxu0 %v1246
    %v1401 = vpop.f32.mrb[0].mxu0
    %v1402 = vadd.f32 0.0, %v1401
    %v1403 = vpop.f32.mrb[0].mxu0
    %1404 = vmatprep.mubr.f32.mxu0 0.0
    %1405 = vmatmul.mubr.f32.gmra.mrb[0].mxu0 %v1249
    %v1406 = vpop.f32.mrb[0].mxu0
    %v1407 = vadd.f32 0.0, %v1406
    %v1408 = vpop.f32.mrb[0].mxu0
    %1409 = vmatprep.mubr.f32.mxu0 0.0
    %1410 = vmatmul.mubr.f32.gmra.mrb[0].mxu0 %v1252
    %v1411 = vpop.f32.mrb[0].mxu0
    %v1412 = vadd.f32 0.0, %v1411
    %v1413 = vpop.f32.mrb[0].mxu0
    %1414 = vmatprep.mubr.f32.mxu0 0.0
    %1415 = vmatmul.mubr.f32.gmra.mrb[0].mxu0 %v1255
    %v1416 = vpop.f32.mrb[0].mxu0
    %v1417 = vadd.f32 0.0, %v1416
    %v1418 = vpop.f32.mrb[0].mxu0
    %1419 = vmatprep.mubr.f32.mxu0 0.0
    %1420 = vmatmul.mubr.f32.gmra.mrb[0].mxu0 %v1258
    %v1421 = vpop.f32.mrb[0].mxu0
    %v1422 = vadd.f32 0.0, %v1421
    %v1423 = vpop.f32.mrb[0].mxu0
    %1424 = vdwg.mxu0
    %v1425 = vsel %vm436, %v1327, 0.0
    %v1426 = vsel %vm436, %v1332, 0.0
    %v1427 = vsel %vm436, %v1337, 0.0
    %v1428 = vsel %vm436, %v1342, 0.0
    %1429 = vrot.lane.b32.xlu0 %v1425, 32
    %v1430 = vpop.permute.xlu0 %1429
    %v1431 = vsel %vm441, %v1430, %v1425
    %1432 = vrot.lane.b32.xlu0 %v1426, 32
    %v1433 = vpop.permute.xlu0 %1432
    %v1434 = vsel %vm441, %v1433, %v1426
    %1435 = vrot.lane.b32.xlu0 %v1427, 32
    %v1436 = vpop.permute.xlu0 %1435
    %v1437 = vsel %vm441, %v1436, %v1427
    %1438 = vrot.lane.b32.xlu0 %v1428, 32
    %v1439 = vpop.permute.xlu0 %1438
    %v1440 = vsel %vm441, %v1439, %v1428
    %1441 = vrot.lane.b32.xlu0 %v1431, 32
    %v1442 = vpop.permute.xlu0 %1441
    %1443 = vrot.lane.b32.xlu0 %v1434, 32
    %v1444 = vpop.permute.xlu0 %1443
    %1445 = vrot.lane.b32.xlu0 %v1437, 32
    %v1446 = vpop.permute.xlu0 %1445
    %1447 = vrot.lane.b32.xlu0 %v1440, 32
    %v1448 = vpop.permute.xlu0 %1447
    %v1449 = vsel %vm441, %v1442, %v1425
    %v1450 = vsel %vm441, %v1444, %v1426
    %v1451 = vsel %vm441, %v1446, %v1427
    %v1452 = vsel %vm441, %v1448, %v1428
    %v1453 = vsel %vm467, %v1347, 0.0
    %v1454 = vsel %vm467, %v1352, 0.0
    %v1455 = vsel %vm467, %v1357, 0.0
    %v1456 = vsel %vm467, %v1362, 0.0
    %1457 = vrot.lane.b32.xlu0 %v1453, 32
    %v1458 = vpop.permute.xlu0 %1457
    %v1459 = vsel %vm441, %v1458, %v1453
    %1460 = vrot.lane.b32.xlu0 %v1454, 32
    %v1461 = vpop.permute.xlu0 %1460
    %v1462 = vsel %vm441, %v1461, %v1454
    %1463 = vrot.lane.b32.xlu0 %v1455, 32
    %v1464 = vpop.permute.xlu0 %1463
    %v1465 = vsel %vm441, %v1464, %v1455
    %1466 = vrot.lane.b32.xlu0 %v1456, 32
    %v1467 = vpop.permute.xlu0 %1466
    %v1468 = vsel %vm441, %v1467, %v1456
    %1469 = vrot.lane.b32.xlu0 %v1459, 32
    %v1470 = vpop.permute.xlu0 %1469
    %1471 = vrot.lane.b32.xlu0 %v1462, 32
    %v1472 = vpop.permute.xlu0 %1471
    %1473 = vrot.lane.b32.xlu0 %v1465, 32
    %v1474 = vpop.permute.xlu0 %1473
    %1475 = vrot.lane.b32.xlu0 %v1468, 32
    %v1476 = vpop.permute.xlu0 %1475
    %v1477 = vsel %vm441, %v1470, %v1453
    %v1478 = vsel %vm441, %v1472, %v1454
    %v1479 = vsel %vm441, %v1474, %v1455
    %v1480 = vsel %vm441, %v1476, %v1456
    %v1481 = vsel %vm497, %v1387, 0.0
    %v1482 = vsel %vm497, %v1392, 0.0
    %v1483 = vsel %vm497, %v1397, 0.0
    %v1484 = vsel %vm497, %v1402, 0.0
    %1485 = vrot.lane.b32.xlu0 %v1481, 32
    %v1486 = vpop.permute.xlu0 %1485
    %v1487 = vsel %vm441, %v1486, %v1481
    %1488 = vrot.lane.b32.xlu0 %v1482, 32
    %v1489 = vpop.permute.xlu0 %1488
    %v1490 = vsel %vm441, %v1489, %v1482
    %1491 = vrot.lane.b32.xlu0 %v1483, 32
    %v1492 = vpop.permute.xlu0 %1491
    %v1493 = vsel %vm441, %v1492, %v1483
    %1494 = vrot.lane.b32.xlu0 %v1484, 32
    %v1495 = vpop.permute.xlu0 %1494
    %v1496 = vsel %vm441, %v1495, %v1484
    %1497 = vrot.lane.b32.xlu0 %v1487, 32
    %v1498 = vpop.permute.xlu0 %1497
    %1499 = vrot.lane.b32.xlu0 %v1490, 32
    %v1500 = vpop.permute.xlu0 %1499
    %1501 = vrot.lane.b32.xlu0 %v1493, 32
    %v1502 = vpop.permute.xlu0 %1501
    %1503 = vrot.lane.b32.xlu0 %v1496, 32
    %v1504 = vpop.permute.xlu0 %1503
    %v1505 = vsel %vm441, %v1498, %v1481
    %v1506 = vsel %vm441, %v1500, %v1482
    %v1507 = vsel %vm441, %v1502, %v1483
    %v1508 = vsel %vm441, %v1504, %v1484
    %v1509 = vsel %vm527, %v1407, 0.0
    %v1510 = vsel %vm527, %v1412, 0.0
    %v1511 = vsel %vm527, %v1417, 0.0
    %v1512 = vsel %vm527, %v1422, 0.0
    %1513 = vrot.lane.b32.xlu0 %v1509, 32
    %v1514 = vpop.permute.xlu0 %1513
    %v1515 = vsel %vm441, %v1514, %v1509
    %1516 = vrot.lane.b32.xlu0 %v1510, 32
    %v1517 = vpop.permute.xlu0 %1516
    %v1518 = vsel %vm441, %v1517, %v1510
    %1519 = vrot.lane.b32.xlu0 %v1511, 32
    %v1520 = vpop.permute.xlu0 %1519
    %v1521 = vsel %vm441, %v1520, %v1511
    %1522 = vrot.lane.b32.xlu0 %v1512, 32
    %v1523 = vpop.permute.xlu0 %1522
    %v1524 = vsel %vm441, %v1523, %v1512
    %1525 = vrot.lane.b32.xlu0 %v1515, 32
    %v1526 = vpop.permute.xlu0 %1525
    %1527 = vrot.lane.b32.xlu0 %v1518, 32
    %v1528 = vpop.permute.xlu0 %1527
    %1529 = vrot.lane.b32.xlu0 %v1521, 32
    %v1530 = vpop.permute.xlu0 %1529
    %1531 = vrot.lane.b32.xlu0 %v1524, 32
    %v1532 = vpop.permute.xlu0 %1531
    %v1533 = vsel %vm441, %v1526, %v1509
    %v1534 = vsel %vm441, %v1528, %v1510
    %v1535 = vsel %vm441, %v1530, %v1511
    %v1536 = vsel %vm441, %v1532, %v1512
    %1541 = vrot.lane.b32.xlu0 %v1477, 127
    %v1542 = vpop.permute.xlu0 %1541
    %1543 = vrot.lane.b32.xlu0 %v1478, 127
    %v1544 = vpop.permute.xlu0 %1543
    %1545 = vrot.lane.b32.xlu0 %v1479, 127
    %v1546 = vpop.permute.xlu0 %1545
    %1547 = vrot.lane.b32.xlu0 %v1480, 127
    %v1548 = vpop.permute.xlu0 %1547
    %v1553 = vadd.f32 %v1449, %v1542
    %v1554 = vadd.f32 %v1450, %v1544
    %v1555 = vadd.f32 %v1451, %v1546
    %v1556 = vadd.f32 %v1452, %v1548
    %1561 = vrot.lane.b32.xlu0 %v1505, 127
    %v1562 = vpop.permute.xlu0 %1561
    %1563 = vrot.lane.b32.xlu0 %v1506, 127
    %v1564 = vpop.permute.xlu0 %1563
    %1565 = vrot.lane.b32.xlu0 %v1507, 127
    %v1566 = vpop.permute.xlu0 %1565
    %1567 = vrot.lane.b32.xlu0 %v1508, 127
    %v1568 = vpop.permute.xlu0 %1567
    %v1573 = vadd.f32 %v1367, %v1562
    %v1574 = vadd.f32 %v1372, %v1564
    %v1575 = vadd.f32 %v1377, %v1566
    %v1576 = vadd.f32 %v1382, %v1568
    %1581 = vrot.lane.b32.xlu0 %v1573, 30
    %v1582 = vpop.permute.xlu0 %1581
    %1583 = vrot.lane.b32.xlu0 %v1574, 30
    %v1584 = vpop.permute.xlu0 %1583
    %1585 = vrot.lane.b32.xlu0 %v1575, 30
    %v1586 = vpop.permute.xlu0 %1585
    %1587 = vrot.lane.b32.xlu0 %v1576, 30
    %v1588 = vpop.permute.xlu0 %1587
    %v1593 = vadd.f32 %v1553, %v1582
    %v1594 = vadd.f32 %v1554, %v1584
    %v1595 = vadd.f32 %v1555, %v1586
    %v1596 = vadd.f32 %v1556, %v1588
    %1601 = vrot.lane.b32.xlu0 %v1533, 28
    %v1602 = vpop.permute.xlu0 %1601
    %1603 = vrot.lane.b32.xlu0 %v1534, 28
    %v1604 = vpop.permute.xlu0 %1603
    %1605 = vrot.lane.b32.xlu0 %v1535, 28
    %v1606 = vpop.permute.xlu0 %1605
    %1607 = vrot.lane.b32.xlu0 %v1536, 28
    %v1608 = vpop.permute.xlu0 %1607
    %v1613 = vadd.f32 %v1593, %v1602
    %v1614 = vadd.f32 %v1594, %v1604
    %v1615 = vadd.f32 %v1595, %v1606
    %v1616 = vadd.f32 %v1596, %v1608
    %s1617 = scalar_lea.vmem %s4, 64
    %v1618 = vld [vmem:[%s1617] sm:$0xff]
    %v1619 = vld [vmem:[%s1617 + $0x8] sm:$0xff]
    %v1620 = vld [vmem:[%s1617 + $0x10] sm:$0xff]
    %v1621 = vld [vmem:[%s1617 + $0x18] sm:$0xff]
    %1623 = vset.pattern.permute.xlu0 0
    %1624 = vperm.xlu0 %1623, %v1618
    %v1625 = vpop.permute.xlu0 %1624
    %1628 = vset.pattern.permute.xlu0 0
    %1629 = vperm.xlu0 %1628, %v1619
    %v1630 = vpop.permute.xlu0 %1629
    %1633 = vset.pattern.permute.xlu0 0
    %1634 = vperm.xlu0 %1633, %v1620
    %v1635 = vpop.permute.xlu0 %1634
    %1638 = vset.pattern.permute.xlu0 0
    %1639 = vperm.xlu0 %1638, %v1621
    %v1640 = vpop.permute.xlu0 %1639
    %v1642 = vadd.f32 %v1613, %v1625
    %v1643 = vadd.f32 %v1614, %v1630
    %v1644 = vadd.f32 %v1615, %v1635
    %v1645 = vadd.f32 %v1616, %v1640
    %v1646 = vmax.f32 %v1642, 0.0
    %v1647 = vmax.f32 %v1643, 0.0
    %v1648 = vmax.f32 %v1644, 0.0
    %v1649 = vmax.f32 %v1645, 0.0
    %s1650 = scalar_lea.vmem %s3, 480
    %v1651 = vld [vmem:[%s1650] sm:$0xff]
    %v1652 = vld [vmem:[%s1650 + $0x8] sm:$0xff]
    %v1653 = vld [vmem:[%s1650 + $0x10] sm:$0xff]
    %v1654 = vld [vmem:[%s1650 + $0x18] sm:$0xff]
    %v1655 = vld [vmem:[%s1650 + $0x20] sm:$0xff]
    %v1656 = vld [vmem:[%s1650 + $0x28] sm:$0xff]
    %v1657 = vld [vmem:[%s1650 + $0x30] sm:$0xff]
    %v1658 = vld [vmem:[%s1650 + $0x38] sm:$0xff]
    %v1659 = vld [vmem:[%s1650 + $0x40] sm:$0xff]
    %v1660 = vld [vmem:[%s1650 + $0x48] sm:$0xff]
    %v1661 = vld [vmem:[%s1650 + $0x50] sm:$0xff]
    %v1662 = vld [vmem:[%s1650 + $0x58] sm:$0xff]
    %v1663 = vld [vmem:[%s1650 + $0x60] sm:$0xff]
    %v1664 = vld [vmem:[%s1650 + $0x68] sm:$0xff]
    %v1665 = vld [vmem:[%s1650 + $0x70] sm:$0xff]
    %v1666 = vld [vmem:[%s1650 + $0x78] sm:$0xff]
    %v1667 = vld [vmem:[%s1650 + $0x80] sm:$0xff]
    %v1668 = vld [vmem:[%s1650 + $0x88] sm:$0xff]
    %v1669 = vld [vmem:[%s1650 + $0x90] sm:$0xff]
    %v1670 = vld [vmem:[%s1650 + $0x98] sm:$0xff]
    %1675 = vrot.lane.b32.xlu0 %v1646, 98
    %v1676 = vpop.permute.xlu0 %1675
    %1677 = vrot.lane.b32.xlu0 %v1647, 98
    %v1678 = vpop.permute.xlu0 %1677
    %1679 = vrot.lane.b32.xlu0 %v1648, 98
    %v1680 = vpop.permute.xlu0 %1679
    %1681 = vrot.lane.b32.xlu0 %v1649, 98
    %v1682 = vpop.permute.xlu0 %1681
    %v1688 = vsel %vm209, %v1651, 0
    %v1691 = vsel %vm209, %v1652, 0
    %v1694 = vsel %vm209, %v1653, 0
    %v1697 = vsel %vm209, %v1654, 0
    %v1700 = vsel %vm209, %v1655, 0
    %v1703 = vsel %vm209, %v1656, 0
    %v1706 = vsel %vm209, %v1657, 0
    %v1709 = vsel %vm209, %v1658, 0
    %v1712 = vsel %vm209, %v1659, 0
    %v1715 = vsel %vm209, %v1660, 0
    %v1718 = vsel %vm209, %v1661, 0
    %v1721 = vsel %vm209, %v1662, 0
    %v1724 = vsel %vm209, %v1663, 0
    %v1727 = vsel %vm209, %v1664, 0
    %v1730 = vsel %vm209, %v1665, 0
    %v1733 = vsel %vm209, %v1666, 0
    %v1736 = vsel %vm209, %v1667, 0
    %v1739 = vsel %vm209, %v1668, 0
    %v1742 = vsel %vm209, %v1669, 0
    %v1745 = vsel %vm209, %v1670, 0
    %1747 = vmatprep.subr.mxu0 0.0
    %1748 = vmatpush1.msra.mxu0 %v1676
    %1749 = vmatprep.subr.mxu0 0.0
    %1750 = vmatpush1.msra.mxu0 %v1678
    %1751 = vmatprep.subr.mxu0 0.0
    %1752 = vmatpush1.msra.mxu0 %v1680
    %1753 = vmatprep.subr.mxu0 0.0
    %1754 = vmatpush1.msra.mxu0 %v1682
    %1755 = vmatprep.subr.mxu0 0.0
    %1756 = vmatpush1.msra.mxu0 0.0
    %1757 = vmatprep.subr.mxu0 0.0
    %1758 = vmatpush1.msra.mxu0 0.0
    %1759 = vmatprep.subr.mxu0 0.0
    %1760 = vmatpush1.msra.mxu0 0.0
    %1761 = vmatprep.subr.mxu0 0.0
    %1762 = vmatpush1.msra.mxu0 0.0
    %1763 = vmatprep.subr.mxu0 0.0
    %1764 = vmatpush1.msra.mxu0 0.0
    %1765 = vmatprep.subr.mxu0 0.0
    %1766 = vmatpush1.msra.mxu0 0.0
    %1767 = vmatprep.subr.mxu0 0.0
    %1768 = vmatpush1.msra.mxu0 0.0
    %1769 = vmatprep.subr.mxu0 0.0
    %1770 = vmatpush1.msra.mxu0 0.0
    %1771 = vmatprep.subr.mxu0 0.0
    %1772 = vmatpush1.msra.mxu0 0.0
    %1773 = vmatprep.subr.mxu0 0.0
    %1774 = vmatpush1.msra.mxu0 0.0
    %1775 = vmatprep.subr.mxu0 0.0
    %1776 = vmatpush1.msra.mxu0 0.0
    %1777 = vmatprep.subr.mxu0 0.0
    %1778 = vmatpush1.msra.mxu0 0.0
    %1779 = vmatprep.subr.mxu0 0.0
    %1780 = vmatpush1.msra.mxu0 0.0
    %1781 = vmatprep.subr.mxu0 0.0
    %1782 = vmatpush1.msra.mxu0 0.0
    %1783 = vmatprep.subr.mxu0 0.0
    %1784 = vmatpush1.msra.mxu0 0.0
    %1785 = vmatprep.subr.mxu0 0.0
    %1786 = vmatpush1.msra.mxu0 0.0
    %1787 = vmatprep.subr.mxu0 0.0
    %1788 = vmatpush1.msra.mxu0 0.0
    %1789 = vmatprep.subr.mxu0 0.0
    %1790 = vmatpush1.msra.mxu0 0.0
    %1791 = vmatprep.subr.mxu0 0.0
    %1792 = vmatpush1.msra.mxu0 0.0
    %1793 = vmatprep.subr.mxu0 0.0
    %1794 = vmatpush1.msra.mxu0 0.0
    %1795 = vmatprep.subr.mxu0 0.0
    %1796 = vmatpush1.msra.mxu0 0.0
    %1797 = vmatprep.subr.mxu0 0.0
    %1798 = vmatpush1.msra.mxu0 0.0
    %1799 = vmatprep.subr.mxu0 0.0
    %1800 = vmatpush1.msra.mxu0 0.0
    %1801 = vmatprep.subr.mxu0 0.0
    %1802 = vmatpush1.msra.mxu0 0.0
    %1803 = vmatprep.subr.mxu0 0.0
    %1804 = vmatpush1.msra.mxu0 0.0
    %1805 = vmatprep.subr.mxu0 0.0
    %1806 = vmatpush1.msra.mxu0 0.0
    %1807 = vmatprep.subr.mxu0 0.0
    %1808 = vmatpush1.msra.mxu0 0.0
    %1809 = vmatprep.subr.mxu0 0.0
    %1810 = vmatpush1.msra.mxu0 0.0
    %1811 = vmatprep.mubr.f32.mxu0 0.0
    %1812 = vmatmul.mubr.f32.gmra.mrb[0].mxu0 %v1688
    %v1813 = vpop.f32.mrb[0].mxu0
    %v1814 = vadd.f32 0.0, %v1813
    %v1815 = vpop.f32.mrb[0].mxu0
    %1816 = vmatprep.mubr.f32.mxu0 0.0
    %1817 = vmatmul.mubr.f32.gmra.mrb[0].mxu0 %v1691
    %v1818 = vpop.f32.mrb[0].mxu0
    %v1819 = vadd.f32 0.0, %v1818
    %v1820 = vpop.f32.mrb[0].mxu0
    %1821 = vmatprep.mubr.f32.mxu0 0.0
    %1822 = vmatmul.mubr.f32.gmra.mrb[0].mxu0 %v1694
    %v1823 = vpop.f32.mrb[0].mxu0
    %v1824 = vadd.f32 0.0, %v1823
    %v1825 = vpop.f32.mrb[0].mxu0
    %1826 = vmatprep.mubr.f32.mxu0 0.0
    %1827 = vmatmul.mubr.f32.gmra.mrb[0].mxu0 %v1697
    %v1828 = vpop.f32.mrb[0].mxu0
    %v1829 = vadd.f32 0.0, %v1828
    %v1830 = vpop.f32.mrb[0].mxu0
    %1831 = vmatprep.mubr.f32.mxu0 0.0
    %1832 = vmatmul.mubr.f32.gmra.mrb[0].mxu0 %v1700
    %v1833 = vpop.f32.mrb[0].mxu0
    %v1834 = vadd.f32 0.0, %v1833
    %v1835 = vpop.f32.mrb[0].mxu0
    %1836 = vmatprep.mubr.f32.mxu0 0.0
    %1837 = vmatmul.mubr.f32.gmra.mrb[0].mxu0 %v1703
    %v1838 = vpop.f32.mrb[0].mxu0
    %v1839 = vadd.f32 0.0, %v1838
    %v1840 = vpop.f32.mrb[0].mxu0
    %1841 = vmatprep.mubr.f32.mxu0 0.0
    %1842 = vmatmul.mubr.f32.gmra.mrb[0].mxu0 %v1706
    %v1843 = vpop.f32.mrb[0].mxu0
    %v1844 = vadd.f32 0.0, %v1843
    %v1845 = vpop.f32.mrb[0].mxu0
    %1846 = vmatprep.mubr.f32.mxu0 0.0
    %1847 = vmatmul.mubr.f32.gmra.mrb[0].mxu0 %v1709
    %v1848 = vpop.f32.mrb[0].mxu0
    %v1849 = vadd.f32 0.0, %v1848
    %v1850 = vpop.f32.mrb[0].mxu0
    %1851 = vmatprep.mubr.f32.mxu0 0.0
    %1852 = vmatmul.mubr.f32.gmra.mrb[0].mxu0 %v1712
    %v1853 = vpop.f32.mrb[0].mxu0
    %v1854 = vadd.f32 0.0, %v1853
    %v1855 = vpop.f32.mrb[0].mxu0
    %1856 = vmatprep.mubr.f32.mxu0 0.0
    %1857 = vmatmul.mubr.f32.gmra.mrb[0].mxu0 %v1715
    %v1858 = vpop.f32.mrb[0].mxu0
    %v1859 = vadd.f32 0.0, %v1858
    %v1860 = vpop.f32.mrb[0].mxu0
    %1861 = vmatprep.mubr.f32.mxu0 0.0
    %1862 = vmatmul.mubr.f32.gmra.mrb[0].mxu0 %v1718
    %v1863 = vpop.f32.mrb[0].mxu0
    %v1864 = vadd.f32 0.0, %v1863
    %v1865 = vpop.f32.mrb[0].mxu0
    %1866 = vmatprep.mubr.f32.mxu0 0.0
    %1867 = vmatmul.mubr.f32.gmra.mrb[0].mxu0 %v1721
    %v1868 = vpop.f32.mrb[0].mxu0
    %v1869 = vadd.f32 0.0, %v1868
    %v1870 = vpop.f32.mrb[0].mxu0
    %1871 = vmatprep.mubr.f32.mxu0 0.0
    %1872 = vmatmul.mubr.f32.gmra.mrb[0].mxu0 %v1724
    %v1873 = vpop.f32.mrb[0].mxu0
    %v1874 = vadd.f32 0.0, %v1873
    %v1875 = vpop.f32.mrb[0].mxu0
    %1876 = vmatprep.mubr.f32.mxu0 0.0
    %1877 = vmatmul.mubr.f32.gmra.mrb[0].mxu0 %v1727
    %v1878 = vpop.f32.mrb[0].mxu0
    %v1879 = vadd.f32 0.0, %v1878
    %v1880 = vpop.f32.mrb[0].mxu0
    %1881 = vmatprep.mubr.f32.mxu0 0.0
    %1882 = vmatmul.mubr.f32.gmra.mrb[0].mxu0 %v1730
    %v1883 = vpop.f32.mrb[0].mxu0
    %v1884 = vadd.f32 0.0, %v1883
    %v1885 = vpop.f32.mrb[0].mxu0
    %1886 = vmatprep.mubr.f32.mxu0 0.0
    %1887 = vmatmul.mubr.f32.gmra.mrb[0].mxu0 %v1733
    %v1888 = vpop.f32.mrb[0].mxu0
    %v1889 = vadd.f32 0.0, %v1888
    %v1890 = vpop.f32.mrb[0].mxu0
    %1891 = vmatprep.mubr.f32.mxu0 0.0
    %1892 = vmatmul.mubr.f32.gmra.mrb[0].mxu0 %v1736
    %v1893 = vpop.f32.mrb[0].mxu0
    %v1894 = vadd.f32 0.0, %v1893
    %v1895 = vpop.f32.mrb[0].mxu0
    %1896 = vmatprep.mubr.f32.mxu0 0.0
    %1897 = vmatmul.mubr.f32.gmra.mrb[0].mxu0 %v1739
    %v1898 = vpop.f32.mrb[0].mxu0
    %v1899 = vadd.f32 0.0, %v1898
    %v1900 = vpop.f32.mrb[0].mxu0
    %1901 = vmatprep.mubr.f32.mxu0 0.0
    %1902 = vmatmul.mubr.f32.gmra.mrb[0].mxu0 %v1742
    %v1903 = vpop.f32.mrb[0].mxu0
    %v1904 = vadd.f32 0.0, %v1903
    %v1905 = vpop.f32.mrb[0].mxu0
    %1906 = vmatprep.mubr.f32.mxu0 0.0
    %1907 = vmatmul.mubr.f32.gmra.mrb[0].mxu0 %v1745
    %v1908 = vpop.f32.mrb[0].mxu0
    %v1909 = vadd.f32 0.0, %v1908
    %v1910 = vpop.f32.mrb[0].mxu0
    %1911 = vdwg.mxu0
    %v1912 = vsel %vm436, %v1814, 0.0
    %v1913 = vsel %vm436, %v1819, 0.0
    %v1914 = vsel %vm436, %v1824, 0.0
    %v1915 = vsel %vm436, %v1829, 0.0
    %1916 = vrot.lane.b32.xlu0 %v1912, 32
    %v1917 = vpop.permute.xlu0 %1916
    %v1918 = vsel %vm441, %v1917, %v1912
    %1919 = vrot.lane.b32.xlu0 %v1913, 32
    %v1920 = vpop.permute.xlu0 %1919
    %v1921 = vsel %vm441, %v1920, %v1913
    %1922 = vrot.lane.b32.xlu0 %v1914, 32
    %v1923 = vpop.permute.xlu0 %1922
    %v1924 = vsel %vm441, %v1923, %v1914
    %1925 = vrot.lane.b32.xlu0 %v1915, 32
    %v1926 = vpop.permute.xlu0 %1925
    %v1927 = vsel %vm441, %v1926, %v1915
    %1928 = vrot.lane.b32.xlu0 %v1918, 32
    %v1929 = vpop.permute.xlu0 %1928
    %1930 = vrot.lane.b32.xlu0 %v1921, 32
    %v1931 = vpop.permute.xlu0 %1930
    %1932 = vrot.lane.b32.xlu0 %v1924, 32
    %v1933 = vpop.permute.xlu0 %1932
    %1934 = vrot.lane.b32.xlu0 %v1927, 32
    %v1935 = vpop.permute.xlu0 %1934
    %v1936 = vsel %vm441, %v1929, %v1912
    %v1937 = vsel %vm441, %v1931, %v1913
    %v1938 = vsel %vm441, %v1933, %v1914
    %v1939 = vsel %vm441, %v1935, %v1915
    %v1940 = vsel %vm467, %v1834, 0.0
    %v1941 = vsel %vm467, %v1839, 0.0
    %v1942 = vsel %vm467, %v1844, 0.0
    %v1943 = vsel %vm467, %v1849, 0.0
    %1944 = vrot.lane.b32.xlu0 %v1940, 32
    %v1945 = vpop.permute.xlu0 %1944
    %v1946 = vsel %vm441, %v1945, %v1940
    %1947 = vrot.lane.b32.xlu0 %v1941, 32
    %v1948 = vpop.permute.xlu0 %1947
    %v1949 = vsel %vm441, %v1948, %v1941
    %1950 = vrot.lane.b32.xlu0 %v1942, 32
    %v1951 = vpop.permute.xlu0 %1950
    %v1952 = vsel %vm441, %v1951, %v1942
    %1953 = vrot.lane.b32.xlu0 %v1943, 32
    %v1954 = vpop.permute.xlu0 %1953
    %v1955 = vsel %vm441, %v1954, %v1943
    %1956 = vrot.lane.b32.xlu0 %v1946, 32
    %v1957 = vpop.permute.xlu0 %1956
    %1958 = vrot.lane.b32.xlu0 %v1949, 32
    %v1959 = vpop.permute.xlu0 %1958
    %1960 = vrot.lane.b32.xlu0 %v1952, 32
    %v1961 = vpop.permute.xlu0 %1960
    %1962 = vrot.lane.b32.xlu0 %v1955, 32
    %v1963 = vpop.permute.xlu0 %1962
    %v1964 = vsel %vm441, %v1957, %v1940
    %v1965 = vsel %vm441, %v1959, %v1941
    %v1966 = vsel %vm441, %v1961, %v1942
    %v1967 = vsel %vm441, %v1963, %v1943
    %v1968 = vsel %vm497, %v1874, 0.0
    %v1969 = vsel %vm497, %v1879, 0.0
    %v1970 = vsel %vm497, %v1884, 0.0
    %v1971 = vsel %vm497, %v1889, 0.0
    %1972 = vrot.lane.b32.xlu0 %v1968, 32
    %v1973 = vpop.permute.xlu0 %1972
    %v1974 = vsel %vm441, %v1973, %v1968
    %1975 = vrot.lane.b32.xlu0 %v1969, 32
    %v1976 = vpop.permute.xlu0 %1975
    %v1977 = vsel %vm441, %v1976, %v1969
    %1978 = vrot.lane.b32.xlu0 %v1970, 32
    %v1979 = vpop.permute.xlu0 %1978
    %v1980 = vsel %vm441, %v1979, %v1970
    %1981 = vrot.lane.b32.xlu0 %v1971, 32
    %v1982 = vpop.permute.xlu0 %1981
    %v1983 = vsel %vm441, %v1982, %v1971
    %1984 = vrot.lane.b32.xlu0 %v1974, 32
    %v1985 = vpop.permute.xlu0 %1984
    %1986 = vrot.lane.b32.xlu0 %v1977, 32
    %v1987 = vpop.permute.xlu0 %1986
    %1988 = vrot.lane.b32.xlu0 %v1980, 32
    %v1989 = vpop.permute.xlu0 %1988
    %1990 = vrot.lane.b32.xlu0 %v1983, 32
    %v1991 = vpop.permute.xlu0 %1990
    %v1992 = vsel %vm441, %v1985, %v1968
    %v1993 = vsel %vm441, %v1987, %v1969
    %v1994 = vsel %vm441, %v1989, %v1970
    %v1995 = vsel %vm441, %v1991, %v1971
    %v1996 = vsel %vm527, %v1894, 0.0
    %v1997 = vsel %vm527, %v1899, 0.0
    %v1998 = vsel %vm527, %v1904, 0.0
    %v1999 = vsel %vm527, %v1909, 0.0
    %2000 = vrot.lane.b32.xlu0 %v1996, 32
    %v2001 = vpop.permute.xlu0 %2000
    %v2002 = vsel %vm441, %v2001, %v1996
    %2003 = vrot.lane.b32.xlu0 %v1997, 32
    %v2004 = vpop.permute.xlu0 %2003
    %v2005 = vsel %vm441, %v2004, %v1997
    %2006 = vrot.lane.b32.xlu0 %v1998, 32
    %v2007 = vpop.permute.xlu0 %2006
    %v2008 = vsel %vm441, %v2007, %v1998
    %2009 = vrot.lane.b32.xlu0 %v1999, 32
    %v2010 = vpop.permute.xlu0 %2009
    %v2011 = vsel %vm441, %v2010, %v1999
    %2012 = vrot.lane.b32.xlu0 %v2002, 32
    %v2013 = vpop.permute.xlu0 %2012
    %2014 = vrot.lane.b32.xlu0 %v2005, 32
    %v2015 = vpop.permute.xlu0 %2014
    %2016 = vrot.lane.b32.xlu0 %v2008, 32
    %v2017 = vpop.permute.xlu0 %2016
    %2018 = vrot.lane.b32.xlu0 %v2011, 32
    %v2019 = vpop.permute.xlu0 %2018
    %v2020 = vsel %vm441, %v2013, %v1996
    %v2021 = vsel %vm441, %v2015, %v1997
    %v2022 = vsel %vm441, %v2017, %v1998
    %v2023 = vsel %vm441, %v2019, %v1999
    %2028 = vrot.lane.b32.xlu0 %v1964, 127
    %v2029 = vpop.permute.xlu0 %2028
    %2030 = vrot.lane.b32.xlu0 %v1965, 127
    %v2031 = vpop.permute.xlu0 %2030
    %2032 = vrot.lane.b32.xlu0 %v1966, 127
    %v2033 = vpop.permute.xlu0 %2032
    %2034 = vrot.lane.b32.xlu0 %v1967, 127
    %v2035 = vpop.permute.xlu0 %2034
    %v2040 = vadd.f32 %v1936, %v2029
    %v2041 = vadd.f32 %v1937, %v2031
    %v2042 = vadd.f32 %v1938, %v2033
    %v2043 = vadd.f32 %v1939, %v2035
    %2048 = vrot.lane.b32.xlu0 %v1992, 127
    %v2049 = vpop.permute.xlu0 %2048
    %2050 = vrot.lane.b32.xlu0 %v1993, 127
    %v2051 = vpop.permute.xlu0 %2050
    %2052 = vrot.lane.b32.xlu0 %v1994, 127
    %v2053 = vpop.permute.xlu0 %2052
    %2054 = vrot.lane.b32.xlu0 %v1995, 127
    %v2055 = vpop.permute.xlu0 %2054
    %v2060 = vadd.f32 %v1854, %v2049
    %v2061 = vadd.f32 %v1859, %v2051
    %v2062 = vadd.f32 %v1864, %v2053
    %v2063 = vadd.f32 %v1869, %v2055
    %2068 = vrot.lane.b32.xlu0 %v2060, 30
    %v2069 = vpop.permute.xlu0 %2068
    %2070 = vrot.lane.b32.xlu0 %v2061, 30
    %v2071 = vpop.permute.xlu0 %2070
    %2072 = vrot.lane.b32.xlu0 %v2062, 30
    %v2073 = vpop.permute.xlu0 %2072
    %2074 = vrot.lane.b32.xlu0 %v2063, 30
    %v2075 = vpop.permute.xlu0 %2074
    %v2080 = vadd.f32 %v2040, %v2069
    %v2081 = vadd.f32 %v2041, %v2071
    %v2082 = vadd.f32 %v2042, %v2073
    %v2083 = vadd.f32 %v2043, %v2075
    %2088 = vrot.lane.b32.xlu0 %v2020, 28
    %v2089 = vpop.permute.xlu0 %2088
    %2090 = vrot.lane.b32.xlu0 %v2021, 28
    %v2091 = vpop.permute.xlu0 %2090
    %2092 = vrot.lane.b32.xlu0 %v2022, 28
    %v2093 = vpop.permute.xlu0 %2092
    %2094 = vrot.lane.b32.xlu0 %v2023, 28
    %v2095 = vpop.permute.xlu0 %2094
    %v2100 = vadd.f32 %v2080, %v2089
    %v2101 = vadd.f32 %v2081, %v2091
    %v2102 = vadd.f32 %v2082, %v2093
    %v2103 = vadd.f32 %v2083, %v2095
    %s2104 = scalar_lea.vmem %s4, 96
    %v2105 = vld [vmem:[%s2104] sm:$0xff]
    %v2106 = vld [vmem:[%s2104 + $0x8] sm:$0xff]
    %v2107 = vld [vmem:[%s2104 + $0x10] sm:$0xff]
    %v2108 = vld [vmem:[%s2104 + $0x18] sm:$0xff]
    %2110 = vset.pattern.permute.xlu0 0
    %2111 = vperm.xlu0 %2110, %v2105
    %v2112 = vpop.permute.xlu0 %2111
    %2115 = vset.pattern.permute.xlu0 0
    %2116 = vperm.xlu0 %2115, %v2106
    %v2117 = vpop.permute.xlu0 %2116
    %2120 = vset.pattern.permute.xlu0 0
    %2121 = vperm.xlu0 %2120, %v2107
    %v2122 = vpop.permute.xlu0 %2121
    %2125 = vset.pattern.permute.xlu0 0
    %2126 = vperm.xlu0 %2125, %v2108
    %v2127 = vpop.permute.xlu0 %2126
    %v2129 = vadd.f32 %v2100, %v2112
    %v2130 = vadd.f32 %v2101, %v2117
    %v2131 = vadd.f32 %v2102, %v2122
    %v2132 = vadd.f32 %v2103, %v2127
    %v2133 = vmul.f32 %v2129, 0.3
    %v2134 = vmul.f32 %v2130, 0.3
    %v2135 = vmul.f32 %v2131, 0.3
    %v2136 = vmul.f32 %v2132, 0.3
    %2141 = vrot.lane.b32.xlu0 %v2133, 98
    %v2142 = vpop.permute.xlu0 %2141
    %2143 = vrot.lane.b32.xlu0 %v2134, 98
    %v2144 = vpop.permute.xlu0 %2143
    %2145 = vrot.lane.b32.xlu0 %v2135, 98
    %v2146 = vpop.permute.xlu0 %2145
    %2147 = vrot.lane.b32.xlu0 %v2136, 98
    %v2148 = vpop.permute.xlu0 %2147
    %v2153 = vadd.f32 %v1171, %v2142
    %v2154 = vadd.f32 %v1172, %v2144
    %v2155 = vadd.f32 %v1173, %v2146
    %v2156 = vadd.f32 %v1174, %v2148
    %v2157 = vmax.f32 %v2153, 0.0
    %v2158 = vmax.f32 %v2154, 0.0
    %v2159 = vmax.f32 %v2155, 0.0
    %v2160 = vmax.f32 %v2156, 0.0
    %s2161 = scalar_lea.vmem %s3, 640
    %v2162 = vld [vmem:[%s2161] sm:$0xff]
    %v2163 = vld [vmem:[%s2161 + $0x8] sm:$0xff]
    %v2164 = vld [vmem:[%s2161 + $0x10] sm:$0xff]
    %v2165 = vld [vmem:[%s2161 + $0x18] sm:$0xff]
    %v2166 = vld [vmem:[%s2161 + $0x20] sm:$0xff]
    %v2167 = vld [vmem:[%s2161 + $0x28] sm:$0xff]
    %v2168 = vld [vmem:[%s2161 + $0x30] sm:$0xff]
    %v2169 = vld [vmem:[%s2161 + $0x38] sm:$0xff]
    %v2170 = vld [vmem:[%s2161 + $0x40] sm:$0xff]
    %v2171 = vld [vmem:[%s2161 + $0x48] sm:$0xff]
    %v2172 = vld [vmem:[%s2161 + $0x50] sm:$0xff]
    %v2173 = vld [vmem:[%s2161 + $0x58] sm:$0xff]
    %v2174 = vld [vmem:[%s2161 + $0x60] sm:$0xff]
    %v2175 = vld [vmem:[%s2161 + $0x68] sm:$0xff]
    %v2176 = vld [vmem:[%s2161 + $0x70] sm:$0xff]
    %v2177 = vld [vmem:[%s2161 + $0x78] sm:$0xff]
    %v2178 = vld [vmem:[%s2161 + $0x80] sm:$0xff]
    %v2179 = vld [vmem:[%s2161 + $0x88] sm:$0xff]
    %v2180 = vld [vmem:[%s2161 + $0x90] sm:$0xff]
    %v2181 = vld [vmem:[%s2161 + $0x98] sm:$0xff]
    %v2183 = vsel %vm209, %v2162, 0
    %v2186 = vsel %vm209, %v2163, 0
    %v2189 = vsel %vm209, %v2164, 0
    %v2192 = vsel %vm209, %v2165, 0
    %v2195 = vsel %vm209, %v2166, 0
    %v2198 = vsel %vm209, %v2167, 0
    %v2201 = vsel %vm209, %v2168, 0
    %v2204 = vsel %vm209, %v2169, 0
    %v2207 = vsel %vm209, %v2170, 0
    %v2210 = vsel %vm209, %v2171, 0
    %v2213 = vsel %vm209, %v2172, 0
    %v2216 = vsel %vm209, %v2173, 0
    %v2219 = vsel %vm209, %v2174, 0
    %v2222 = vsel %vm209, %v2175, 0
    %v2225 = vsel %vm209, %v2176, 0
    %v2228 = vsel %vm209, %v2177, 0
    %v2231 = vsel %vm209, %v2178, 0
    %v2234 = vsel %vm209, %v2179, 0
    %v2237 = vsel %vm209, %v2180, 0
    %v2240 = vsel %vm209, %v2181, 0
    %2242 = vmatprep.subr.mxu0 0.0
    %2243 = vmatpush1.msra.mxu0 %v2157
    %2244 = vmatprep.subr.mxu0 0.0
    %2245 = vmatpush1.msra.mxu0 %v2158
    %2246 = vmatprep.subr.mxu0 0.0
    %2247 = vmatpush1.msra.mxu0 %v2159
    %2248 = vmatprep.subr.mxu0 0.0
    %2249 = vmatpush1.msra.mxu0 %v2160
    %2250 = vmatprep.subr.mxu0 0.0
    %2251 = vmatpush1.msra.mxu0 0.0
    %2252 = vmatprep.subr.mxu0 0.0
    %2253 = vmatpush1.msra.mxu0 0.0
    %2254 = vmatprep.subr.mxu0 0.0
    %2255 = vmatpush1.msra.mxu0 0.0
    %2256 = vmatprep.subr.mxu0 0.0
    %2257 = vmatpush1.msra.mxu0 0.0
    %2258 = vmatprep.subr.mxu0 0.0
    %2259 = vmatpush1.msra.mxu0 0.0
    %2260 = vmatprep.subr.mxu0 0.0
    %2261 = vmatpush1.msra.mxu0 0.0
    %2262 = vmatprep.subr.mxu0 0.0
    %2263 = vmatpush1.msra.mxu0 0.0
    %2264 = vmatprep.subr.mxu0 0.0
    %2265 = vmatpush1.msra.mxu0 0.0
    %2266 = vmatprep.subr.mxu0 0.0
    %2267 = vmatpush1.msra.mxu0 0.0
    %2268 = vmatprep.subr.mxu0 0.0
    %2269 = vmatpush1.msra.mxu0 0.0
    %2270 = vmatprep.subr.mxu0 0.0
    %2271 = vmatpush1.msra.mxu0 0.0
    %2272 = vmatprep.subr.mxu0 0.0
    %2273 = vmatpush1.msra.mxu0 0.0
    %2274 = vmatprep.subr.mxu0 0.0
    %2275 = vmatpush1.msra.mxu0 0.0
    %2276 = vmatprep.subr.mxu0 0.0
    %2277 = vmatpush1.msra.mxu0 0.0
    %2278 = vmatprep.subr.mxu0 0.0
    %2279 = vmatpush1.msra.mxu0 0.0
    %2280 = vmatprep.subr.mxu0 0.0
    %2281 = vmatpush1.msra.mxu0 0.0
    %2282 = vmatprep.subr.mxu0 0.0
    %2283 = vmatpush1.msra.mxu0 0.0
    %2284 = vmatprep.subr.mxu0 0.0
    %2285 = vmatpush1.msra.mxu0 0.0
    %2286 = vmatprep.subr.mxu0 0.0
    %2287 = vmatpush1.msra.mxu0 0.0
    %2288 = vmatprep.subr.mxu0 0.0
    %2289 = vmatpush1.msra.mxu0 0.0
    %2290 = vmatprep.subr.mxu0 0.0
    %2291 = vmatpush1.msra.mxu0 0.0
    %2292 = vmatprep.subr.mxu0 0.0
    %2293 = vmatpush1.msra.mxu0 0.0
    %2294 = vmatprep.subr.mxu0 0.0
    %2295 = vmatpush1.msra.mxu0 0.0
    %2296 = vmatprep.subr.mxu0 0.0
    %2297 = vmatpush1.msra.mxu0 0.0
    %2298 = vmatprep.subr.mxu0 0.0
    %2299 = vmatpush1.msra.mxu0 0.0
    %2300 = vmatprep.subr.mxu0 0.0
    %2301 = vmatpush1.msra.mxu0 0.0
    %2302 = vmatprep.subr.mxu0 0.0
    %2303 = vmatpush1.msra.mxu0 0.0
    %2304 = vmatprep.subr.mxu0 0.0
    %2305 = vmatpush1.msra.mxu0 0.0
    %2306 = vmatprep.mubr.f32.mxu0 0.0
    %2307 = vmatmul.mubr.f32.gmra.mrb[0].mxu0 %v2183
    %v2308 = vpop.f32.mrb[0].mxu0
    %v2309 = vadd.f32 0.0, %v2308
    %v2310 = vpop.f32.mrb[0].mxu0
    %2311 = vmatprep.mubr.f32.mxu0 0.0
    %2312 = vmatmul.mubr.f32.gmra.mrb[0].mxu0 %v2186
    %v2313 = vpop.f32.mrb[0].mxu0
    %v2314 = vadd.f32 0.0, %v2313
    %v2315 = vpop.f32.mrb[0].mxu0
    %2316 = vmatprep.mubr.f32.mxu0 0.0
    %2317 = vmatmul.mubr.f32.gmra.mrb[0].mxu0 %v2189
    %v2318 = vpop.f32.mrb[0].mxu0
    %v2319 = vadd.f32 0.0, %v2318
    %v2320 = vpop.f32.mrb[0].mxu0
    %2321 = vmatprep.mubr.f32.mxu0 0.0
    %2322 = vmatmul.mubr.f32.gmra.mrb[0].mxu0 %v2192
    %v2323 = vpop.f32.mrb[0].mxu0
    %v2324 = vadd.f32 0.0, %v2323
    %v2325 = vpop.f32.mrb[0].mxu0
    %2326 = vmatprep.mubr.f32.mxu0 0.0
    %2327 = vmatmul.mubr.f32.gmra.mrb[0].mxu0 %v2195
    %v2328 = vpop.f32.mrb[0].mxu0
    %v2329 = vadd.f32 0.0, %v2328
    %v2330 = vpop.f32.mrb[0].mxu0
    %2331 = vmatprep.mubr.f32.mxu0 0.0
    %2332 = vmatmul.mubr.f32.gmra.mrb[0].mxu0 %v2198
    %v2333 = vpop.f32.mrb[0].mxu0
    %v2334 = vadd.f32 0.0, %v2333
    %v2335 = vpop.f32.mrb[0].mxu0
    %2336 = vmatprep.mubr.f32.mxu0 0.0
    %2337 = vmatmul.mubr.f32.gmra.mrb[0].mxu0 %v2201
    %v2338 = vpop.f32.mrb[0].mxu0
    %v2339 = vadd.f32 0.0, %v2338
    %v2340 = vpop.f32.mrb[0].mxu0
    %2341 = vmatprep.mubr.f32.mxu0 0.0
    %2342 = vmatmul.mubr.f32.gmra.mrb[0].mxu0 %v2204
    %v2343 = vpop.f32.mrb[0].mxu0
    %v2344 = vadd.f32 0.0, %v2343
    %v2345 = vpop.f32.mrb[0].mxu0
    %2346 = vmatprep.mubr.f32.mxu0 0.0
    %2347 = vmatmul.mubr.f32.gmra.mrb[0].mxu0 %v2207
    %v2348 = vpop.f32.mrb[0].mxu0
    %v2349 = vadd.f32 0.0, %v2348
    %v2350 = vpop.f32.mrb[0].mxu0
    %2351 = vmatprep.mubr.f32.mxu0 0.0
    %2352 = vmatmul.mubr.f32.gmra.mrb[0].mxu0 %v2210
    %v2353 = vpop.f32.mrb[0].mxu0
    %v2354 = vadd.f32 0.0, %v2353
    %v2355 = vpop.f32.mrb[0].mxu0
    %2356 = vmatprep.mubr.f32.mxu0 0.0
    %2357 = vmatmul.mubr.f32.gmra.mrb[0].mxu0 %v2213
    %v2358 = vpop.f32.mrb[0].mxu0
    %v2359 = vadd.f32 0.0, %v2358
    %v2360 = vpop.f32.mrb[0].mxu0
    %2361 = vmatprep.mubr.f32.mxu0 0.0
    %2362 = vmatmul.mubr.f32.gmra.mrb[0].mxu0 %v2216
    %v2363 = vpop.f32.mrb[0].mxu0
    %v2364 = vadd.f32 0.0, %v2363
    %v2365 = vpop.f32.mrb[0].mxu0
    %2366 = vmatprep.mubr.f32.mxu0 0.0
    %2367 = vmatmul.mubr.f32.gmra.mrb[0].mxu0 %v2219
    %v2368 = vpop.f32.mrb[0].mxu0
    %v2369 = vadd.f32 0.0, %v2368
    %v2370 = vpop.f32.mrb[0].mxu0
    %2371 = vmatprep.mubr.f32.mxu0 0.0
    %2372 = vmatmul.mubr.f32.gmra.mrb[0].mxu0 %v2222
    %v2373 = vpop.f32.mrb[0].mxu0
    %v2374 = vadd.f32 0.0, %v2373
    %v2375 = vpop.f32.mrb[0].mxu0
    %2376 = vmatprep.mubr.f32.mxu0 0.0
    %2377 = vmatmul.mubr.f32.gmra.mrb[0].mxu0 %v2225
    %v2378 = vpop.f32.mrb[0].mxu0
    %v2379 = vadd.f32 0.0, %v2378
    %v2380 = vpop.f32.mrb[0].mxu0
    %2381 = vmatprep.mubr.f32.mxu0 0.0
    %2382 = vmatmul.mubr.f32.gmra.mrb[0].mxu0 %v2228
    %v2383 = vpop.f32.mrb[0].mxu0
    %v2384 = vadd.f32 0.0, %v2383
    %v2385 = vpop.f32.mrb[0].mxu0
    %2386 = vmatprep.mubr.f32.mxu0 0.0
    %2387 = vmatmul.mubr.f32.gmra.mrb[0].mxu0 %v2231
    %v2388 = vpop.f32.mrb[0].mxu0
    %v2389 = vadd.f32 0.0, %v2388
    %v2390 = vpop.f32.mrb[0].mxu0
    %2391 = vmatprep.mubr.f32.mxu0 0.0
    %2392 = vmatmul.mubr.f32.gmra.mrb[0].mxu0 %v2234
    %v2393 = vpop.f32.mrb[0].mxu0
    %v2394 = vadd.f32 0.0, %v2393
    %v2395 = vpop.f32.mrb[0].mxu0
    %2396 = vmatprep.mubr.f32.mxu0 0.0
    %2397 = vmatmul.mubr.f32.gmra.mrb[0].mxu0 %v2237
    %v2398 = vpop.f32.mrb[0].mxu0
    %v2399 = vadd.f32 0.0, %v2398
    %v2400 = vpop.f32.mrb[0].mxu0
    %2401 = vmatprep.mubr.f32.mxu0 0.0
    %2402 = vmatmul.mubr.f32.gmra.mrb[0].mxu0 %v2240
    %v2403 = vpop.f32.mrb[0].mxu0
    %v2404 = vadd.f32 0.0, %v2403
    %v2405 = vpop.f32.mrb[0].mxu0
    %2406 = vdwg.mxu0
    %v2407 = vsel %vm436, %v2309, 0.0
    %v2408 = vsel %vm436, %v2314, 0.0
    %v2409 = vsel %vm436, %v2319, 0.0
    %v2410 = vsel %vm436, %v2324, 0.0
    %2411 = vrot.lane.b32.xlu0 %v2407, 32
    %v2412 = vpop.permute.xlu0 %2411
    %v2413 = vsel %vm441, %v2412, %v2407
    %2414 = vrot.lane.b32.xlu0 %v2408, 32
    %v2415 = vpop.permute.xlu0 %2414
    %v2416 = vsel %vm441, %v2415, %v2408
    %2417 = vrot.lane.b32.xlu0 %v2409, 32
    %v2418 = vpop.permute.xlu0 %2417
    %v2419 = vsel %vm441, %v2418, %v2409
    %2420 = vrot.lane.b32.xlu0 %v2410, 32
    %v2421 = vpop.permute.xlu0 %2420
    %v2422 = vsel %vm441, %v2421, %v2410
    %2423 = vrot.lane.b32.xlu0 %v2413, 32
    %v2424 = vpop.permute.xlu0 %2423
    %2425 = vrot.lane.b32.xlu0 %v2416, 32
    %v2426 = vpop.permute.xlu0 %2425
    %2427 = vrot.lane.b32.xlu0 %v2419, 32
    %v2428 = vpop.permute.xlu0 %2427
    %2429 = vrot.lane.b32.xlu0 %v2422, 32
    %v2430 = vpop.permute.xlu0 %2429
    %v2431 = vsel %vm441, %v2424, %v2407
    %v2432 = vsel %vm441, %v2426, %v2408
    %v2433 = vsel %vm441, %v2428, %v2409
    %v2434 = vsel %vm441, %v2430, %v2410
    %v2435 = vsel %vm467, %v2329, 0.0
    %v2436 = vsel %vm467, %v2334, 0.0
    %v2437 = vsel %vm467, %v2339, 0.0
    %v2438 = vsel %vm467, %v2344, 0.0
    %2439 = vrot.lane.b32.xlu0 %v2435, 32
    %v2440 = vpop.permute.xlu0 %2439
    %v2441 = vsel %vm441, %v2440, %v2435
    %2442 = vrot.lane.b32.xlu0 %v2436, 32
    %v2443 = vpop.permute.xlu0 %2442
    %v2444 = vsel %vm441, %v2443, %v2436
    %2445 = vrot.lane.b32.xlu0 %v2437, 32
    %v2446 = vpop.permute.xlu0 %2445
    %v2447 = vsel %vm441, %v2446, %v2437
    %2448 = vrot.lane.b32.xlu0 %v2438, 32
    %v2449 = vpop.permute.xlu0 %2448
    %v2450 = vsel %vm441, %v2449, %v2438
    %2451 = vrot.lane.b32.xlu0 %v2441, 32
    %v2452 = vpop.permute.xlu0 %2451
    %2453 = vrot.lane.b32.xlu0 %v2444, 32
    %v2454 = vpop.permute.xlu0 %2453
    %2455 = vrot.lane.b32.xlu0 %v2447, 32
    %v2456 = vpop.permute.xlu0 %2455
    %2457 = vrot.lane.b32.xlu0 %v2450, 32
    %v2458 = vpop.permute.xlu0 %2457
    %v2459 = vsel %vm441, %v2452, %v2435
    %v2460 = vsel %vm441, %v2454, %v2436
    %v2461 = vsel %vm441, %v2456, %v2437
    %v2462 = vsel %vm441, %v2458, %v2438
    %v2463 = vsel %vm497, %v2369, 0.0
    %v2464 = vsel %vm497, %v2374, 0.0
    %v2465 = vsel %vm497, %v2379, 0.0
    %v2466 = vsel %vm497, %v2384, 0.0
    %2467 = vrot.lane.b32.xlu0 %v2463, 32
    %v2468 = vpop.permute.xlu0 %2467
    %v2469 = vsel %vm441, %v2468, %v2463
    %2470 = vrot.lane.b32.xlu0 %v2464, 32
    %v2471 = vpop.permute.xlu0 %2470
    %v2472 = vsel %vm441, %v2471, %v2464
    %2473 = vrot.lane.b32.xlu0 %v2465, 32
    %v2474 = vpop.permute.xlu0 %2473
    %v2475 = vsel %vm441, %v2474, %v2465
    %2476 = vrot.lane.b32.xlu0 %v2466, 32
    %v2477 = vpop.permute.xlu0 %2476
    %v2478 = vsel %vm441, %v2477, %v2466
    %2479 = vrot.lane.b32.xlu0 %v2469, 32
    %v2480 = vpop.permute.xlu0 %2479
    %2481 = vrot.lane.b32.xlu0 %v2472, 32
    %v2482 = vpop.permute.xlu0 %2481
    %2483 = vrot.lane.b32.xlu0 %v2475, 32
    %v2484 = vpop.permute.xlu0 %2483
    %2485 = vrot.lane.b32.xlu0 %v2478, 32
    %v2486 = vpop.permute.xlu0 %2485
    %v2487 = vsel %vm441, %v2480, %v2463
    %v2488 = vsel %vm441, %v2482, %v2464
    %v2489 = vsel %vm441, %v2484, %v2465
    %v2490 = vsel %vm441, %v2486, %v2466
    %v2491 = vsel %vm527, %v2389, 0.0
    %v2492 = vsel %vm527, %v2394, 0.0
    %v2493 = vsel %vm527, %v2399, 0.0
    %v2494 = vsel %vm527, %v2404, 0.0
    %2495 = vrot.lane.b32.xlu0 %v2491, 32
    %v2496 = vpop.permute.xlu0 %2495
    %v2497 = vsel %vm441, %v2496, %v2491
    %2498 = vrot.lane.b32.xlu0 %v2492, 32
    %v2499 = vpop.permute.xlu0 %2498
    %v2500 = vsel %vm441, %v2499, %v2492
    %2501 = vrot.lane.b32.xlu0 %v2493, 32
    %v2502 = vpop.permute.xlu0 %2501
    %v2503 = vsel %vm441, %v2502, %v2493
    %2504 = vrot.lane.b32.xlu0 %v2494, 32
    %v2505 = vpop.permute.xlu0 %2504
    %v2506 = vsel %vm441, %v2505, %v2494
    %2507 = vrot.lane.b32.xlu0 %v2497, 32
    %v2508 = vpop.permute.xlu0 %2507
    %2509 = vrot.lane.b32.xlu0 %v2500, 32
    %v2510 = vpop.permute.xlu0 %2509
    %2511 = vrot.lane.b32.xlu0 %v2503, 32
    %v2512 = vpop.permute.xlu0 %2511
    %2513 = vrot.lane.b32.xlu0 %v2506, 32
    %v2514 = vpop.permute.xlu0 %2513
    %v2515 = vsel %vm441, %v2508, %v2491
    %v2516 = vsel %vm441, %v2510, %v2492
    %v2517 = vsel %vm441, %v2512, %v2493
    %v2518 = vsel %vm441, %v2514, %v2494
    %2523 = vrot.lane.b32.xlu0 %v2459, 127
    %v2524 = vpop.permute.xlu0 %2523
    %2525 = vrot.lane.b32.xlu0 %v2460, 127
    %v2526 = vpop.permute.xlu0 %2525
    %2527 = vrot.lane.b32.xlu0 %v2461, 127
    %v2528 = vpop.permute.xlu0 %2527
    %2529 = vrot.lane.b32.xlu0 %v2462, 127
    %v2530 = vpop.permute.xlu0 %2529
    %v2535 = vadd.f32 %v2431, %v2524
    %v2536 = vadd.f32 %v2432, %v2526
    %v2537 = vadd.f32 %v2433, %v2528
    %v2538 = vadd.f32 %v2434, %v2530
    %2543 = vrot.lane.b32.xlu0 %v2487, 127
    %v2544 = vpop.permute.xlu0 %2543
    %2545 = vrot.lane.b32.xlu0 %v2488, 127
    %v2546 = vpop.permute.xlu0 %2545
    %2547 = vrot.lane.b32.xlu0 %v2489, 127
    %v2548 = vpop.permute.xlu0 %2547
    %2549 = vrot.lane.b32.xlu0 %v2490, 127
    %v2550 = vpop.permute.xlu0 %2549
    %v2555 = vadd.f32 %v2349, %v2544
    %v2556 = vadd.f32 %v2354, %v2546
    %v2557 = vadd.f32 %v2359, %v2548
    %v2558 = vadd.f32 %v2364, %v2550
    %2563 = vrot.lane.b32.xlu0 %v2555, 30
    %v2564 = vpop.permute.xlu0 %2563
    %2565 = vrot.lane.b32.xlu0 %v2556, 30
    %v2566 = vpop.permute.xlu0 %2565
    %2567 = vrot.lane.b32.xlu0 %v2557, 30
    %v2568 = vpop.permute.xlu0 %2567
    %2569 = vrot.lane.b32.xlu0 %v2558, 30
    %v2570 = vpop.permute.xlu0 %2569
    %v2575 = vadd.f32 %v2535, %v2564
    %v2576 = vadd.f32 %v2536, %v2566
    %v2577 = vadd.f32 %v2537, %v2568
    %v2578 = vadd.f32 %v2538, %v2570
    %2583 = vrot.lane.b32.xlu0 %v2515, 28
    %v2584 = vpop.permute.xlu0 %2583
    %2585 = vrot.lane.b32.xlu0 %v2516, 28
    %v2586 = vpop.permute.xlu0 %2585
    %2587 = vrot.lane.b32.xlu0 %v2517, 28
    %v2588 = vpop.permute.xlu0 %2587
    %2589 = vrot.lane.b32.xlu0 %v2518, 28
    %v2590 = vpop.permute.xlu0 %2589
    %v2595 = vadd.f32 %v2575, %v2584
    %v2596 = vadd.f32 %v2576, %v2586
    %v2597 = vadd.f32 %v2577, %v2588
    %v2598 = vadd.f32 %v2578, %v2590
    %s2599 = scalar_lea.vmem %s4, 128
    %v2600 = vld [vmem:[%s2599] sm:$0xff]
    %v2601 = vld [vmem:[%s2599 + $0x8] sm:$0xff]
    %v2602 = vld [vmem:[%s2599 + $0x10] sm:$0xff]
    %v2603 = vld [vmem:[%s2599 + $0x18] sm:$0xff]
    %2605 = vset.pattern.permute.xlu0 0
    %2606 = vperm.xlu0 %2605, %v2600
    %v2607 = vpop.permute.xlu0 %2606
    %2610 = vset.pattern.permute.xlu0 0
    %2611 = vperm.xlu0 %2610, %v2601
    %v2612 = vpop.permute.xlu0 %2611
    %2615 = vset.pattern.permute.xlu0 0
    %2616 = vperm.xlu0 %2615, %v2602
    %v2617 = vpop.permute.xlu0 %2616
    %2620 = vset.pattern.permute.xlu0 0
    %2621 = vperm.xlu0 %2620, %v2603
    %v2622 = vpop.permute.xlu0 %2621
    %v2624 = vadd.f32 %v2595, %v2607
    %v2625 = vadd.f32 %v2596, %v2612
    %v2626 = vadd.f32 %v2597, %v2617
    %v2627 = vadd.f32 %v2598, %v2622
    %v2628 = vmax.f32 %v2624, 0.0
    %v2629 = vmax.f32 %v2625, 0.0
    %v2630 = vmax.f32 %v2626, 0.0
    %v2631 = vmax.f32 %v2627, 0.0
    %s2632 = scalar_lea.vmem %s3, 800
    %v2633 = vld [vmem:[%s2632] sm:$0xff]
    %v2634 = vld [vmem:[%s2632 + $0x8] sm:$0xff]
    %v2635 = vld [vmem:[%s2632 + $0x10] sm:$0xff]
    %v2636 = vld [vmem:[%s2632 + $0x18] sm:$0xff]
    %v2637 = vld [vmem:[%s2632 + $0x20] sm:$0xff]
    %v2638 = vld [vmem:[%s2632 + $0x28] sm:$0xff]
    %v2639 = vld [vmem:[%s2632 + $0x30] sm:$0xff]
    %v2640 = vld [vmem:[%s2632 + $0x38] sm:$0xff]
    %v2641 = vld [vmem:[%s2632 + $0x40] sm:$0xff]
    %v2642 = vld [vmem:[%s2632 + $0x48] sm:$0xff]
    %v2643 = vld [vmem:[%s2632 + $0x50] sm:$0xff]
    %v2644 = vld [vmem:[%s2632 + $0x58] sm:$0xff]
    %v2645 = vld [vmem:[%s2632 + $0x60] sm:$0xff]
    %v2646 = vld [vmem:[%s2632 + $0x68] sm:$0xff]
    %v2647 = vld [vmem:[%s2632 + $0x70] sm:$0xff]
    %v2648 = vld [vmem:[%s2632 + $0x78] sm:$0xff]
    %v2649 = vld [vmem:[%s2632 + $0x80] sm:$0xff]
    %v2650 = vld [vmem:[%s2632 + $0x88] sm:$0xff]
    %v2651 = vld [vmem:[%s2632 + $0x90] sm:$0xff]
    %v2652 = vld [vmem:[%s2632 + $0x98] sm:$0xff]
    %2657 = vrot.lane.b32.xlu0 %v2628, 98
    %v2658 = vpop.permute.xlu0 %2657
    %2659 = vrot.lane.b32.xlu0 %v2629, 98
    %v2660 = vpop.permute.xlu0 %2659
    %2661 = vrot.lane.b32.xlu0 %v2630, 98
    %v2662 = vpop.permute.xlu0 %2661
    %2663 = vrot.lane.b32.xlu0 %v2631, 98
    %v2664 = vpop.permute.xlu0 %2663
    %v2670 = vsel %vm209, %v2633, 0
    %v2673 = vsel %vm209, %v2634, 0
    %v2676 = vsel %vm209, %v2635, 0
    %v2679 = vsel %vm209, %v2636, 0
    %v2682 = vsel %vm209, %v2637, 0
    %v2685 = vsel %vm209, %v2638, 0
    %v2688 = vsel %vm209, %v2639, 0
    %v2691 = vsel %vm209, %v2640, 0
    %v2694 = vsel %vm209, %v2641, 0
    %v2697 = vsel %vm209, %v2642, 0
    %v2700 = vsel %vm209, %v2643, 0
    %v2703 = vsel %vm209, %v2644, 0
    %v2706 = vsel %vm209, %v2645, 0
    %v2709 = vsel %vm209, %v2646, 0
    %v2712 = vsel %vm209, %v2647, 0
    %v2715 = vsel %vm209, %v2648, 0
    %v2718 = vsel %vm209, %v2649, 0
    %v2721 = vsel %vm209, %v2650, 0
    %v2724 = vsel %vm209, %v2651, 0
    %v2727 = vsel %vm209, %v2652, 0
    %2729 = vmatprep.subr.mxu0 0.0
    %2730 = vmatpush1.msra.mxu0 %v2658
    %2731 = vmatprep.subr.mxu0 0.0
    %2732 = vmatpush1.msra.mxu0 %v2660
    %2733 = vmatprep.subr.mxu0 0.0
    %2734 = vmatpush1.msra.mxu0 %v2662
    %2735 = vmatprep.subr.mxu0 0.0
    %2736 = vmatpush1.msra.mxu0 %v2664
    %2737 = vmatprep.subr.mxu0 0.0
    %2738 = vmatpush1.msra.mxu0 0.0
    %2739 = vmatprep.subr.mxu0 0.0
    %2740 = vmatpush1.msra.mxu0 0.0
    %2741 = vmatprep.subr.mxu0 0.0
    %2742 = vmatpush1.msra.mxu0 0.0
    %2743 = vmatprep.subr.mxu0 0.0
    %2744 = vmatpush1.msra.mxu0 0.0
    %2745 = vmatprep.subr.mxu0 0.0
    %2746 = vmatpush1.msra.mxu0 0.0
    %2747 = vmatprep.subr.mxu0 0.0
    %2748 = vmatpush1.msra.mxu0 0.0
    %2749 = vmatprep.subr.mxu0 0.0
    %2750 = vmatpush1.msra.mxu0 0.0
    %2751 = vmatprep.subr.mxu0 0.0
    %2752 = vmatpush1.msra.mxu0 0.0
    %2753 = vmatprep.subr.mxu0 0.0
    %2754 = vmatpush1.msra.mxu0 0.0
    %2755 = vmatprep.subr.mxu0 0.0
    %2756 = vmatpush1.msra.mxu0 0.0
    %2757 = vmatprep.subr.mxu0 0.0
    %2758 = vmatpush1.msra.mxu0 0.0
    %2759 = vmatprep.subr.mxu0 0.0
    %2760 = vmatpush1.msra.mxu0 0.0
    %2761 = vmatprep.subr.mxu0 0.0
    %2762 = vmatpush1.msra.mxu0 0.0
    %2763 = vmatprep.subr.mxu0 0.0
    %2764 = vmatpush1.msra.mxu0 0.0
    %2765 = vmatprep.subr.mxu0 0.0
    %2766 = vmatpush1.msra.mxu0 0.0
    %2767 = vmatprep.subr.mxu0 0.0
    %2768 = vmatpush1.msra.mxu0 0.0
    %2769 = vmatprep.subr.mxu0 0.0
    %2770 = vmatpush1.msra.mxu0 0.0
    %2771 = vmatprep.subr.mxu0 0.0
    %2772 = vmatpush1.msra.mxu0 0.0
    %2773 = vmatprep.subr.mxu0 0.0
    %2774 = vmatpush1.msra.mxu0 0.0
    %2775 = vmatprep.subr.mxu0 0.0
    %2776 = vmatpush1.msra.mxu0 0.0
    %2777 = vmatprep.subr.mxu0 0.0
    %2778 = vmatpush1.msra.mxu0 0.0
    %2779 = vmatprep.subr.mxu0 0.0
    %2780 = vmatpush1.msra.mxu0 0.0
    %2781 = vmatprep.subr.mxu0 0.0
    %2782 = vmatpush1.msra.mxu0 0.0
    %2783 = vmatprep.subr.mxu0 0.0
    %2784 = vmatpush1.msra.mxu0 0.0
    %2785 = vmatprep.subr.mxu0 0.0
    %2786 = vmatpush1.msra.mxu0 0.0
    %2787 = vmatprep.subr.mxu0 0.0
    %2788 = vmatpush1.msra.mxu0 0.0
    %2789 = vmatprep.subr.mxu0 0.0
    %2790 = vmatpush1.msra.mxu0 0.0
    %2791 = vmatprep.subr.mxu0 0.0
    %2792 = vmatpush1.msra.mxu0 0.0
    %2793 = vmatprep.mubr.f32.mxu0 0.0
    %2794 = vmatmul.mubr.f32.gmra.mrb[0].mxu0 %v2670
    %v2795 = vpop.f32.mrb[0].mxu0
    %v2796 = vadd.f32 0.0, %v2795
    %v2797 = vpop.f32.mrb[0].mxu0
    %2798 = vmatprep.mubr.f32.mxu0 0.0
    %2799 = vmatmul.mubr.f32.gmra.mrb[0].mxu0 %v2673
    %v2800 = vpop.f32.mrb[0].mxu0
    %v2801 = vadd.f32 0.0, %v2800
    %v2802 = vpop.f32.mrb[0].mxu0
    %2803 = vmatprep.mubr.f32.mxu0 0.0
    %2804 = vmatmul.mubr.f32.gmra.mrb[0].mxu0 %v2676
    %v2805 = vpop.f32.mrb[0].mxu0
    %v2806 = vadd.f32 0.0, %v2805
    %v2807 = vpop.f32.mrb[0].mxu0
    %2808 = vmatprep.mubr.f32.mxu0 0.0
    %2809 = vmatmul.mubr.f32.gmra.mrb[0].mxu0 %v2679
    %v2810 = vpop.f32.mrb[0].mxu0
    %v2811 = vadd.f32 0.0, %v2810
    %v2812 = vpop.f32.mrb[0].mxu0
    %2813 = vmatprep.mubr.f32.mxu0 0.0
    %2814 = vmatmul.mubr.f32.gmra.mrb[0].mxu0 %v2682
    %v2815 = vpop.f32.mrb[0].mxu0
    %v2816 = vadd.f32 0.0, %v2815
    %v2817 = vpop.f32.mrb[0].mxu0
    %2818 = vmatprep.mubr.f32.mxu0 0.0
    %2819 = vmatmul.mubr.f32.gmra.mrb[0].mxu0 %v2685
    %v2820 = vpop.f32.mrb[0].mxu0
    %v2821 = vadd.f32 0.0, %v2820
    %v2822 = vpop.f32.mrb[0].mxu0
    %2823 = vmatprep.mubr.f32.mxu0 0.0
    %2824 = vmatmul.mubr.f32.gmra.mrb[0].mxu0 %v2688
    %v2825 = vpop.f32.mrb[0].mxu0
    %v2826 = vadd.f32 0.0, %v2825
    %v2827 = vpop.f32.mrb[0].mxu0
    %2828 = vmatprep.mubr.f32.mxu0 0.0
    %2829 = vmatmul.mubr.f32.gmra.mrb[0].mxu0 %v2691
    %v2830 = vpop.f32.mrb[0].mxu0
    %v2831 = vadd.f32 0.0, %v2830
    %v2832 = vpop.f32.mrb[0].mxu0
    %2833 = vmatprep.mubr.f32.mxu0 0.0
    %2834 = vmatmul.mubr.f32.gmra.mrb[0].mxu0 %v2694
    %v2835 = vpop.f32.mrb[0].mxu0
    %v2836 = vadd.f32 0.0, %v2835
    %v2837 = vpop.f32.mrb[0].mxu0
    %2838 = vmatprep.mubr.f32.mxu0 0.0
    %2839 = vmatmul.mubr.f32.gmra.mrb[0].mxu0 %v2697
    %v2840 = vpop.f32.mrb[0].mxu0
    %v2841 = vadd.f32 0.0, %v2840
    %v2842 = vpop.f32.mrb[0].mxu0
    %2843 = vmatprep.mubr.f32.mxu0 0.0
    %2844 = vmatmul.mubr.f32.gmra.mrb[0].mxu0 %v2700
    %v2845 = vpop.f32.mrb[0].mxu0
    %v2846 = vadd.f32 0.0, %v2845
    %v2847 = vpop.f32.mrb[0].mxu0
    %2848 = vmatprep.mubr.f32.mxu0 0.0
    %2849 = vmatmul.mubr.f32.gmra.mrb[0].mxu0 %v2703
    %v2850 = vpop.f32.mrb[0].mxu0
    %v2851 = vadd.f32 0.0, %v2850
    %v2852 = vpop.f32.mrb[0].mxu0
    %2853 = vmatprep.mubr.f32.mxu0 0.0
    %2854 = vmatmul.mubr.f32.gmra.mrb[0].mxu0 %v2706
    %v2855 = vpop.f32.mrb[0].mxu0
    %v2856 = vadd.f32 0.0, %v2855
    %v2857 = vpop.f32.mrb[0].mxu0
    %2858 = vmatprep.mubr.f32.mxu0 0.0
    %2859 = vmatmul.mubr.f32.gmra.mrb[0].mxu0 %v2709
    %v2860 = vpop.f32.mrb[0].mxu0
    %v2861 = vadd.f32 0.0, %v2860
    %v2862 = vpop.f32.mrb[0].mxu0
    %2863 = vmatprep.mubr.f32.mxu0 0.0
    %2864 = vmatmul.mubr.f32.gmra.mrb[0].mxu0 %v2712
    %v2865 = vpop.f32.mrb[0].mxu0
    %v2866 = vadd.f32 0.0, %v2865
    %v2867 = vpop.f32.mrb[0].mxu0
    %2868 = vmatprep.mubr.f32.mxu0 0.0
    %2869 = vmatmul.mubr.f32.gmra.mrb[0].mxu0 %v2715
    %v2870 = vpop.f32.mrb[0].mxu0
    %v2871 = vadd.f32 0.0, %v2870
    %v2872 = vpop.f32.mrb[0].mxu0
    %2873 = vmatprep.mubr.f32.mxu0 0.0
    %2874 = vmatmul.mubr.f32.gmra.mrb[0].mxu0 %v2718
    %v2875 = vpop.f32.mrb[0].mxu0
    %v2876 = vadd.f32 0.0, %v2875
    %v2877 = vpop.f32.mrb[0].mxu0
    %2878 = vmatprep.mubr.f32.mxu0 0.0
    %2879 = vmatmul.mubr.f32.gmra.mrb[0].mxu0 %v2721
    %v2880 = vpop.f32.mrb[0].mxu0
    %v2881 = vadd.f32 0.0, %v2880
    %v2882 = vpop.f32.mrb[0].mxu0
    %2883 = vmatprep.mubr.f32.mxu0 0.0
    %2884 = vmatmul.mubr.f32.gmra.mrb[0].mxu0 %v2724
    %v2885 = vpop.f32.mrb[0].mxu0
    %v2886 = vadd.f32 0.0, %v2885
    %v2887 = vpop.f32.mrb[0].mxu0
    %2888 = vmatprep.mubr.f32.mxu0 0.0
    %2889 = vmatmul.mubr.f32.gmra.mrb[0].mxu0 %v2727
    %v2890 = vpop.f32.mrb[0].mxu0
    %v2891 = vadd.f32 0.0, %v2890
    %v2892 = vpop.f32.mrb[0].mxu0
    %2893 = vdwg.mxu0
    %v2894 = vsel %vm436, %v2796, 0.0
    %v2895 = vsel %vm436, %v2801, 0.0
    %v2896 = vsel %vm436, %v2806, 0.0
    %v2897 = vsel %vm436, %v2811, 0.0
    %2898 = vrot.lane.b32.xlu0 %v2894, 32
    %v2899 = vpop.permute.xlu0 %2898
    %v2900 = vsel %vm441, %v2899, %v2894
    %2901 = vrot.lane.b32.xlu0 %v2895, 32
    %v2902 = vpop.permute.xlu0 %2901
    %v2903 = vsel %vm441, %v2902, %v2895
    %2904 = vrot.lane.b32.xlu0 %v2896, 32
    %v2905 = vpop.permute.xlu0 %2904
    %v2906 = vsel %vm441, %v2905, %v2896
    %2907 = vrot.lane.b32.xlu0 %v2897, 32
    %v2908 = vpop.permute.xlu0 %2907
    %v2909 = vsel %vm441, %v2908, %v2897
    %2910 = vrot.lane.b32.xlu0 %v2900, 32
    %v2911 = vpop.permute.xlu0 %2910
    %2912 = vrot.lane.b32.xlu0 %v2903, 32
    %v2913 = vpop.permute.xlu0 %2912
    %2914 = vrot.lane.b32.xlu0 %v2906, 32
    %v2915 = vpop.permute.xlu0 %2914
    %2916 = vrot.lane.b32.xlu0 %v2909, 32
    %v2917 = vpop.permute.xlu0 %2916
    %v2918 = vsel %vm441, %v2911, %v2894
    %v2919 = vsel %vm441, %v2913, %v2895
    %v2920 = vsel %vm441, %v2915, %v2896
    %v2921 = vsel %vm441, %v2917, %v2897
    %v2922 = vsel %vm467, %v2816, 0.0
    %v2923 = vsel %vm467, %v2821, 0.0
    %v2924 = vsel %vm467, %v2826, 0.0
    %v2925 = vsel %vm467, %v2831, 0.0
    %2926 = vrot.lane.b32.xlu0 %v2922, 32
    %v2927 = vpop.permute.xlu0 %2926
    %v2928 = vsel %vm441, %v2927, %v2922
    %2929 = vrot.lane.b32.xlu0 %v2923, 32
    %v2930 = vpop.permute.xlu0 %2929
    %v2931 = vsel %vm441, %v2930, %v2923
    %2932 = vrot.lane.b32.xlu0 %v2924, 32
    %v2933 = vpop.permute.xlu0 %2932
    %v2934 = vsel %vm441, %v2933, %v2924
    %2935 = vrot.lane.b32.xlu0 %v2925, 32
    %v2936 = vpop.permute.xlu0 %2935
    %v2937 = vsel %vm441, %v2936, %v2925
    %2938 = vrot.lane.b32.xlu0 %v2928, 32
    %v2939 = vpop.permute.xlu0 %2938
    %2940 = vrot.lane.b32.xlu0 %v2931, 32
    %v2941 = vpop.permute.xlu0 %2940
    %2942 = vrot.lane.b32.xlu0 %v2934, 32
    %v2943 = vpop.permute.xlu0 %2942
    %2944 = vrot.lane.b32.xlu0 %v2937, 32
    %v2945 = vpop.permute.xlu0 %2944
    %v2946 = vsel %vm441, %v2939, %v2922
    %v2947 = vsel %vm441, %v2941, %v2923
    %v2948 = vsel %vm441, %v2943, %v2924
    %v2949 = vsel %vm441, %v2945, %v2925
    %v2950 = vsel %vm497, %v2856, 0.0
    %v2951 = vsel %vm497, %v2861, 0.0
    %v2952 = vsel %vm497, %v2866, 0.0
    %v2953 = vsel %vm497, %v2871, 0.0
    %2954 = vrot.lane.b32.xlu0 %v2950, 32
    %v2955 = vpop.permute.xlu0 %2954
    %v2956 = vsel %vm441, %v2955, %v2950
    %2957 = vrot.lane.b32.xlu0 %v2951, 32
    %v2958 = vpop.permute.xlu0 %2957
    %v2959 = vsel %vm441, %v2958, %v2951
    %2960 = vrot.lane.b32.xlu0 %v2952, 32
    %v2961 = vpop.permute.xlu0 %2960
    %v2962 = vsel %vm441, %v2961, %v2952
    %2963 = vrot.lane.b32.xlu0 %v2953, 32
    %v2964 = vpop.permute.xlu0 %2963
    %v2965 = vsel %vm441, %v2964, %v2953
    %2966 = vrot.lane.b32.xlu0 %v2956, 32
    %v2967 = vpop.permute.xlu0 %2966
    %2968 = vrot.lane.b32.xlu0 %v2959, 32
    %v2969 = vpop.permute.xlu0 %2968
    %2970 = vrot.lane.b32.xlu0 %v2962, 32
    %v2971 = vpop.permute.xlu0 %2970
    %2972 = vrot.lane.b32.xlu0 %v2965, 32
    %v2973 = vpop.permute.xlu0 %2972
    %v2974 = vsel %vm441, %v2967, %v2950
    %v2975 = vsel %vm441, %v2969, %v2951
    %v2976 = vsel %vm441, %v2971, %v2952
    %v2977 = vsel %vm441, %v2973, %v2953
    %v2978 = vsel %vm527, %v2876, 0.0
    %v2979 = vsel %vm527, %v2881, 0.0
    %v2980 = vsel %vm527, %v2886, 0.0
    %v2981 = vsel %vm527, %v2891, 0.0
    %2982 = vrot.lane.b32.xlu0 %v2978, 32
    %v2983 = vpop.permute.xlu0 %2982
    %v2984 = vsel %vm441, %v2983, %v2978
    %2985 = vrot.lane.b32.xlu0 %v2979, 32
    %v2986 = vpop.permute.xlu0 %2985
    %v2987 = vsel %vm441, %v2986, %v2979
    %2988 = vrot.lane.b32.xlu0 %v2980, 32
    %v2989 = vpop.permute.xlu0 %2988
    %v2990 = vsel %vm441, %v2989, %v2980
    %2991 = vrot.lane.b32.xlu0 %v2981, 32
    %v2992 = vpop.permute.xlu0 %2991
    %v2993 = vsel %vm441, %v2992, %v2981
    %2994 = vrot.lane.b32.xlu0 %v2984, 32
    %v2995 = vpop.permute.xlu0 %2994
    %2996 = vrot.lane.b32.xlu0 %v2987, 32
    %v2997 = vpop.permute.xlu0 %2996
    %2998 = vrot.lane.b32.xlu0 %v2990, 32
    %v2999 = vpop.permute.xlu0 %2998
    %3000 = vrot.lane.b32.xlu0 %v2993, 32
    %v3001 = vpop.permute.xlu0 %3000
    %v3002 = vsel %vm441, %v2995, %v2978
    %v3003 = vsel %vm441, %v2997, %v2979
    %v3004 = vsel %vm441, %v2999, %v2980
    %v3005 = vsel %vm441, %v3001, %v2981
    %3010 = vrot.lane.b32.xlu0 %v2946, 127
    %v3011 = vpop.permute.xlu0 %3010
    %3012 = vrot.lane.b32.xlu0 %v2947, 127
    %v3013 = vpop.permute.xlu0 %3012
    %3014 = vrot.lane.b32.xlu0 %v2948, 127
    %v3015 = vpop.permute.xlu0 %3014
    %3016 = vrot.lane.b32.xlu0 %v2949, 127
    %v3017 = vpop.permute.xlu0 %3016
    %v3022 = vadd.f32 %v2918, %v3011
    %v3023 = vadd.f32 %v2919, %v3013
    %v3024 = vadd.f32 %v2920, %v3015
    %v3025 = vadd.f32 %v2921, %v3017
    %3030 = vrot.lane.b32.xlu0 %v2974, 127
    %v3031 = vpop.permute.xlu0 %3030
    %3032 = vrot.lane.b32.xlu0 %v2975, 127
    %v3033 = vpop.permute.xlu0 %3032
    %3034 = vrot.lane.b32.xlu0 %v2976, 127
    %v3035 = vpop.permute.xlu0 %3034
    %3036 = vrot.lane.b32.xlu0 %v2977, 127
    %v3037 = vpop.permute.xlu0 %3036
    %v3042 = vadd.f32 %v2836, %v3031
    %v3043 = vadd.f32 %v2841, %v3033
    %v3044 = vadd.f32 %v2846, %v3035
    %v3045 = vadd.f32 %v2851, %v3037
    %3050 = vrot.lane.b32.xlu0 %v3042, 30
    %v3051 = vpop.permute.xlu0 %3050
    %3052 = vrot.lane.b32.xlu0 %v3043, 30
    %v3053 = vpop.permute.xlu0 %3052
    %3054 = vrot.lane.b32.xlu0 %v3044, 30
    %v3055 = vpop.permute.xlu0 %3054
    %3056 = vrot.lane.b32.xlu0 %v3045, 30
    %v3057 = vpop.permute.xlu0 %3056
    %v3062 = vadd.f32 %v3022, %v3051
    %v3063 = vadd.f32 %v3023, %v3053
    %v3064 = vadd.f32 %v3024, %v3055
    %v3065 = vadd.f32 %v3025, %v3057
    %3070 = vrot.lane.b32.xlu0 %v3002, 28
    %v3071 = vpop.permute.xlu0 %3070
    %3072 = vrot.lane.b32.xlu0 %v3003, 28
    %v3073 = vpop.permute.xlu0 %3072
    %3074 = vrot.lane.b32.xlu0 %v3004, 28
    %v3075 = vpop.permute.xlu0 %3074
    %3076 = vrot.lane.b32.xlu0 %v3005, 28
    %v3077 = vpop.permute.xlu0 %3076
    %v3082 = vadd.f32 %v3062, %v3071
    %v3083 = vadd.f32 %v3063, %v3073
    %v3084 = vadd.f32 %v3064, %v3075
    %v3085 = vadd.f32 %v3065, %v3077
    %s3086 = scalar_lea.vmem %s4, 160
    %v3087 = vld [vmem:[%s3086] sm:$0xff]
    %v3088 = vld [vmem:[%s3086 + $0x8] sm:$0xff]
    %v3089 = vld [vmem:[%s3086 + $0x10] sm:$0xff]
    %v3090 = vld [vmem:[%s3086 + $0x18] sm:$0xff]
    %3092 = vset.pattern.permute.xlu0 0
    %3093 = vperm.xlu0 %3092, %v3087
    %v3094 = vpop.permute.xlu0 %3093
    %3097 = vset.pattern.permute.xlu0 0
    %3098 = vperm.xlu0 %3097, %v3088
    %v3099 = vpop.permute.xlu0 %3098
    %3102 = vset.pattern.permute.xlu0 0
    %3103 = vperm.xlu0 %3102, %v3089
    %v3104 = vpop.permute.xlu0 %3103
    %3107 = vset.pattern.permute.xlu0 0
    %3108 = vperm.xlu0 %3107, %v3090
    %v3109 = vpop.permute.xlu0 %3108
    %v3111 = vadd.f32 %v3082, %v3094
    %v3112 = vadd.f32 %v3083, %v3099
    %v3113 = vadd.f32 %v3084, %v3104
    %v3114 = vadd.f32 %v3085, %v3109
    %v3115 = vmul.f32 %v3111, 0.3
    %v3116 = vmul.f32 %v3112, 0.3
    %v3117 = vmul.f32 %v3113, 0.3
    %v3118 = vmul.f32 %v3114, 0.3
    %3123 = vrot.lane.b32.xlu0 %v3115, 98
    %v3124 = vpop.permute.xlu0 %3123
    %3125 = vrot.lane.b32.xlu0 %v3116, 98
    %v3126 = vpop.permute.xlu0 %3125
    %3127 = vrot.lane.b32.xlu0 %v3117, 98
    %v3128 = vpop.permute.xlu0 %3127
    %3129 = vrot.lane.b32.xlu0 %v3118, 98
    %v3130 = vpop.permute.xlu0 %3129
    %v3135 = vadd.f32 %v2153, %v3124
    %v3136 = vadd.f32 %v2154, %v3126
    %v3137 = vadd.f32 %v2155, %v3128
    %v3138 = vadd.f32 %v2156, %v3130
    %v3139 = vmax.f32 %v3135, 0.0
    %v3140 = vmax.f32 %v3136, 0.0
    %v3141 = vmax.f32 %v3137, 0.0
    %v3142 = vmax.f32 %v3138, 0.0
    %s3143 = scalar_lea.vmem %s3, 960
    %v3144 = vld [vmem:[%s3143] sm:$0xff]
    %v3145 = vld [vmem:[%s3143 + $0x8] sm:$0xff]
    %v3146 = vld [vmem:[%s3143 + $0x10] sm:$0xff]
    %v3147 = vld [vmem:[%s3143 + $0x18] sm:$0xff]
    %v3148 = vld [vmem:[%s3143 + $0x20] sm:$0xff]
    %v3149 = vld [vmem:[%s3143 + $0x28] sm:$0xff]
    %v3150 = vld [vmem:[%s3143 + $0x30] sm:$0xff]
    %v3151 = vld [vmem:[%s3143 + $0x38] sm:$0xff]
    %v3152 = vld [vmem:[%s3143 + $0x40] sm:$0xff]
    %v3153 = vld [vmem:[%s3143 + $0x48] sm:$0xff]
    %v3154 = vld [vmem:[%s3143 + $0x50] sm:$0xff]
    %v3155 = vld [vmem:[%s3143 + $0x58] sm:$0xff]
    %v3156 = vld [vmem:[%s3143 + $0x60] sm:$0xff]
    %v3157 = vld [vmem:[%s3143 + $0x68] sm:$0xff]
    %v3158 = vld [vmem:[%s3143 + $0x70] sm:$0xff]
    %v3159 = vld [vmem:[%s3143 + $0x78] sm:$0xff]
    %v3160 = vld [vmem:[%s3143 + $0x80] sm:$0xff]
    %v3161 = vld [vmem:[%s3143 + $0x88] sm:$0xff]
    %v3162 = vld [vmem:[%s3143 + $0x90] sm:$0xff]
    %v3163 = vld [vmem:[%s3143 + $0x98] sm:$0xff]
    %v3165 = vsel %vm209, %v3144, 0
    %v3168 = vsel %vm209, %v3145, 0
    %v3171 = vsel %vm209, %v3146, 0
    %v3174 = vsel %vm209, %v3147, 0
    %v3177 = vsel %vm209, %v3148, 0
    %v3180 = vsel %vm209, %v3149, 0
    %v3183 = vsel %vm209, %v3150, 0
    %v3186 = vsel %vm209, %v3151, 0
    %v3189 = vsel %vm209, %v3152, 0
    %v3192 = vsel %vm209, %v3153, 0
    %v3195 = vsel %vm209, %v3154, 0
    %v3198 = vsel %vm209, %v3155, 0
    %v3201 = vsel %vm209, %v3156, 0
    %v3204 = vsel %vm209, %v3157, 0
    %v3207 = vsel %vm209, %v3158, 0
    %v3210 = vsel %vm209, %v3159, 0
    %v3213 = vsel %vm209, %v3160, 0
    %v3216 = vsel %vm209, %v3161, 0
    %v3219 = vsel %vm209, %v3162, 0
    %v3222 = vsel %vm209, %v3163, 0
    %3224 = vmatprep.subr.mxu0 0.0
    %3225 = vmatpush1.msra.mxu0 %v3139
    %3226 = vmatprep.subr.mxu0 0.0
    %3227 = vmatpush1.msra.mxu0 %v3140
    %3228 = vmatprep.subr.mxu0 0.0
    %3229 = vmatpush1.msra.mxu0 %v3141
    %3230 = vmatprep.subr.mxu0 0.0
    %3231 = vmatpush1.msra.mxu0 %v3142
    %3232 = vmatprep.subr.mxu0 0.0
    %3233 = vmatpush1.msra.mxu0 0.0
    %3234 = vmatprep.subr.mxu0 0.0
    %3235 = vmatpush1.msra.mxu0 0.0
    %3236 = vmatprep.subr.mxu0 0.0
    %3237 = vmatpush1.msra.mxu0 0.0
    %3238 = vmatprep.subr.mxu0 0.0
    %3239 = vmatpush1.msra.mxu0 0.0
    %3240 = vmatprep.subr.mxu0 0.0
    %3241 = vmatpush1.msra.mxu0 0.0
    %3242 = vmatprep.subr.mxu0 0.0
    %3243 = vmatpush1.msra.mxu0 0.0
    %3244 = vmatprep.subr.mxu0 0.0
    %3245 = vmatpush1.msra.mxu0 0.0
    %3246 = vmatprep.subr.mxu0 0.0
    %3247 = vmatpush1.msra.mxu0 0.0
    %3248 = vmatprep.subr.mxu0 0.0
    %3249 = vmatpush1.msra.mxu0 0.0
    %3250 = vmatprep.subr.mxu0 0.0
    %3251 = vmatpush1.msra.mxu0 0.0
    %3252 = vmatprep.subr.mxu0 0.0
    %3253 = vmatpush1.msra.mxu0 0.0
    %3254 = vmatprep.subr.mxu0 0.0
    %3255 = vmatpush1.msra.mxu0 0.0
    %3256 = vmatprep.subr.mxu0 0.0
    %3257 = vmatpush1.msra.mxu0 0.0
    %3258 = vmatprep.subr.mxu0 0.0
    %3259 = vmatpush1.msra.mxu0 0.0
    %3260 = vmatprep.subr.mxu0 0.0
    %3261 = vmatpush1.msra.mxu0 0.0
    %3262 = vmatprep.subr.mxu0 0.0
    %3263 = vmatpush1.msra.mxu0 0.0
    %3264 = vmatprep.subr.mxu0 0.0
    %3265 = vmatpush1.msra.mxu0 0.0
    %3266 = vmatprep.subr.mxu0 0.0
    %3267 = vmatpush1.msra.mxu0 0.0
    %3268 = vmatprep.subr.mxu0 0.0
    %3269 = vmatpush1.msra.mxu0 0.0
    %3270 = vmatprep.subr.mxu0 0.0
    %3271 = vmatpush1.msra.mxu0 0.0
    %3272 = vmatprep.subr.mxu0 0.0
    %3273 = vmatpush1.msra.mxu0 0.0
    %3274 = vmatprep.subr.mxu0 0.0
    %3275 = vmatpush1.msra.mxu0 0.0
    %3276 = vmatprep.subr.mxu0 0.0
    %3277 = vmatpush1.msra.mxu0 0.0
    %3278 = vmatprep.subr.mxu0 0.0
    %3279 = vmatpush1.msra.mxu0 0.0
    %3280 = vmatprep.subr.mxu0 0.0
    %3281 = vmatpush1.msra.mxu0 0.0
    %3282 = vmatprep.subr.mxu0 0.0
    %3283 = vmatpush1.msra.mxu0 0.0
    %3284 = vmatprep.subr.mxu0 0.0
    %3285 = vmatpush1.msra.mxu0 0.0
    %3286 = vmatprep.subr.mxu0 0.0
    %3287 = vmatpush1.msra.mxu0 0.0
    %3288 = vmatprep.mubr.f32.mxu0 0.0
    %3289 = vmatmul.mubr.f32.gmra.mrb[0].mxu0 %v3165
    %v3290 = vpop.f32.mrb[0].mxu0
    %v3291 = vadd.f32 0.0, %v3290
    %v3292 = vpop.f32.mrb[0].mxu0
    %3293 = vmatprep.mubr.f32.mxu0 0.0
    %3294 = vmatmul.mubr.f32.gmra.mrb[0].mxu0 %v3168
    %v3295 = vpop.f32.mrb[0].mxu0
    %v3296 = vadd.f32 0.0, %v3295
    %v3297 = vpop.f32.mrb[0].mxu0
    %3298 = vmatprep.mubr.f32.mxu0 0.0
    %3299 = vmatmul.mubr.f32.gmra.mrb[0].mxu0 %v3171
    %v3300 = vpop.f32.mrb[0].mxu0
    %v3301 = vadd.f32 0.0, %v3300
    %v3302 = vpop.f32.mrb[0].mxu0
    %3303 = vmatprep.mubr.f32.mxu0 0.0
    %3304 = vmatmul.mubr.f32.gmra.mrb[0].mxu0 %v3174
    %v3305 = vpop.f32.mrb[0].mxu0
    %v3306 = vadd.f32 0.0, %v3305
    %v3307 = vpop.f32.mrb[0].mxu0
    %3308 = vmatprep.mubr.f32.mxu0 0.0
    %3309 = vmatmul.mubr.f32.gmra.mrb[0].mxu0 %v3177
    %v3310 = vpop.f32.mrb[0].mxu0
    %v3311 = vadd.f32 0.0, %v3310
    %v3312 = vpop.f32.mrb[0].mxu0
    %3313 = vmatprep.mubr.f32.mxu0 0.0
    %3314 = vmatmul.mubr.f32.gmra.mrb[0].mxu0 %v3180
    %v3315 = vpop.f32.mrb[0].mxu0
    %v3316 = vadd.f32 0.0, %v3315
    %v3317 = vpop.f32.mrb[0].mxu0
    %3318 = vmatprep.mubr.f32.mxu0 0.0
    %3319 = vmatmul.mubr.f32.gmra.mrb[0].mxu0 %v3183
    %v3320 = vpop.f32.mrb[0].mxu0
    %v3321 = vadd.f32 0.0, %v3320
    %v3322 = vpop.f32.mrb[0].mxu0
    %3323 = vmatprep.mubr.f32.mxu0 0.0
    %3324 = vmatmul.mubr.f32.gmra.mrb[0].mxu0 %v3186
    %v3325 = vpop.f32.mrb[0].mxu0
    %v3326 = vadd.f32 0.0, %v3325
    %v3327 = vpop.f32.mrb[0].mxu0
    %3328 = vmatprep.mubr.f32.mxu0 0.0
    %3329 = vmatmul.mubr.f32.gmra.mrb[0].mxu0 %v3189
    %v3330 = vpop.f32.mrb[0].mxu0
    %v3331 = vadd.f32 0.0, %v3330
    %v3332 = vpop.f32.mrb[0].mxu0
    %3333 = vmatprep.mubr.f32.mxu0 0.0
    %3334 = vmatmul.mubr.f32.gmra.mrb[0].mxu0 %v3192
    %v3335 = vpop.f32.mrb[0].mxu0
    %v3336 = vadd.f32 0.0, %v3335
    %v3337 = vpop.f32.mrb[0].mxu0
    %3338 = vmatprep.mubr.f32.mxu0 0.0
    %3339 = vmatmul.mubr.f32.gmra.mrb[0].mxu0 %v3195
    %v3340 = vpop.f32.mrb[0].mxu0
    %v3341 = vadd.f32 0.0, %v3340
    %v3342 = vpop.f32.mrb[0].mxu0
    %3343 = vmatprep.mubr.f32.mxu0 0.0
    %3344 = vmatmul.mubr.f32.gmra.mrb[0].mxu0 %v3198
    %v3345 = vpop.f32.mrb[0].mxu0
    %v3346 = vadd.f32 0.0, %v3345
    %v3347 = vpop.f32.mrb[0].mxu0
    %3348 = vmatprep.mubr.f32.mxu0 0.0
    %3349 = vmatmul.mubr.f32.gmra.mrb[0].mxu0 %v3201
    %v3350 = vpop.f32.mrb[0].mxu0
    %v3351 = vadd.f32 0.0, %v3350
    %v3352 = vpop.f32.mrb[0].mxu0
    %3353 = vmatprep.mubr.f32.mxu0 0.0
    %3354 = vmatmul.mubr.f32.gmra.mrb[0].mxu0 %v3204
    %v3355 = vpop.f32.mrb[0].mxu0
    %v3356 = vadd.f32 0.0, %v3355
    %v3357 = vpop.f32.mrb[0].mxu0
    %3358 = vmatprep.mubr.f32.mxu0 0.0
    %3359 = vmatmul.mubr.f32.gmra.mrb[0].mxu0 %v3207
    %v3360 = vpop.f32.mrb[0].mxu0
    %v3361 = vadd.f32 0.0, %v3360
    %v3362 = vpop.f32.mrb[0].mxu0
    %3363 = vmatprep.mubr.f32.mxu0 0.0
    %3364 = vmatmul.mubr.f32.gmra.mrb[0].mxu0 %v3210
    %v3365 = vpop.f32.mrb[0].mxu0
    %v3366 = vadd.f32 0.0, %v3365
    %v3367 = vpop.f32.mrb[0].mxu0
    %3368 = vmatprep.mubr.f32.mxu0 0.0
    %3369 = vmatmul.mubr.f32.gmra.mrb[0].mxu0 %v3213
    %v3370 = vpop.f32.mrb[0].mxu0
    %v3371 = vadd.f32 0.0, %v3370
    %v3372 = vpop.f32.mrb[0].mxu0
    %3373 = vmatprep.mubr.f32.mxu0 0.0
    %3374 = vmatmul.mubr.f32.gmra.mrb[0].mxu0 %v3216
    %v3375 = vpop.f32.mrb[0].mxu0
    %v3376 = vadd.f32 0.0, %v3375
    %v3377 = vpop.f32.mrb[0].mxu0
    %3378 = vmatprep.mubr.f32.mxu0 0.0
    %3379 = vmatmul.mubr.f32.gmra.mrb[0].mxu0 %v3219
    %v3380 = vpop.f32.mrb[0].mxu0
    %v3381 = vadd.f32 0.0, %v3380
    %v3382 = vpop.f32.mrb[0].mxu0
    %3383 = vmatprep.mubr.f32.mxu0 0.0
    %3384 = vmatmul.mubr.f32.gmra.mrb[0].mxu0 %v3222
    %v3385 = vpop.f32.mrb[0].mxu0
    %v3386 = vadd.f32 0.0, %v3385
    %v3387 = vpop.f32.mrb[0].mxu0
    %3388 = vdwg.mxu0
    %v3389 = vsel %vm436, %v3291, 0.0
    %v3390 = vsel %vm436, %v3296, 0.0
    %v3391 = vsel %vm436, %v3301, 0.0
    %v3392 = vsel %vm436, %v3306, 0.0
    %3393 = vrot.lane.b32.xlu0 %v3389, 32
    %v3394 = vpop.permute.xlu0 %3393
    %v3395 = vsel %vm441, %v3394, %v3389
    %3396 = vrot.lane.b32.xlu0 %v3390, 32
    %v3397 = vpop.permute.xlu0 %3396
    %v3398 = vsel %vm441, %v3397, %v3390
    %3399 = vrot.lane.b32.xlu0 %v3391, 32
    %v3400 = vpop.permute.xlu0 %3399
    %v3401 = vsel %vm441, %v3400, %v3391
    %3402 = vrot.lane.b32.xlu0 %v3392, 32
    %v3403 = vpop.permute.xlu0 %3402
    %v3404 = vsel %vm441, %v3403, %v3392
    %3405 = vrot.lane.b32.xlu0 %v3395, 32
    %v3406 = vpop.permute.xlu0 %3405
    %3407 = vrot.lane.b32.xlu0 %v3398, 32
    %v3408 = vpop.permute.xlu0 %3407
    %3409 = vrot.lane.b32.xlu0 %v3401, 32
    %v3410 = vpop.permute.xlu0 %3409
    %3411 = vrot.lane.b32.xlu0 %v3404, 32
    %v3412 = vpop.permute.xlu0 %3411
    %v3413 = vsel %vm441, %v3406, %v3389
    %v3414 = vsel %vm441, %v3408, %v3390
    %v3415 = vsel %vm441, %v3410, %v3391
    %v3416 = vsel %vm441, %v3412, %v3392
    %v3417 = vsel %vm467, %v3311, 0.0
    %v3418 = vsel %vm467, %v3316, 0.0
    %v3419 = vsel %vm467, %v3321, 0.0
    %v3420 = vsel %vm467, %v3326, 0.0
    %3421 = vrot.lane.b32.xlu0 %v3417, 32
    %v3422 = vpop.permute.xlu0 %3421
    %v3423 = vsel %vm441, %v3422, %v3417
    %3424 = vrot.lane.b32.xlu0 %v3418, 32
    %v3425 = vpop.permute.xlu0 %3424
    %v3426 = vsel %vm441, %v3425, %v3418
    %3427 = vrot.lane.b32.xlu0 %v3419, 32
    %v3428 = vpop.permute.xlu0 %3427
    %v3429 = vsel %vm441, %v3428, %v3419
    %3430 = vrot.lane.b32.xlu0 %v3420, 32
    %v3431 = vpop.permute.xlu0 %3430
    %v3432 = vsel %vm441, %v3431, %v3420
    %3433 = vrot.lane.b32.xlu0 %v3423, 32
    %v3434 = vpop.permute.xlu0 %3433
    %3435 = vrot.lane.b32.xlu0 %v3426, 32
    %v3436 = vpop.permute.xlu0 %3435
    %3437 = vrot.lane.b32.xlu0 %v3429, 32
    %v3438 = vpop.permute.xlu0 %3437
    %3439 = vrot.lane.b32.xlu0 %v3432, 32
    %v3440 = vpop.permute.xlu0 %3439
    %v3441 = vsel %vm441, %v3434, %v3417
    %v3442 = vsel %vm441, %v3436, %v3418
    %v3443 = vsel %vm441, %v3438, %v3419
    %v3444 = vsel %vm441, %v3440, %v3420
    %v3445 = vsel %vm497, %v3351, 0.0
    %v3446 = vsel %vm497, %v3356, 0.0
    %v3447 = vsel %vm497, %v3361, 0.0
    %v3448 = vsel %vm497, %v3366, 0.0
    %3449 = vrot.lane.b32.xlu0 %v3445, 32
    %v3450 = vpop.permute.xlu0 %3449
    %v3451 = vsel %vm441, %v3450, %v3445
    %3452 = vrot.lane.b32.xlu0 %v3446, 32
    %v3453 = vpop.permute.xlu0 %3452
    %v3454 = vsel %vm441, %v3453, %v3446
    %3455 = vrot.lane.b32.xlu0 %v3447, 32
    %v3456 = vpop.permute.xlu0 %3455
    %v3457 = vsel %vm441, %v3456, %v3447
    %3458 = vrot.lane.b32.xlu0 %v3448, 32
    %v3459 = vpop.permute.xlu0 %3458
    %v3460 = vsel %vm441, %v3459, %v3448
    %3461 = vrot.lane.b32.xlu0 %v3451, 32
    %v3462 = vpop.permute.xlu0 %3461
    %3463 = vrot.lane.b32.xlu0 %v3454, 32
    %v3464 = vpop.permute.xlu0 %3463
    %3465 = vrot.lane.b32.xlu0 %v3457, 32
    %v3466 = vpop.permute.xlu0 %3465
    %3467 = vrot.lane.b32.xlu0 %v3460, 32
    %v3468 = vpop.permute.xlu0 %3467
    %v3469 = vsel %vm441, %v3462, %v3445
    %v3470 = vsel %vm441, %v3464, %v3446
    %v3471 = vsel %vm441, %v3466, %v3447
    %v3472 = vsel %vm441, %v3468, %v3448
    %v3473 = vsel %vm527, %v3371, 0.0
    %v3474 = vsel %vm527, %v3376, 0.0
    %v3475 = vsel %vm527, %v3381, 0.0
    %v3476 = vsel %vm527, %v3386, 0.0
    %3477 = vrot.lane.b32.xlu0 %v3473, 32
    %v3478 = vpop.permute.xlu0 %3477
    %v3479 = vsel %vm441, %v3478, %v3473
    %3480 = vrot.lane.b32.xlu0 %v3474, 32
    %v3481 = vpop.permute.xlu0 %3480
    %v3482 = vsel %vm441, %v3481, %v3474
    %3483 = vrot.lane.b32.xlu0 %v3475, 32
    %v3484 = vpop.permute.xlu0 %3483
    %v3485 = vsel %vm441, %v3484, %v3475
    %3486 = vrot.lane.b32.xlu0 %v3476, 32
    %v3487 = vpop.permute.xlu0 %3486
    %v3488 = vsel %vm441, %v3487, %v3476
    %3489 = vrot.lane.b32.xlu0 %v3479, 32
    %v3490 = vpop.permute.xlu0 %3489
    %3491 = vrot.lane.b32.xlu0 %v3482, 32
    %v3492 = vpop.permute.xlu0 %3491
    %3493 = vrot.lane.b32.xlu0 %v3485, 32
    %v3494 = vpop.permute.xlu0 %3493
    %3495 = vrot.lane.b32.xlu0 %v3488, 32
    %v3496 = vpop.permute.xlu0 %3495
    %v3497 = vsel %vm441, %v3490, %v3473
    %v3498 = vsel %vm441, %v3492, %v3474
    %v3499 = vsel %vm441, %v3494, %v3475
    %v3500 = vsel %vm441, %v3496, %v3476
    %3505 = vrot.lane.b32.xlu0 %v3441, 127
    %v3506 = vpop.permute.xlu0 %3505
    %3507 = vrot.lane.b32.xlu0 %v3442, 127
    %v3508 = vpop.permute.xlu0 %3507
    %3509 = vrot.lane.b32.xlu0 %v3443, 127
    %v3510 = vpop.permute.xlu0 %3509
    %3511 = vrot.lane.b32.xlu0 %v3444, 127
    %v3512 = vpop.permute.xlu0 %3511
    %v3517 = vadd.f32 %v3413, %v3506
    %v3518 = vadd.f32 %v3414, %v3508
    %v3519 = vadd.f32 %v3415, %v3510
    %v3520 = vadd.f32 %v3416, %v3512
    %3525 = vrot.lane.b32.xlu0 %v3469, 127
    %v3526 = vpop.permute.xlu0 %3525
    %3527 = vrot.lane.b32.xlu0 %v3470, 127
    %v3528 = vpop.permute.xlu0 %3527
    %3529 = vrot.lane.b32.xlu0 %v3471, 127
    %v3530 = vpop.permute.xlu0 %3529
    %3531 = vrot.lane.b32.xlu0 %v3472, 127
    %v3532 = vpop.permute.xlu0 %3531
    %v3537 = vadd.f32 %v3331, %v3526
    %v3538 = vadd.f32 %v3336, %v3528
    %v3539 = vadd.f32 %v3341, %v3530
    %v3540 = vadd.f32 %v3346, %v3532
    %3545 = vrot.lane.b32.xlu0 %v3537, 30
    %v3546 = vpop.permute.xlu0 %3545
    %3547 = vrot.lane.b32.xlu0 %v3538, 30
    %v3548 = vpop.permute.xlu0 %3547
    %3549 = vrot.lane.b32.xlu0 %v3539, 30
    %v3550 = vpop.permute.xlu0 %3549
    %3551 = vrot.lane.b32.xlu0 %v3540, 30
    %v3552 = vpop.permute.xlu0 %3551
    %v3557 = vadd.f32 %v3517, %v3546
    %v3558 = vadd.f32 %v3518, %v3548
    %v3559 = vadd.f32 %v3519, %v3550
    %v3560 = vadd.f32 %v3520, %v3552
    %3565 = vrot.lane.b32.xlu0 %v3497, 28
    %v3566 = vpop.permute.xlu0 %3565
    %3567 = vrot.lane.b32.xlu0 %v3498, 28
    %v3568 = vpop.permute.xlu0 %3567
    %3569 = vrot.lane.b32.xlu0 %v3499, 28
    %v3570 = vpop.permute.xlu0 %3569
    %3571 = vrot.lane.b32.xlu0 %v3500, 28
    %v3572 = vpop.permute.xlu0 %3571
    %v3577 = vadd.f32 %v3557, %v3566
    %v3578 = vadd.f32 %v3558, %v3568
    %v3579 = vadd.f32 %v3559, %v3570
    %v3580 = vadd.f32 %v3560, %v3572
    %s3581 = scalar_lea.vmem %s4, 192
    %v3582 = vld [vmem:[%s3581] sm:$0xff]
    %v3583 = vld [vmem:[%s3581 + $0x8] sm:$0xff]
    %v3584 = vld [vmem:[%s3581 + $0x10] sm:$0xff]
    %v3585 = vld [vmem:[%s3581 + $0x18] sm:$0xff]
    %3587 = vset.pattern.permute.xlu0 0
    %3588 = vperm.xlu0 %3587, %v3582
    %v3589 = vpop.permute.xlu0 %3588
    %3592 = vset.pattern.permute.xlu0 0
    %3593 = vperm.xlu0 %3592, %v3583
    %v3594 = vpop.permute.xlu0 %3593
    %3597 = vset.pattern.permute.xlu0 0
    %3598 = vperm.xlu0 %3597, %v3584
    %v3599 = vpop.permute.xlu0 %3598
    %3602 = vset.pattern.permute.xlu0 0
    %3603 = vperm.xlu0 %3602, %v3585
    %v3604 = vpop.permute.xlu0 %3603
    %v3606 = vadd.f32 %v3577, %v3589
    %v3607 = vadd.f32 %v3578, %v3594
    %v3608 = vadd.f32 %v3579, %v3599
    %v3609 = vadd.f32 %v3580, %v3604
    %v3610 = vmax.f32 %v3606, 0.0
    %v3611 = vmax.f32 %v3607, 0.0
    %v3612 = vmax.f32 %v3608, 0.0
    %v3613 = vmax.f32 %v3609, 0.0
    %s3614 = scalar_lea.vmem %s3, 1120
    %v3615 = vld [vmem:[%s3614] sm:$0xff]
    %v3616 = vld [vmem:[%s3614 + $0x8] sm:$0xff]
    %v3617 = vld [vmem:[%s3614 + $0x10] sm:$0xff]
    %v3618 = vld [vmem:[%s3614 + $0x18] sm:$0xff]
    %v3619 = vld [vmem:[%s3614 + $0x20] sm:$0xff]
    %v3620 = vld [vmem:[%s3614 + $0x28] sm:$0xff]
    %v3621 = vld [vmem:[%s3614 + $0x30] sm:$0xff]
    %v3622 = vld [vmem:[%s3614 + $0x38] sm:$0xff]
    %v3623 = vld [vmem:[%s3614 + $0x40] sm:$0xff]
    %v3624 = vld [vmem:[%s3614 + $0x48] sm:$0xff]
    %v3625 = vld [vmem:[%s3614 + $0x50] sm:$0xff]
    %v3626 = vld [vmem:[%s3614 + $0x58] sm:$0xff]
    %v3627 = vld [vmem:[%s3614 + $0x60] sm:$0xff]
    %v3628 = vld [vmem:[%s3614 + $0x68] sm:$0xff]
    %v3629 = vld [vmem:[%s3614 + $0x70] sm:$0xff]
    %v3630 = vld [vmem:[%s3614 + $0x78] sm:$0xff]
    %v3631 = vld [vmem:[%s3614 + $0x80] sm:$0xff]
    %v3632 = vld [vmem:[%s3614 + $0x88] sm:$0xff]
    %v3633 = vld [vmem:[%s3614 + $0x90] sm:$0xff]
    %v3634 = vld [vmem:[%s3614 + $0x98] sm:$0xff]
    %3639 = vrot.lane.b32.xlu0 %v3610, 98
    %v3640 = vpop.permute.xlu0 %3639
    %3641 = vrot.lane.b32.xlu0 %v3611, 98
    %v3642 = vpop.permute.xlu0 %3641
    %3643 = vrot.lane.b32.xlu0 %v3612, 98
    %v3644 = vpop.permute.xlu0 %3643
    %3645 = vrot.lane.b32.xlu0 %v3613, 98
    %v3646 = vpop.permute.xlu0 %3645
    %v3652 = vsel %vm209, %v3615, 0
    %v3655 = vsel %vm209, %v3616, 0
    %v3658 = vsel %vm209, %v3617, 0
    %v3661 = vsel %vm209, %v3618, 0
    %v3664 = vsel %vm209, %v3619, 0
    %v3667 = vsel %vm209, %v3620, 0
    %v3670 = vsel %vm209, %v3621, 0
    %v3673 = vsel %vm209, %v3622, 0
    %v3676 = vsel %vm209, %v3623, 0
    %v3679 = vsel %vm209, %v3624, 0
    %v3682 = vsel %vm209, %v3625, 0
    %v3685 = vsel %vm209, %v3626, 0
    %v3688 = vsel %vm209, %v3627, 0
    %v3691 = vsel %vm209, %v3628, 0
    %v3694 = vsel %vm209, %v3629, 0
    %v3697 = vsel %vm209, %v3630, 0
    %v3700 = vsel %vm209, %v3631, 0
    %v3703 = vsel %vm209, %v3632, 0
    %v3706 = vsel %vm209, %v3633, 0
    %v3709 = vsel %vm209, %v3634, 0
    %3711 = vmatprep.subr.mxu0 0.0
    %3712 = vmatpush1.msra.mxu0 %v3640
    %3713 = vmatprep.subr.mxu0 0.0
    %3714 = vmatpush1.msra.mxu0 %v3642
    %3715 = vmatprep.subr.mxu0 0.0
    %3716 = vmatpush1.msra.mxu0 %v3644
    %3717 = vmatprep.subr.mxu0 0.0
    %3718 = vmatpush1.msra.mxu0 %v3646
    %3719 = vmatprep.subr.mxu0 0.0
    %3720 = vmatpush1.msra.mxu0 0.0
    %3721 = vmatprep.subr.mxu0 0.0
    %3722 = vmatpush1.msra.mxu0 0.0
    %3723 = vmatprep.subr.mxu0 0.0
    %3724 = vmatpush1.msra.mxu0 0.0
    %3725 = vmatprep.subr.mxu0 0.0
    %3726 = vmatpush1.msra.mxu0 0.0
    %3727 = vmatprep.subr.mxu0 0.0
    %3728 = vmatpush1.msra.mxu0 0.0
    %3729 = vmatprep.subr.mxu0 0.0
    %3730 = vmatpush1.msra.mxu0 0.0
    %3731 = vmatprep.subr.mxu0 0.0
    %3732 = vmatpush1.msra.mxu0 0.0
    %3733 = vmatprep.subr.mxu0 0.0
    %3734 = vmatpush1.msra.mxu0 0.0
    %3735 = vmatprep.subr.mxu0 0.0
    %3736 = vmatpush1.msra.mxu0 0.0
    %3737 = vmatprep.subr.mxu0 0.0
    %3738 = vmatpush1.msra.mxu0 0.0
    %3739 = vmatprep.subr.mxu0 0.0
    %3740 = vmatpush1.msra.mxu0 0.0
    %3741 = vmatprep.subr.mxu0 0.0
    %3742 = vmatpush1.msra.mxu0 0.0
    %3743 = vmatprep.subr.mxu0 0.0
    %3744 = vmatpush1.msra.mxu0 0.0
    %3745 = vmatprep.subr.mxu0 0.0
    %3746 = vmatpush1.msra.mxu0 0.0
    %3747 = vmatprep.subr.mxu0 0.0
    %3748 = vmatpush1.msra.mxu0 0.0
    %3749 = vmatprep.subr.mxu0 0.0
    %3750 = vmatpush1.msra.mxu0 0.0
    %3751 = vmatprep.subr.mxu0 0.0
    %3752 = vmatpush1.msra.mxu0 0.0
    %3753 = vmatprep.subr.mxu0 0.0
    %3754 = vmatpush1.msra.mxu0 0.0
    %3755 = vmatprep.subr.mxu0 0.0
    %3756 = vmatpush1.msra.mxu0 0.0
    %3757 = vmatprep.subr.mxu0 0.0
    %3758 = vmatpush1.msra.mxu0 0.0
    %3759 = vmatprep.subr.mxu0 0.0
    %3760 = vmatpush1.msra.mxu0 0.0
    %3761 = vmatprep.subr.mxu0 0.0
    %3762 = vmatpush1.msra.mxu0 0.0
    %3763 = vmatprep.subr.mxu0 0.0
    %3764 = vmatpush1.msra.mxu0 0.0
    %3765 = vmatprep.subr.mxu0 0.0
    %3766 = vmatpush1.msra.mxu0 0.0
    %3767 = vmatprep.subr.mxu0 0.0
    %3768 = vmatpush1.msra.mxu0 0.0
    %3769 = vmatprep.subr.mxu0 0.0
    %3770 = vmatpush1.msra.mxu0 0.0
    %3771 = vmatprep.subr.mxu0 0.0
    %3772 = vmatpush1.msra.mxu0 0.0
    %3773 = vmatprep.subr.mxu0 0.0
    %3774 = vmatpush1.msra.mxu0 0.0
    %3775 = vmatprep.mubr.f32.mxu0 0.0
    %3776 = vmatmul.mubr.f32.gmra.mrb[0].mxu0 %v3652
    %v3777 = vpop.f32.mrb[0].mxu0
    %v3778 = vadd.f32 0.0, %v3777
    %v3779 = vpop.f32.mrb[0].mxu0
    %3780 = vmatprep.mubr.f32.mxu0 0.0
    %3781 = vmatmul.mubr.f32.gmra.mrb[0].mxu0 %v3655
    %v3782 = vpop.f32.mrb[0].mxu0
    %v3783 = vadd.f32 0.0, %v3782
    %v3784 = vpop.f32.mrb[0].mxu0
    %3785 = vmatprep.mubr.f32.mxu0 0.0
    %3786 = vmatmul.mubr.f32.gmra.mrb[0].mxu0 %v3658
    %v3787 = vpop.f32.mrb[0].mxu0
    %v3788 = vadd.f32 0.0, %v3787
    %v3789 = vpop.f32.mrb[0].mxu0
    %3790 = vmatprep.mubr.f32.mxu0 0.0
    %3791 = vmatmul.mubr.f32.gmra.mrb[0].mxu0 %v3661
    %v3792 = vpop.f32.mrb[0].mxu0
    %v3793 = vadd.f32 0.0, %v3792
    %v3794 = vpop.f32.mrb[0].mxu0
    %3795 = vmatprep.mubr.f32.mxu0 0.0
    %3796 = vmatmul.mubr.f32.gmra.mrb[0].mxu0 %v3664
    %v3797 = vpop.f32.mrb[0].mxu0
    %v3798 = vadd.f32 0.0, %v3797
    %v3799 = vpop.f32.mrb[0].mxu0
    %3800 = vmatprep.mubr.f32.mxu0 0.0
    %3801 = vmatmul.mubr.f32.gmra.mrb[0].mxu0 %v3667
    %v3802 = vpop.f32.mrb[0].mxu0
    %v3803 = vadd.f32 0.0, %v3802
    %v3804 = vpop.f32.mrb[0].mxu0
    %3805 = vmatprep.mubr.f32.mxu0 0.0
    %3806 = vmatmul.mubr.f32.gmra.mrb[0].mxu0 %v3670
    %v3807 = vpop.f32.mrb[0].mxu0
    %v3808 = vadd.f32 0.0, %v3807
    %v3809 = vpop.f32.mrb[0].mxu0
    %3810 = vmatprep.mubr.f32.mxu0 0.0
    %3811 = vmatmul.mubr.f32.gmra.mrb[0].mxu0 %v3673
    %v3812 = vpop.f32.mrb[0].mxu0
    %v3813 = vadd.f32 0.0, %v3812
    %v3814 = vpop.f32.mrb[0].mxu0
    %3815 = vmatprep.mubr.f32.mxu0 0.0
    %3816 = vmatmul.mubr.f32.gmra.mrb[0].mxu0 %v3676
    %v3817 = vpop.f32.mrb[0].mxu0
    %v3818 = vadd.f32 0.0, %v3817
    %v3819 = vpop.f32.mrb[0].mxu0
    %3820 = vmatprep.mubr.f32.mxu0 0.0
    %3821 = vmatmul.mubr.f32.gmra.mrb[0].mxu0 %v3679
    %v3822 = vpop.f32.mrb[0].mxu0
    %v3823 = vadd.f32 0.0, %v3822
    %v3824 = vpop.f32.mrb[0].mxu0
    %3825 = vmatprep.mubr.f32.mxu0 0.0
    %3826 = vmatmul.mubr.f32.gmra.mrb[0].mxu0 %v3682
    %v3827 = vpop.f32.mrb[0].mxu0
    %v3828 = vadd.f32 0.0, %v3827
    %v3829 = vpop.f32.mrb[0].mxu0
    %3830 = vmatprep.mubr.f32.mxu0 0.0
    %3831 = vmatmul.mubr.f32.gmra.mrb[0].mxu0 %v3685
    %v3832 = vpop.f32.mrb[0].mxu0
    %v3833 = vadd.f32 0.0, %v3832
    %v3834 = vpop.f32.mrb[0].mxu0
    %3835 = vmatprep.mubr.f32.mxu0 0.0
    %3836 = vmatmul.mubr.f32.gmra.mrb[0].mxu0 %v3688
    %v3837 = vpop.f32.mrb[0].mxu0
    %v3838 = vadd.f32 0.0, %v3837
    %v3839 = vpop.f32.mrb[0].mxu0
    %3840 = vmatprep.mubr.f32.mxu0 0.0
    %3841 = vmatmul.mubr.f32.gmra.mrb[0].mxu0 %v3691
    %v3842 = vpop.f32.mrb[0].mxu0
    %v3843 = vadd.f32 0.0, %v3842
    %v3844 = vpop.f32.mrb[0].mxu0
    %3845 = vmatprep.mubr.f32.mxu0 0.0
    %3846 = vmatmul.mubr.f32.gmra.mrb[0].mxu0 %v3694
    %v3847 = vpop.f32.mrb[0].mxu0
    %v3848 = vadd.f32 0.0, %v3847
    %v3849 = vpop.f32.mrb[0].mxu0
    %3850 = vmatprep.mubr.f32.mxu0 0.0
    %3851 = vmatmul.mubr.f32.gmra.mrb[0].mxu0 %v3697
    %v3852 = vpop.f32.mrb[0].mxu0
    %v3853 = vadd.f32 0.0, %v3852
    %v3854 = vpop.f32.mrb[0].mxu0
    %3855 = vmatprep.mubr.f32.mxu0 0.0
    %3856 = vmatmul.mubr.f32.gmra.mrb[0].mxu0 %v3700
    %v3857 = vpop.f32.mrb[0].mxu0
    %v3858 = vadd.f32 0.0, %v3857
    %v3859 = vpop.f32.mrb[0].mxu0
    %3860 = vmatprep.mubr.f32.mxu0 0.0
    %3861 = vmatmul.mubr.f32.gmra.mrb[0].mxu0 %v3703
    %v3862 = vpop.f32.mrb[0].mxu0
    %v3863 = vadd.f32 0.0, %v3862
    %v3864 = vpop.f32.mrb[0].mxu0
    %3865 = vmatprep.mubr.f32.mxu0 0.0
    %3866 = vmatmul.mubr.f32.gmra.mrb[0].mxu0 %v3706
    %v3867 = vpop.f32.mrb[0].mxu0
    %v3868 = vadd.f32 0.0, %v3867
    %v3869 = vpop.f32.mrb[0].mxu0
    %3870 = vmatprep.mubr.f32.mxu0 0.0
    %3871 = vmatmul.mubr.f32.gmra.mrb[0].mxu0 %v3709
    %v3872 = vpop.f32.mrb[0].mxu0
    %v3873 = vadd.f32 0.0, %v3872
    %v3874 = vpop.f32.mrb[0].mxu0
    %3875 = vdwg.mxu0
    %v3876 = vsel %vm436, %v3778, 0.0
    %v3877 = vsel %vm436, %v3783, 0.0
    %v3878 = vsel %vm436, %v3788, 0.0
    %v3879 = vsel %vm436, %v3793, 0.0
    %3880 = vrot.lane.b32.xlu0 %v3876, 32
    %v3881 = vpop.permute.xlu0 %3880
    %v3882 = vsel %vm441, %v3881, %v3876
    %3883 = vrot.lane.b32.xlu0 %v3877, 32
    %v3884 = vpop.permute.xlu0 %3883
    %v3885 = vsel %vm441, %v3884, %v3877
    %3886 = vrot.lane.b32.xlu0 %v3878, 32
    %v3887 = vpop.permute.xlu0 %3886
    %v3888 = vsel %vm441, %v3887, %v3878
    %3889 = vrot.lane.b32.xlu0 %v3879, 32
    %v3890 = vpop.permute.xlu0 %3889
    %v3891 = vsel %vm441, %v3890, %v3879
    %3892 = vrot.lane.b32.xlu0 %v3882, 32
    %v3893 = vpop.permute.xlu0 %3892
    %3894 = vrot.lane.b32.xlu0 %v3885, 32
    %v3895 = vpop.permute.xlu0 %3894
    %3896 = vrot.lane.b32.xlu0 %v3888, 32
    %v3897 = vpop.permute.xlu0 %3896
    %3898 = vrot.lane.b32.xlu0 %v3891, 32
    %v3899 = vpop.permute.xlu0 %3898
    %v3900 = vsel %vm441, %v3893, %v3876
    %v3901 = vsel %vm441, %v3895, %v3877
    %v3902 = vsel %vm441, %v3897, %v3878
    %v3903 = vsel %vm441, %v3899, %v3879
    %v3904 = vsel %vm467, %v3798, 0.0
    %v3905 = vsel %vm467, %v3803, 0.0
    %v3906 = vsel %vm467, %v3808, 0.0
    %v3907 = vsel %vm467, %v3813, 0.0
    %3908 = vrot.lane.b32.xlu0 %v3904, 32
    %v3909 = vpop.permute.xlu0 %3908
    %v3910 = vsel %vm441, %v3909, %v3904
    %3911 = vrot.lane.b32.xlu0 %v3905, 32
    %v3912 = vpop.permute.xlu0 %3911
    %v3913 = vsel %vm441, %v3912, %v3905
    %3914 = vrot.lane.b32.xlu0 %v3906, 32
    %v3915 = vpop.permute.xlu0 %3914
    %v3916 = vsel %vm441, %v3915, %v3906
    %3917 = vrot.lane.b32.xlu0 %v3907, 32
    %v3918 = vpop.permute.xlu0 %3917
    %v3919 = vsel %vm441, %v3918, %v3907
    %3920 = vrot.lane.b32.xlu0 %v3910, 32
    %v3921 = vpop.permute.xlu0 %3920
    %3922 = vrot.lane.b32.xlu0 %v3913, 32
    %v3923 = vpop.permute.xlu0 %3922
    %3924 = vrot.lane.b32.xlu0 %v3916, 32
    %v3925 = vpop.permute.xlu0 %3924
    %3926 = vrot.lane.b32.xlu0 %v3919, 32
    %v3927 = vpop.permute.xlu0 %3926
    %v3928 = vsel %vm441, %v3921, %v3904
    %v3929 = vsel %vm441, %v3923, %v3905
    %v3930 = vsel %vm441, %v3925, %v3906
    %v3931 = vsel %vm441, %v3927, %v3907
    %v3932 = vsel %vm497, %v3838, 0.0
    %v3933 = vsel %vm497, %v3843, 0.0
    %v3934 = vsel %vm497, %v3848, 0.0
    %v3935 = vsel %vm497, %v3853, 0.0
    %3936 = vrot.lane.b32.xlu0 %v3932, 32
    %v3937 = vpop.permute.xlu0 %3936
    %v3938 = vsel %vm441, %v3937, %v3932
    %3939 = vrot.lane.b32.xlu0 %v3933, 32
    %v3940 = vpop.permute.xlu0 %3939
    %v3941 = vsel %vm441, %v3940, %v3933
    %3942 = vrot.lane.b32.xlu0 %v3934, 32
    %v3943 = vpop.permute.xlu0 %3942
    %v3944 = vsel %vm441, %v3943, %v3934
    %3945 = vrot.lane.b32.xlu0 %v3935, 32
    %v3946 = vpop.permute.xlu0 %3945
    %v3947 = vsel %vm441, %v3946, %v3935
    %3948 = vrot.lane.b32.xlu0 %v3938, 32
    %v3949 = vpop.permute.xlu0 %3948
    %3950 = vrot.lane.b32.xlu0 %v3941, 32
    %v3951 = vpop.permute.xlu0 %3950
    %3952 = vrot.lane.b32.xlu0 %v3944, 32
    %v3953 = vpop.permute.xlu0 %3952
    %3954 = vrot.lane.b32.xlu0 %v3947, 32
    %v3955 = vpop.permute.xlu0 %3954
    %v3956 = vsel %vm441, %v3949, %v3932
    %v3957 = vsel %vm441, %v3951, %v3933
    %v3958 = vsel %vm441, %v3953, %v3934
    %v3959 = vsel %vm441, %v3955, %v3935
    %v3960 = vsel %vm527, %v3858, 0.0
    %v3961 = vsel %vm527, %v3863, 0.0
    %v3962 = vsel %vm527, %v3868, 0.0
    %v3963 = vsel %vm527, %v3873, 0.0
    %3964 = vrot.lane.b32.xlu0 %v3960, 32
    %v3965 = vpop.permute.xlu0 %3964
    %v3966 = vsel %vm441, %v3965, %v3960
    %3967 = vrot.lane.b32.xlu0 %v3961, 32
    %v3968 = vpop.permute.xlu0 %3967
    %v3969 = vsel %vm441, %v3968, %v3961
    %3970 = vrot.lane.b32.xlu0 %v3962, 32
    %v3971 = vpop.permute.xlu0 %3970
    %v3972 = vsel %vm441, %v3971, %v3962
    %3973 = vrot.lane.b32.xlu0 %v3963, 32
    %v3974 = vpop.permute.xlu0 %3973
    %v3975 = vsel %vm441, %v3974, %v3963
    %3976 = vrot.lane.b32.xlu0 %v3966, 32
    %v3977 = vpop.permute.xlu0 %3976
    %3978 = vrot.lane.b32.xlu0 %v3969, 32
    %v3979 = vpop.permute.xlu0 %3978
    %3980 = vrot.lane.b32.xlu0 %v3972, 32
    %v3981 = vpop.permute.xlu0 %3980
    %3982 = vrot.lane.b32.xlu0 %v3975, 32
    %v3983 = vpop.permute.xlu0 %3982
    %v3984 = vsel %vm441, %v3977, %v3960
    %v3985 = vsel %vm441, %v3979, %v3961
    %v3986 = vsel %vm441, %v3981, %v3962
    %v3987 = vsel %vm441, %v3983, %v3963
    %3992 = vrot.lane.b32.xlu0 %v3928, 127
    %v3993 = vpop.permute.xlu0 %3992
    %3994 = vrot.lane.b32.xlu0 %v3929, 127
    %v3995 = vpop.permute.xlu0 %3994
    %3996 = vrot.lane.b32.xlu0 %v3930, 127
    %v3997 = vpop.permute.xlu0 %3996
    %3998 = vrot.lane.b32.xlu0 %v3931, 127
    %v3999 = vpop.permute.xlu0 %3998
    %v4004 = vadd.f32 %v3900, %v3993
    %v4005 = vadd.f32 %v3901, %v3995
    %v4006 = vadd.f32 %v3902, %v3997
    %v4007 = vadd.f32 %v3903, %v3999
    %4012 = vrot.lane.b32.xlu0 %v3956, 127
    %v4013 = vpop.permute.xlu0 %4012
    %4014 = vrot.lane.b32.xlu0 %v3957, 127
    %v4015 = vpop.permute.xlu0 %4014
    %4016 = vrot.lane.b32.xlu0 %v3958, 127
    %v4017 = vpop.permute.xlu0 %4016
    %4018 = vrot.lane.b32.xlu0 %v3959, 127
    %v4019 = vpop.permute.xlu0 %4018
    %v4024 = vadd.f32 %v3818, %v4013
    %v4025 = vadd.f32 %v3823, %v4015
    %v4026 = vadd.f32 %v3828, %v4017
    %v4027 = vadd.f32 %v3833, %v4019
    %4032 = vrot.lane.b32.xlu0 %v4024, 30
    %v4033 = vpop.permute.xlu0 %4032
    %4034 = vrot.lane.b32.xlu0 %v4025, 30
    %v4035 = vpop.permute.xlu0 %4034
    %4036 = vrot.lane.b32.xlu0 %v4026, 30
    %v4037 = vpop.permute.xlu0 %4036
    %4038 = vrot.lane.b32.xlu0 %v4027, 30
    %v4039 = vpop.permute.xlu0 %4038
    %v4044 = vadd.f32 %v4004, %v4033
    %v4045 = vadd.f32 %v4005, %v4035
    %v4046 = vadd.f32 %v4006, %v4037
    %v4047 = vadd.f32 %v4007, %v4039
    %4052 = vrot.lane.b32.xlu0 %v3984, 28
    %v4053 = vpop.permute.xlu0 %4052
    %4054 = vrot.lane.b32.xlu0 %v3985, 28
    %v4055 = vpop.permute.xlu0 %4054
    %4056 = vrot.lane.b32.xlu0 %v3986, 28
    %v4057 = vpop.permute.xlu0 %4056
    %4058 = vrot.lane.b32.xlu0 %v3987, 28
    %v4059 = vpop.permute.xlu0 %4058
    %v4064 = vadd.f32 %v4044, %v4053
    %v4065 = vadd.f32 %v4045, %v4055
    %v4066 = vadd.f32 %v4046, %v4057
    %v4067 = vadd.f32 %v4047, %v4059
    %s4068 = scalar_lea.vmem %s4, 224
    %v4069 = vld [vmem:[%s4068] sm:$0xff]
    %v4070 = vld [vmem:[%s4068 + $0x8] sm:$0xff]
    %v4071 = vld [vmem:[%s4068 + $0x10] sm:$0xff]
    %v4072 = vld [vmem:[%s4068 + $0x18] sm:$0xff]
    %4074 = vset.pattern.permute.xlu0 0
    %4075 = vperm.xlu0 %4074, %v4069
    %v4076 = vpop.permute.xlu0 %4075
    %4079 = vset.pattern.permute.xlu0 0
    %4080 = vperm.xlu0 %4079, %v4070
    %v4081 = vpop.permute.xlu0 %4080
    %4084 = vset.pattern.permute.xlu0 0
    %4085 = vperm.xlu0 %4084, %v4071
    %v4086 = vpop.permute.xlu0 %4085
    %4089 = vset.pattern.permute.xlu0 0
    %4090 = vperm.xlu0 %4089, %v4072
    %v4091 = vpop.permute.xlu0 %4090
    %v4093 = vadd.f32 %v4064, %v4076
    %v4094 = vadd.f32 %v4065, %v4081
    %v4095 = vadd.f32 %v4066, %v4086
    %v4096 = vadd.f32 %v4067, %v4091
    %v4097 = vmul.f32 %v4093, 0.3
    %v4098 = vmul.f32 %v4094, 0.3
    %v4099 = vmul.f32 %v4095, 0.3
    %v4100 = vmul.f32 %v4096, 0.3
    %4105 = vrot.lane.b32.xlu0 %v4097, 98
    %v4106 = vpop.permute.xlu0 %4105
    %4107 = vrot.lane.b32.xlu0 %v4098, 98
    %v4108 = vpop.permute.xlu0 %4107
    %4109 = vrot.lane.b32.xlu0 %v4099, 98
    %v4110 = vpop.permute.xlu0 %4109
    %4111 = vrot.lane.b32.xlu0 %v4100, 98
    %v4112 = vpop.permute.xlu0 %4111
    %v4117 = vadd.f32 %v3135, %v4106
    %v4118 = vadd.f32 %v3136, %v4108
    %v4119 = vadd.f32 %v3137, %v4110
    %v4120 = vadd.f32 %v3138, %v4112
    %v4121 = vmax.f32 %v4117, 0.0
    %v4122 = vmax.f32 %v4118, 0.0
    %v4123 = vmax.f32 %v4119, 0.0
    %v4124 = vmax.f32 %v4120, 0.0
    %s4125 = scalar_lea.vmem %s3, 1280
    %v4126 = vld [vmem:[%s4125] sm:$0xff]
    %v4127 = vld [vmem:[%s4125 + $0x8] sm:$0xff]
    %v4128 = vld [vmem:[%s4125 + $0x10] sm:$0xff]
    %v4129 = vld [vmem:[%s4125 + $0x18] sm:$0xff]
    %v4130 = vld [vmem:[%s4125 + $0x20] sm:$0xff]
    %v4131 = vld [vmem:[%s4125 + $0x28] sm:$0xff]
    %v4132 = vld [vmem:[%s4125 + $0x30] sm:$0xff]
    %v4133 = vld [vmem:[%s4125 + $0x38] sm:$0xff]
    %v4134 = vld [vmem:[%s4125 + $0x40] sm:$0xff]
    %v4135 = vld [vmem:[%s4125 + $0x48] sm:$0xff]
    %v4136 = vld [vmem:[%s4125 + $0x50] sm:$0xff]
    %v4137 = vld [vmem:[%s4125 + $0x58] sm:$0xff]
    %v4138 = vld [vmem:[%s4125 + $0x60] sm:$0xff]
    %v4139 = vld [vmem:[%s4125 + $0x68] sm:$0xff]
    %v4140 = vld [vmem:[%s4125 + $0x70] sm:$0xff]
    %v4141 = vld [vmem:[%s4125 + $0x78] sm:$0xff]
    %v4142 = vld [vmem:[%s4125 + $0x80] sm:$0xff]
    %v4143 = vld [vmem:[%s4125 + $0x88] sm:$0xff]
    %v4144 = vld [vmem:[%s4125 + $0x90] sm:$0xff]
    %v4145 = vld [vmem:[%s4125 + $0x98] sm:$0xff]
    %v4147 = vsel %vm209, %v4126, 0
    %v4150 = vsel %vm209, %v4127, 0
    %v4153 = vsel %vm209, %v4128, 0
    %v4156 = vsel %vm209, %v4129, 0
    %v4159 = vsel %vm209, %v4130, 0
    %v4162 = vsel %vm209, %v4131, 0
    %v4165 = vsel %vm209, %v4132, 0
    %v4168 = vsel %vm209, %v4133, 0
    %v4171 = vsel %vm209, %v4134, 0
    %v4174 = vsel %vm209, %v4135, 0
    %v4177 = vsel %vm209, %v4136, 0
    %v4180 = vsel %vm209, %v4137, 0
    %v4183 = vsel %vm209, %v4138, 0
    %v4186 = vsel %vm209, %v4139, 0
    %v4189 = vsel %vm209, %v4140, 0
    %v4192 = vsel %vm209, %v4141, 0
    %v4195 = vsel %vm209, %v4142, 0
    %v4198 = vsel %vm209, %v4143, 0
    %v4201 = vsel %vm209, %v4144, 0
    %v4204 = vsel %vm209, %v4145, 0
    %4206 = vmatprep.subr.mxu0 0.0
    %4207 = vmatpush1.msra.mxu0 %v4121
    %4208 = vmatprep.subr.mxu0 0.0
    %4209 = vmatpush1.msra.mxu0 %v4122
    %4210 = vmatprep.subr.mxu0 0.0
    %4211 = vmatpush1.msra.mxu0 %v4123
    %4212 = vmatprep.subr.mxu0 0.0
    %4213 = vmatpush1.msra.mxu0 %v4124
    %4214 = vmatprep.subr.mxu0 0.0
    %4215 = vmatpush1.msra.mxu0 0.0
    %4216 = vmatprep.subr.mxu0 0.0
    %4217 = vmatpush1.msra.mxu0 0.0
    %4218 = vmatprep.subr.mxu0 0.0
    %4219 = vmatpush1.msra.mxu0 0.0
    %4220 = vmatprep.subr.mxu0 0.0
    %4221 = vmatpush1.msra.mxu0 0.0
    %4222 = vmatprep.subr.mxu0 0.0
    %4223 = vmatpush1.msra.mxu0 0.0
    %4224 = vmatprep.subr.mxu0 0.0
    %4225 = vmatpush1.msra.mxu0 0.0
    %4226 = vmatprep.subr.mxu0 0.0
    %4227 = vmatpush1.msra.mxu0 0.0
    %4228 = vmatprep.subr.mxu0 0.0
    %4229 = vmatpush1.msra.mxu0 0.0
    %4230 = vmatprep.subr.mxu0 0.0
    %4231 = vmatpush1.msra.mxu0 0.0
    %4232 = vmatprep.subr.mxu0 0.0
    %4233 = vmatpush1.msra.mxu0 0.0
    %4234 = vmatprep.subr.mxu0 0.0
    %4235 = vmatpush1.msra.mxu0 0.0
    %4236 = vmatprep.subr.mxu0 0.0
    %4237 = vmatpush1.msra.mxu0 0.0
    %4238 = vmatprep.subr.mxu0 0.0
    %4239 = vmatpush1.msra.mxu0 0.0
    %4240 = vmatprep.subr.mxu0 0.0
    %4241 = vmatpush1.msra.mxu0 0.0
    %4242 = vmatprep.subr.mxu0 0.0
    %4243 = vmatpush1.msra.mxu0 0.0
    %4244 = vmatprep.subr.mxu0 0.0
    %4245 = vmatpush1.msra.mxu0 0.0
    %4246 = vmatprep.subr.mxu0 0.0
    %4247 = vmatpush1.msra.mxu0 0.0
    %4248 = vmatprep.subr.mxu0 0.0
    %4249 = vmatpush1.msra.mxu0 0.0
    %4250 = vmatprep.subr.mxu0 0.0
    %4251 = vmatpush1.msra.mxu0 0.0
    %4252 = vmatprep.subr.mxu0 0.0
    %4253 = vmatpush1.msra.mxu0 0.0
    %4254 = vmatprep.subr.mxu0 0.0
    %4255 = vmatpush1.msra.mxu0 0.0
    %4256 = vmatprep.subr.mxu0 0.0
    %4257 = vmatpush1.msra.mxu0 0.0
    %4258 = vmatprep.subr.mxu0 0.0
    %4259 = vmatpush1.msra.mxu0 0.0
    %4260 = vmatprep.subr.mxu0 0.0
    %4261 = vmatpush1.msra.mxu0 0.0
    %4262 = vmatprep.subr.mxu0 0.0
    %4263 = vmatpush1.msra.mxu0 0.0
    %4264 = vmatprep.subr.mxu0 0.0
    %4265 = vmatpush1.msra.mxu0 0.0
    %4266 = vmatprep.subr.mxu0 0.0
    %4267 = vmatpush1.msra.mxu0 0.0
    %4268 = vmatprep.subr.mxu0 0.0
    %4269 = vmatpush1.msra.mxu0 0.0
    %4270 = vmatprep.mubr.f32.mxu0 0.0
    %4271 = vmatmul.mubr.f32.gmra.mrb[0].mxu0 %v4147
    %v4272 = vpop.f32.mrb[0].mxu0
    %v4273 = vadd.f32 0.0, %v4272
    %v4274 = vpop.f32.mrb[0].mxu0
    %4275 = vmatprep.mubr.f32.mxu0 0.0
    %4276 = vmatmul.mubr.f32.gmra.mrb[0].mxu0 %v4150
    %v4277 = vpop.f32.mrb[0].mxu0
    %v4278 = vadd.f32 0.0, %v4277
    %v4279 = vpop.f32.mrb[0].mxu0
    %4280 = vmatprep.mubr.f32.mxu0 0.0
    %4281 = vmatmul.mubr.f32.gmra.mrb[0].mxu0 %v4153
    %v4282 = vpop.f32.mrb[0].mxu0
    %v4283 = vadd.f32 0.0, %v4282
    %v4284 = vpop.f32.mrb[0].mxu0
    %4285 = vmatprep.mubr.f32.mxu0 0.0
    %4286 = vmatmul.mubr.f32.gmra.mrb[0].mxu0 %v4156
    %v4287 = vpop.f32.mrb[0].mxu0
    %v4288 = vadd.f32 0.0, %v4287
    %v4289 = vpop.f32.mrb[0].mxu0
    %4290 = vmatprep.mubr.f32.mxu0 0.0
    %4291 = vmatmul.mubr.f32.gmra.mrb[0].mxu0 %v4159
    %v4292 = vpop.f32.mrb[0].mxu0
    %v4293 = vadd.f32 0.0, %v4292
    %v4294 = vpop.f32.mrb[0].mxu0
    %4295 = vmatprep.mubr.f32.mxu0 0.0
    %4296 = vmatmul.mubr.f32.gmra.mrb[0].mxu0 %v4162
    %v4297 = vpop.f32.mrb[0].mxu0
    %v4298 = vadd.f32 0.0, %v4297
    %v4299 = vpop.f32.mrb[0].mxu0
    %4300 = vmatprep.mubr.f32.mxu0 0.0
    %4301 = vmatmul.mubr.f32.gmra.mrb[0].mxu0 %v4165
    %v4302 = vpop.f32.mrb[0].mxu0
    %v4303 = vadd.f32 0.0, %v4302
    %v4304 = vpop.f32.mrb[0].mxu0
    %4305 = vmatprep.mubr.f32.mxu0 0.0
    %4306 = vmatmul.mubr.f32.gmra.mrb[0].mxu0 %v4168
    %v4307 = vpop.f32.mrb[0].mxu0
    %v4308 = vadd.f32 0.0, %v4307
    %v4309 = vpop.f32.mrb[0].mxu0
    %4310 = vmatprep.mubr.f32.mxu0 0.0
    %4311 = vmatmul.mubr.f32.gmra.mrb[0].mxu0 %v4171
    %v4312 = vpop.f32.mrb[0].mxu0
    %v4313 = vadd.f32 0.0, %v4312
    %v4314 = vpop.f32.mrb[0].mxu0
    %4315 = vmatprep.mubr.f32.mxu0 0.0
    %4316 = vmatmul.mubr.f32.gmra.mrb[0].mxu0 %v4174
    %v4317 = vpop.f32.mrb[0].mxu0
    %v4318 = vadd.f32 0.0, %v4317
    %v4319 = vpop.f32.mrb[0].mxu0
    %4320 = vmatprep.mubr.f32.mxu0 0.0
    %4321 = vmatmul.mubr.f32.gmra.mrb[0].mxu0 %v4177
    %v4322 = vpop.f32.mrb[0].mxu0
    %v4323 = vadd.f32 0.0, %v4322
    %v4324 = vpop.f32.mrb[0].mxu0
    %4325 = vmatprep.mubr.f32.mxu0 0.0
    %4326 = vmatmul.mubr.f32.gmra.mrb[0].mxu0 %v4180
    %v4327 = vpop.f32.mrb[0].mxu0
    %v4328 = vadd.f32 0.0, %v4327
    %v4329 = vpop.f32.mrb[0].mxu0
    %4330 = vmatprep.mubr.f32.mxu0 0.0
    %4331 = vmatmul.mubr.f32.gmra.mrb[0].mxu0 %v4183
    %v4332 = vpop.f32.mrb[0].mxu0
    %v4333 = vadd.f32 0.0, %v4332
    %v4334 = vpop.f32.mrb[0].mxu0
    %4335 = vmatprep.mubr.f32.mxu0 0.0
    %4336 = vmatmul.mubr.f32.gmra.mrb[0].mxu0 %v4186
    %v4337 = vpop.f32.mrb[0].mxu0
    %v4338 = vadd.f32 0.0, %v4337
    %v4339 = vpop.f32.mrb[0].mxu0
    %4340 = vmatprep.mubr.f32.mxu0 0.0
    %4341 = vmatmul.mubr.f32.gmra.mrb[0].mxu0 %v4189
    %v4342 = vpop.f32.mrb[0].mxu0
    %v4343 = vadd.f32 0.0, %v4342
    %v4344 = vpop.f32.mrb[0].mxu0
    %4345 = vmatprep.mubr.f32.mxu0 0.0
    %4346 = vmatmul.mubr.f32.gmra.mrb[0].mxu0 %v4192
    %v4347 = vpop.f32.mrb[0].mxu0
    %v4348 = vadd.f32 0.0, %v4347
    %v4349 = vpop.f32.mrb[0].mxu0
    %4350 = vmatprep.mubr.f32.mxu0 0.0
    %4351 = vmatmul.mubr.f32.gmra.mrb[0].mxu0 %v4195
    %v4352 = vpop.f32.mrb[0].mxu0
    %v4353 = vadd.f32 0.0, %v4352
    %v4354 = vpop.f32.mrb[0].mxu0
    %4355 = vmatprep.mubr.f32.mxu0 0.0
    %4356 = vmatmul.mubr.f32.gmra.mrb[0].mxu0 %v4198
    %v4357 = vpop.f32.mrb[0].mxu0
    %v4358 = vadd.f32 0.0, %v4357
    %v4359 = vpop.f32.mrb[0].mxu0
    %4360 = vmatprep.mubr.f32.mxu0 0.0
    %4361 = vmatmul.mubr.f32.gmra.mrb[0].mxu0 %v4201
    %v4362 = vpop.f32.mrb[0].mxu0
    %v4363 = vadd.f32 0.0, %v4362
    %v4364 = vpop.f32.mrb[0].mxu0
    %4365 = vmatprep.mubr.f32.mxu0 0.0
    %4366 = vmatmul.mubr.f32.gmra.mrb[0].mxu0 %v4204
    %v4367 = vpop.f32.mrb[0].mxu0
    %v4368 = vadd.f32 0.0, %v4367
    %v4369 = vpop.f32.mrb[0].mxu0
    %4370 = vdwg.mxu0
    %v4371 = vsel %vm436, %v4273, 0.0
    %v4372 = vsel %vm436, %v4278, 0.0
    %v4373 = vsel %vm436, %v4283, 0.0
    %v4374 = vsel %vm436, %v4288, 0.0
    %4375 = vrot.lane.b32.xlu0 %v4371, 32
    %v4376 = vpop.permute.xlu0 %4375
    %v4377 = vsel %vm441, %v4376, %v4371
    %4378 = vrot.lane.b32.xlu0 %v4372, 32
    %v4379 = vpop.permute.xlu0 %4378
    %v4380 = vsel %vm441, %v4379, %v4372
    %4381 = vrot.lane.b32.xlu0 %v4373, 32
    %v4382 = vpop.permute.xlu0 %4381
    %v4383 = vsel %vm441, %v4382, %v4373
    %4384 = vrot.lane.b32.xlu0 %v4374, 32
    %v4385 = vpop.permute.xlu0 %4384
    %v4386 = vsel %vm441, %v4385, %v4374
    %4387 = vrot.lane.b32.xlu0 %v4377, 32
    %v4388 = vpop.permute.xlu0 %4387
    %4389 = vrot.lane.b32.xlu0 %v4380, 32
    %v4390 = vpop.permute.xlu0 %4389
    %4391 = vrot.lane.b32.xlu0 %v4383, 32
    %v4392 = vpop.permute.xlu0 %4391
    %4393 = vrot.lane.b32.xlu0 %v4386, 32
    %v4394 = vpop.permute.xlu0 %4393
    %v4395 = vsel %vm441, %v4388, %v4371
    %v4396 = vsel %vm441, %v4390, %v4372
    %v4397 = vsel %vm441, %v4392, %v4373
    %v4398 = vsel %vm441, %v4394, %v4374
    %v4399 = vsel %vm467, %v4293, 0.0
    %v4400 = vsel %vm467, %v4298, 0.0
    %v4401 = vsel %vm467, %v4303, 0.0
    %v4402 = vsel %vm467, %v4308, 0.0
    %4403 = vrot.lane.b32.xlu0 %v4399, 32
    %v4404 = vpop.permute.xlu0 %4403
    %v4405 = vsel %vm441, %v4404, %v4399
    %4406 = vrot.lane.b32.xlu0 %v4400, 32
    %v4407 = vpop.permute.xlu0 %4406
    %v4408 = vsel %vm441, %v4407, %v4400
    %4409 = vrot.lane.b32.xlu0 %v4401, 32
    %v4410 = vpop.permute.xlu0 %4409
    %v4411 = vsel %vm441, %v4410, %v4401
    %4412 = vrot.lane.b32.xlu0 %v4402, 32
    %v4413 = vpop.permute.xlu0 %4412
    %v4414 = vsel %vm441, %v4413, %v4402
    %4415 = vrot.lane.b32.xlu0 %v4405, 32
    %v4416 = vpop.permute.xlu0 %4415
    %4417 = vrot.lane.b32.xlu0 %v4408, 32
    %v4418 = vpop.permute.xlu0 %4417
    %4419 = vrot.lane.b32.xlu0 %v4411, 32
    %v4420 = vpop.permute.xlu0 %4419
    %4421 = vrot.lane.b32.xlu0 %v4414, 32
    %v4422 = vpop.permute.xlu0 %4421
    %v4423 = vsel %vm441, %v4416, %v4399
    %v4424 = vsel %vm441, %v4418, %v4400
    %v4425 = vsel %vm441, %v4420, %v4401
    %v4426 = vsel %vm441, %v4422, %v4402
    %v4427 = vsel %vm497, %v4333, 0.0
    %v4428 = vsel %vm497, %v4338, 0.0
    %v4429 = vsel %vm497, %v4343, 0.0
    %v4430 = vsel %vm497, %v4348, 0.0
    %4431 = vrot.lane.b32.xlu0 %v4427, 32
    %v4432 = vpop.permute.xlu0 %4431
    %v4433 = vsel %vm441, %v4432, %v4427
    %4434 = vrot.lane.b32.xlu0 %v4428, 32
    %v4435 = vpop.permute.xlu0 %4434
    %v4436 = vsel %vm441, %v4435, %v4428
    %4437 = vrot.lane.b32.xlu0 %v4429, 32
    %v4438 = vpop.permute.xlu0 %4437
    %v4439 = vsel %vm441, %v4438, %v4429
    %4440 = vrot.lane.b32.xlu0 %v4430, 32
    %v4441 = vpop.permute.xlu0 %4440
    %v4442 = vsel %vm441, %v4441, %v4430
    %4443 = vrot.lane.b32.xlu0 %v4433, 32
    %v4444 = vpop.permute.xlu0 %4443
    %4445 = vrot.lane.b32.xlu0 %v4436, 32
    %v4446 = vpop.permute.xlu0 %4445
    %4447 = vrot.lane.b32.xlu0 %v4439, 32
    %v4448 = vpop.permute.xlu0 %4447
    %4449 = vrot.lane.b32.xlu0 %v4442, 32
    %v4450 = vpop.permute.xlu0 %4449
    %v4451 = vsel %vm441, %v4444, %v4427
    %v4452 = vsel %vm441, %v4446, %v4428
    %v4453 = vsel %vm441, %v4448, %v4429
    %v4454 = vsel %vm441, %v4450, %v4430
    %v4455 = vsel %vm527, %v4353, 0.0
    %v4456 = vsel %vm527, %v4358, 0.0
    %v4457 = vsel %vm527, %v4363, 0.0
    %v4458 = vsel %vm527, %v4368, 0.0
    %4459 = vrot.lane.b32.xlu0 %v4455, 32
    %v4460 = vpop.permute.xlu0 %4459
    %v4461 = vsel %vm441, %v4460, %v4455
    %4462 = vrot.lane.b32.xlu0 %v4456, 32
    %v4463 = vpop.permute.xlu0 %4462
    %v4464 = vsel %vm441, %v4463, %v4456
    %4465 = vrot.lane.b32.xlu0 %v4457, 32
    %v4466 = vpop.permute.xlu0 %4465
    %v4467 = vsel %vm441, %v4466, %v4457
    %4468 = vrot.lane.b32.xlu0 %v4458, 32
    %v4469 = vpop.permute.xlu0 %4468
    %v4470 = vsel %vm441, %v4469, %v4458
    %4471 = vrot.lane.b32.xlu0 %v4461, 32
    %v4472 = vpop.permute.xlu0 %4471
    %4473 = vrot.lane.b32.xlu0 %v4464, 32
    %v4474 = vpop.permute.xlu0 %4473
    %4475 = vrot.lane.b32.xlu0 %v4467, 32
    %v4476 = vpop.permute.xlu0 %4475
    %4477 = vrot.lane.b32.xlu0 %v4470, 32
    %v4478 = vpop.permute.xlu0 %4477
    %v4479 = vsel %vm441, %v4472, %v4455
    %v4480 = vsel %vm441, %v4474, %v4456
    %v4481 = vsel %vm441, %v4476, %v4457
    %v4482 = vsel %vm441, %v4478, %v4458
    %4487 = vrot.lane.b32.xlu0 %v4423, 127
    %v4488 = vpop.permute.xlu0 %4487
    %4489 = vrot.lane.b32.xlu0 %v4424, 127
    %v4490 = vpop.permute.xlu0 %4489
    %4491 = vrot.lane.b32.xlu0 %v4425, 127
    %v4492 = vpop.permute.xlu0 %4491
    %4493 = vrot.lane.b32.xlu0 %v4426, 127
    %v4494 = vpop.permute.xlu0 %4493
    %v4499 = vadd.f32 %v4395, %v4488
    %v4500 = vadd.f32 %v4396, %v4490
    %v4501 = vadd.f32 %v4397, %v4492
    %v4502 = vadd.f32 %v4398, %v4494
    %4507 = vrot.lane.b32.xlu0 %v4451, 127
    %v4508 = vpop.permute.xlu0 %4507
    %4509 = vrot.lane.b32.xlu0 %v4452, 127
    %v4510 = vpop.permute.xlu0 %4509
    %4511 = vrot.lane.b32.xlu0 %v4453, 127
    %v4512 = vpop.permute.xlu0 %4511
    %4513 = vrot.lane.b32.xlu0 %v4454, 127
    %v4514 = vpop.permute.xlu0 %4513
    %v4519 = vadd.f32 %v4313, %v4508
    %v4520 = vadd.f32 %v4318, %v4510
    %v4521 = vadd.f32 %v4323, %v4512
    %v4522 = vadd.f32 %v4328, %v4514
    %4527 = vrot.lane.b32.xlu0 %v4519, 30
    %v4528 = vpop.permute.xlu0 %4527
    %4529 = vrot.lane.b32.xlu0 %v4520, 30
    %v4530 = vpop.permute.xlu0 %4529
    %4531 = vrot.lane.b32.xlu0 %v4521, 30
    %v4532 = vpop.permute.xlu0 %4531
    %4533 = vrot.lane.b32.xlu0 %v4522, 30
    %v4534 = vpop.permute.xlu0 %4533
    %v4539 = vadd.f32 %v4499, %v4528
    %v4540 = vadd.f32 %v4500, %v4530
    %v4541 = vadd.f32 %v4501, %v4532
    %v4542 = vadd.f32 %v4502, %v4534
    %4547 = vrot.lane.b32.xlu0 %v4479, 28
    %v4548 = vpop.permute.xlu0 %4547
    %4549 = vrot.lane.b32.xlu0 %v4480, 28
    %v4550 = vpop.permute.xlu0 %4549
    %4551 = vrot.lane.b32.xlu0 %v4481, 28
    %v4552 = vpop.permute.xlu0 %4551
    %4553 = vrot.lane.b32.xlu0 %v4482, 28
    %v4554 = vpop.permute.xlu0 %4553
    %v4559 = vadd.f32 %v4539, %v4548
    %v4560 = vadd.f32 %v4540, %v4550
    %v4561 = vadd.f32 %v4541, %v4552
    %v4562 = vadd.f32 %v4542, %v4554
    %s4563 = scalar_lea.vmem %s4, 256
    %v4564 = vld [vmem:[%s4563] sm:$0xff]
    %v4565 = vld [vmem:[%s4563 + $0x8] sm:$0xff]
    %v4566 = vld [vmem:[%s4563 + $0x10] sm:$0xff]
    %v4567 = vld [vmem:[%s4563 + $0x18] sm:$0xff]
    %4569 = vset.pattern.permute.xlu0 0
    %4570 = vperm.xlu0 %4569, %v4564
    %v4571 = vpop.permute.xlu0 %4570
    %4574 = vset.pattern.permute.xlu0 0
    %4575 = vperm.xlu0 %4574, %v4565
    %v4576 = vpop.permute.xlu0 %4575
    %4579 = vset.pattern.permute.xlu0 0
    %4580 = vperm.xlu0 %4579, %v4566
    %v4581 = vpop.permute.xlu0 %4580
    %4584 = vset.pattern.permute.xlu0 0
    %4585 = vperm.xlu0 %4584, %v4567
    %v4586 = vpop.permute.xlu0 %4585
    %v4588 = vadd.f32 %v4559, %v4571
    %v4589 = vadd.f32 %v4560, %v4576
    %v4590 = vadd.f32 %v4561, %v4581
    %v4591 = vadd.f32 %v4562, %v4586
    %v4592 = vmax.f32 %v4588, 0.0
    %v4593 = vmax.f32 %v4589, 0.0
    %v4594 = vmax.f32 %v4590, 0.0
    %v4595 = vmax.f32 %v4591, 0.0
    %s4596 = scalar_lea.vmem %s3, 1440
    %v4597 = vld [vmem:[%s4596] sm:$0xff]
    %v4598 = vld [vmem:[%s4596 + $0x8] sm:$0xff]
    %v4599 = vld [vmem:[%s4596 + $0x10] sm:$0xff]
    %v4600 = vld [vmem:[%s4596 + $0x18] sm:$0xff]
    %v4601 = vld [vmem:[%s4596 + $0x20] sm:$0xff]
    %v4602 = vld [vmem:[%s4596 + $0x28] sm:$0xff]
    %v4603 = vld [vmem:[%s4596 + $0x30] sm:$0xff]
    %v4604 = vld [vmem:[%s4596 + $0x38] sm:$0xff]
    %v4605 = vld [vmem:[%s4596 + $0x40] sm:$0xff]
    %v4606 = vld [vmem:[%s4596 + $0x48] sm:$0xff]
    %v4607 = vld [vmem:[%s4596 + $0x50] sm:$0xff]
    %v4608 = vld [vmem:[%s4596 + $0x58] sm:$0xff]
    %v4609 = vld [vmem:[%s4596 + $0x60] sm:$0xff]
    %v4610 = vld [vmem:[%s4596 + $0x68] sm:$0xff]
    %v4611 = vld [vmem:[%s4596 + $0x70] sm:$0xff]
    %v4612 = vld [vmem:[%s4596 + $0x78] sm:$0xff]
    %v4613 = vld [vmem:[%s4596 + $0x80] sm:$0xff]
    %v4614 = vld [vmem:[%s4596 + $0x88] sm:$0xff]
    %v4615 = vld [vmem:[%s4596 + $0x90] sm:$0xff]
    %v4616 = vld [vmem:[%s4596 + $0x98] sm:$0xff]
    %4621 = vrot.lane.b32.xlu0 %v4592, 98
    %v4622 = vpop.permute.xlu0 %4621
    %4623 = vrot.lane.b32.xlu0 %v4593, 98
    %v4624 = vpop.permute.xlu0 %4623
    %4625 = vrot.lane.b32.xlu0 %v4594, 98
    %v4626 = vpop.permute.xlu0 %4625
    %4627 = vrot.lane.b32.xlu0 %v4595, 98
    %v4628 = vpop.permute.xlu0 %4627
    %v4634 = vsel %vm209, %v4597, 0
    %v4637 = vsel %vm209, %v4598, 0
    %v4640 = vsel %vm209, %v4599, 0
    %v4643 = vsel %vm209, %v4600, 0
    %v4646 = vsel %vm209, %v4601, 0
    %v4649 = vsel %vm209, %v4602, 0
    %v4652 = vsel %vm209, %v4603, 0
    %v4655 = vsel %vm209, %v4604, 0
    %v4658 = vsel %vm209, %v4605, 0
    %v4661 = vsel %vm209, %v4606, 0
    %v4664 = vsel %vm209, %v4607, 0
    %v4667 = vsel %vm209, %v4608, 0
    %v4670 = vsel %vm209, %v4609, 0
    %v4673 = vsel %vm209, %v4610, 0
    %v4676 = vsel %vm209, %v4611, 0
    %v4679 = vsel %vm209, %v4612, 0
    %v4682 = vsel %vm209, %v4613, 0
    %v4685 = vsel %vm209, %v4614, 0
    %v4688 = vsel %vm209, %v4615, 0
    %v4691 = vsel %vm209, %v4616, 0
    %4693 = vmatprep.subr.mxu0 0.0
    %4694 = vmatpush1.msra.mxu0 %v4622
    %4695 = vmatprep.subr.mxu0 0.0
    %4696 = vmatpush1.msra.mxu0 %v4624
    %4697 = vmatprep.subr.mxu0 0.0
    %4698 = vmatpush1.msra.mxu0 %v4626
    %4699 = vmatprep.subr.mxu0 0.0
    %4700 = vmatpush1.msra.mxu0 %v4628
    %4701 = vmatprep.subr.mxu0 0.0
    %4702 = vmatpush1.msra.mxu0 0.0
    %4703 = vmatprep.subr.mxu0 0.0
    %4704 = vmatpush1.msra.mxu0 0.0
    %4705 = vmatprep.subr.mxu0 0.0
    %4706 = vmatpush1.msra.mxu0 0.0
    %4707 = vmatprep.subr.mxu0 0.0
    %4708 = vmatpush1.msra.mxu0 0.0
    %4709 = vmatprep.subr.mxu0 0.0
    %4710 = vmatpush1.msra.mxu0 0.0
    %4711 = vmatprep.subr.mxu0 0.0
    %4712 = vmatpush1.msra.mxu0 0.0
    %4713 = vmatprep.subr.mxu0 0.0
    %4714 = vmatpush1.msra.mxu0 0.0
    %4715 = vmatprep.subr.mxu0 0.0
    %4716 = vmatpush1.msra.mxu0 0.0
    %4717 = vmatprep.subr.mxu0 0.0
    %4718 = vmatpush1.msra.mxu0 0.0
    %4719 = vmatprep.subr.mxu0 0.0
    %4720 = vmatpush1.msra.mxu0 0.0
    %4721 = vmatprep.subr.mxu0 0.0
    %4722 = vmatpush1.msra.mxu0 0.0
    %4723 = vmatprep.subr.mxu0 0.0
    %4724 = vmatpush1.msra.mxu0 0.0
    %4725 = vmatprep.subr.mxu0 0.0
    %4726 = vmatpush1.msra.mxu0 0.0
    %4727 = vmatprep.subr.mxu0 0.0
    %4728 = vmatpush1.msra.mxu0 0.0
    %4729 = vmatprep.subr.mxu0 0.0
    %4730 = vmatpush1.msra.mxu0 0.0
    %4731 = vmatprep.subr.mxu0 0.0
    %4732 = vmatpush1.msra.mxu0 0.0
    %4733 = vmatprep.subr.mxu0 0.0
    %4734 = vmatpush1.msra.mxu0 0.0
    %4735 = vmatprep.subr.mxu0 0.0
    %4736 = vmatpush1.msra.mxu0 0.0
    %4737 = vmatprep.subr.mxu0 0.0
    %4738 = vmatpush1.msra.mxu0 0.0
    %4739 = vmatprep.subr.mxu0 0.0
    %4740 = vmatpush1.msra.mxu0 0.0
    %4741 = vmatprep.subr.mxu0 0.0
    %4742 = vmatpush1.msra.mxu0 0.0
    %4743 = vmatprep.subr.mxu0 0.0
    %4744 = vmatpush1.msra.mxu0 0.0
    %4745 = vmatprep.subr.mxu0 0.0
    %4746 = vmatpush1.msra.mxu0 0.0
    %4747 = vmatprep.subr.mxu0 0.0
    %4748 = vmatpush1.msra.mxu0 0.0
    %4749 = vmatprep.subr.mxu0 0.0
    %4750 = vmatpush1.msra.mxu0 0.0
    %4751 = vmatprep.subr.mxu0 0.0
    %4752 = vmatpush1.msra.mxu0 0.0
    %4753 = vmatprep.subr.mxu0 0.0
    %4754 = vmatpush1.msra.mxu0 0.0
    %4755 = vmatprep.subr.mxu0 0.0
    %4756 = vmatpush1.msra.mxu0 0.0
    %4757 = vmatprep.mubr.f32.mxu0 0.0
    %4758 = vmatmul.mubr.f32.gmra.mrb[0].mxu0 %v4634
    %v4759 = vpop.f32.mrb[0].mxu0
    %v4760 = vadd.f32 0.0, %v4759
    %v4761 = vpop.f32.mrb[0].mxu0
    %4762 = vmatprep.mubr.f32.mxu0 0.0
    %4763 = vmatmul.mubr.f32.gmra.mrb[0].mxu0 %v4637
    %v4764 = vpop.f32.mrb[0].mxu0
    %v4765 = vadd.f32 0.0, %v4764
    %v4766 = vpop.f32.mrb[0].mxu0
    %4767 = vmatprep.mubr.f32.mxu0 0.0
    %4768 = vmatmul.mubr.f32.gmra.mrb[0].mxu0 %v4640
    %v4769 = vpop.f32.mrb[0].mxu0
    %v4770 = vadd.f32 0.0, %v4769
    %v4771 = vpop.f32.mrb[0].mxu0
    %4772 = vmatprep.mubr.f32.mxu0 0.0
    %4773 = vmatmul.mubr.f32.gmra.mrb[0].mxu0 %v4643
    %v4774 = vpop.f32.mrb[0].mxu0
    %v4775 = vadd.f32 0.0, %v4774
    %v4776 = vpop.f32.mrb[0].mxu0
    %4777 = vmatprep.mubr.f32.mxu0 0.0
    %4778 = vmatmul.mubr.f32.gmra.mrb[0].mxu0 %v4646
    %v4779 = vpop.f32.mrb[0].mxu0
    %v4780 = vadd.f32 0.0, %v4779
    %v4781 = vpop.f32.mrb[0].mxu0
    %4782 = vmatprep.mubr.f32.mxu0 0.0
    %4783 = vmatmul.mubr.f32.gmra.mrb[0].mxu0 %v4649
    %v4784 = vpop.f32.mrb[0].mxu0
    %v4785 = vadd.f32 0.0, %v4784
    %v4786 = vpop.f32.mrb[0].mxu0
    %4787 = vmatprep.mubr.f32.mxu0 0.0
    %4788 = vmatmul.mubr.f32.gmra.mrb[0].mxu0 %v4652
    %v4789 = vpop.f32.mrb[0].mxu0
    %v4790 = vadd.f32 0.0, %v4789
    %v4791 = vpop.f32.mrb[0].mxu0
    %4792 = vmatprep.mubr.f32.mxu0 0.0
    %4793 = vmatmul.mubr.f32.gmra.mrb[0].mxu0 %v4655
    %v4794 = vpop.f32.mrb[0].mxu0
    %v4795 = vadd.f32 0.0, %v4794
    %v4796 = vpop.f32.mrb[0].mxu0
    %4797 = vmatprep.mubr.f32.mxu0 0.0
    %4798 = vmatmul.mubr.f32.gmra.mrb[0].mxu0 %v4658
    %v4799 = vpop.f32.mrb[0].mxu0
    %v4800 = vadd.f32 0.0, %v4799
    %v4801 = vpop.f32.mrb[0].mxu0
    %4802 = vmatprep.mubr.f32.mxu0 0.0
    %4803 = vmatmul.mubr.f32.gmra.mrb[0].mxu0 %v4661
    %v4804 = vpop.f32.mrb[0].mxu0
    %v4805 = vadd.f32 0.0, %v4804
    %v4806 = vpop.f32.mrb[0].mxu0
    %4807 = vmatprep.mubr.f32.mxu0 0.0
    %4808 = vmatmul.mubr.f32.gmra.mrb[0].mxu0 %v4664
    %v4809 = vpop.f32.mrb[0].mxu0
    %v4810 = vadd.f32 0.0, %v4809
    %v4811 = vpop.f32.mrb[0].mxu0
    %4812 = vmatprep.mubr.f32.mxu0 0.0
    %4813 = vmatmul.mubr.f32.gmra.mrb[0].mxu0 %v4667
    %v4814 = vpop.f32.mrb[0].mxu0
    %v4815 = vadd.f32 0.0, %v4814
    %v4816 = vpop.f32.mrb[0].mxu0
    %4817 = vmatprep.mubr.f32.mxu0 0.0
    %4818 = vmatmul.mubr.f32.gmra.mrb[0].mxu0 %v4670
    %v4819 = vpop.f32.mrb[0].mxu0
    %v4820 = vadd.f32 0.0, %v4819
    %v4821 = vpop.f32.mrb[0].mxu0
    %4822 = vmatprep.mubr.f32.mxu0 0.0
    %4823 = vmatmul.mubr.f32.gmra.mrb[0].mxu0 %v4673
    %v4824 = vpop.f32.mrb[0].mxu0
    %v4825 = vadd.f32 0.0, %v4824
    %v4826 = vpop.f32.mrb[0].mxu0
    %4827 = vmatprep.mubr.f32.mxu0 0.0
    %4828 = vmatmul.mubr.f32.gmra.mrb[0].mxu0 %v4676
    %v4829 = vpop.f32.mrb[0].mxu0
    %v4830 = vadd.f32 0.0, %v4829
    %v4831 = vpop.f32.mrb[0].mxu0
    %4832 = vmatprep.mubr.f32.mxu0 0.0
    %4833 = vmatmul.mubr.f32.gmra.mrb[0].mxu0 %v4679
    %v4834 = vpop.f32.mrb[0].mxu0
    %v4835 = vadd.f32 0.0, %v4834
    %v4836 = vpop.f32.mrb[0].mxu0
    %4837 = vmatprep.mubr.f32.mxu0 0.0
    %4838 = vmatmul.mubr.f32.gmra.mrb[0].mxu0 %v4682
    %v4839 = vpop.f32.mrb[0].mxu0
    %v4840 = vadd.f32 0.0, %v4839
    %v4841 = vpop.f32.mrb[0].mxu0
    %4842 = vmatprep.mubr.f32.mxu0 0.0
    %4843 = vmatmul.mubr.f32.gmra.mrb[0].mxu0 %v4685
    %v4844 = vpop.f32.mrb[0].mxu0
    %v4845 = vadd.f32 0.0, %v4844
    %v4846 = vpop.f32.mrb[0].mxu0
    %4847 = vmatprep.mubr.f32.mxu0 0.0
    %4848 = vmatmul.mubr.f32.gmra.mrb[0].mxu0 %v4688
    %v4849 = vpop.f32.mrb[0].mxu0
    %v4850 = vadd.f32 0.0, %v4849
    %v4851 = vpop.f32.mrb[0].mxu0
    %4852 = vmatprep.mubr.f32.mxu0 0.0
    %4853 = vmatmul.mubr.f32.gmra.mrb[0].mxu0 %v4691
    %v4854 = vpop.f32.mrb[0].mxu0
    %v4855 = vadd.f32 0.0, %v4854
    %v4856 = vpop.f32.mrb[0].mxu0
    %4857 = vdwg.mxu0
    %v4858 = vsel %vm436, %v4760, 0.0
    %v4859 = vsel %vm436, %v4765, 0.0
    %v4860 = vsel %vm436, %v4770, 0.0
    %v4861 = vsel %vm436, %v4775, 0.0
    %4862 = vrot.lane.b32.xlu0 %v4858, 32
    %v4863 = vpop.permute.xlu0 %4862
    %v4864 = vsel %vm441, %v4863, %v4858
    %4865 = vrot.lane.b32.xlu0 %v4859, 32
    %v4866 = vpop.permute.xlu0 %4865
    %v4867 = vsel %vm441, %v4866, %v4859
    %4868 = vrot.lane.b32.xlu0 %v4860, 32
    %v4869 = vpop.permute.xlu0 %4868
    %v4870 = vsel %vm441, %v4869, %v4860
    %4871 = vrot.lane.b32.xlu0 %v4861, 32
    %v4872 = vpop.permute.xlu0 %4871
    %v4873 = vsel %vm441, %v4872, %v4861
    %4874 = vrot.lane.b32.xlu0 %v4864, 32
    %v4875 = vpop.permute.xlu0 %4874
    %4876 = vrot.lane.b32.xlu0 %v4867, 32
    %v4877 = vpop.permute.xlu0 %4876
    %4878 = vrot.lane.b32.xlu0 %v4870, 32
    %v4879 = vpop.permute.xlu0 %4878
    %4880 = vrot.lane.b32.xlu0 %v4873, 32
    %v4881 = vpop.permute.xlu0 %4880
    %v4882 = vsel %vm441, %v4875, %v4858
    %v4883 = vsel %vm441, %v4877, %v4859
    %v4884 = vsel %vm441, %v4879, %v4860
    %v4885 = vsel %vm441, %v4881, %v4861
    %v4886 = vsel %vm467, %v4780, 0.0
    %v4887 = vsel %vm467, %v4785, 0.0
    %v4888 = vsel %vm467, %v4790, 0.0
    %v4889 = vsel %vm467, %v4795, 0.0
    %4890 = vrot.lane.b32.xlu0 %v4886, 32
    %v4891 = vpop.permute.xlu0 %4890
    %v4892 = vsel %vm441, %v4891, %v4886
    %4893 = vrot.lane.b32.xlu0 %v4887, 32
    %v4894 = vpop.permute.xlu0 %4893
    %v4895 = vsel %vm441, %v4894, %v4887
    %4896 = vrot.lane.b32.xlu0 %v4888, 32
    %v4897 = vpop.permute.xlu0 %4896
    %v4898 = vsel %vm441, %v4897, %v4888
    %4899 = vrot.lane.b32.xlu0 %v4889, 32
    %v4900 = vpop.permute.xlu0 %4899
    %v4901 = vsel %vm441, %v4900, %v4889
    %4902 = vrot.lane.b32.xlu0 %v4892, 32
    %v4903 = vpop.permute.xlu0 %4902
    %4904 = vrot.lane.b32.xlu0 %v4895, 32
    %v4905 = vpop.permute.xlu0 %4904
    %4906 = vrot.lane.b32.xlu0 %v4898, 32
    %v4907 = vpop.permute.xlu0 %4906
    %4908 = vrot.lane.b32.xlu0 %v4901, 32
    %v4909 = vpop.permute.xlu0 %4908
    %v4910 = vsel %vm441, %v4903, %v4886
    %v4911 = vsel %vm441, %v4905, %v4887
    %v4912 = vsel %vm441, %v4907, %v4888
    %v4913 = vsel %vm441, %v4909, %v4889
    %v4914 = vsel %vm497, %v4820, 0.0
    %v4915 = vsel %vm497, %v4825, 0.0
    %v4916 = vsel %vm497, %v4830, 0.0
    %v4917 = vsel %vm497, %v4835, 0.0
    %4918 = vrot.lane.b32.xlu0 %v4914, 32
    %v4919 = vpop.permute.xlu0 %4918
    %v4920 = vsel %vm441, %v4919, %v4914
    %4921 = vrot.lane.b32.xlu0 %v4915, 32
    %v4922 = vpop.permute.xlu0 %4921
    %v4923 = vsel %vm441, %v4922, %v4915
    %4924 = vrot.lane.b32.xlu0 %v4916, 32
    %v4925 = vpop.permute.xlu0 %4924
    %v4926 = vsel %vm441, %v4925, %v4916
    %4927 = vrot.lane.b32.xlu0 %v4917, 32
    %v4928 = vpop.permute.xlu0 %4927
    %v4929 = vsel %vm441, %v4928, %v4917
    %4930 = vrot.lane.b32.xlu0 %v4920, 32
    %v4931 = vpop.permute.xlu0 %4930
    %4932 = vrot.lane.b32.xlu0 %v4923, 32
    %v4933 = vpop.permute.xlu0 %4932
    %4934 = vrot.lane.b32.xlu0 %v4926, 32
    %v4935 = vpop.permute.xlu0 %4934
    %4936 = vrot.lane.b32.xlu0 %v4929, 32
    %v4937 = vpop.permute.xlu0 %4936
    %v4938 = vsel %vm441, %v4931, %v4914
    %v4939 = vsel %vm441, %v4933, %v4915
    %v4940 = vsel %vm441, %v4935, %v4916
    %v4941 = vsel %vm441, %v4937, %v4917
    %v4942 = vsel %vm527, %v4840, 0.0
    %v4943 = vsel %vm527, %v4845, 0.0
    %v4944 = vsel %vm527, %v4850, 0.0
    %v4945 = vsel %vm527, %v4855, 0.0
    %4946 = vrot.lane.b32.xlu0 %v4942, 32
    %v4947 = vpop.permute.xlu0 %4946
    %v4948 = vsel %vm441, %v4947, %v4942
    %4949 = vrot.lane.b32.xlu0 %v4943, 32
    %v4950 = vpop.permute.xlu0 %4949
    %v4951 = vsel %vm441, %v4950, %v4943
    %4952 = vrot.lane.b32.xlu0 %v4944, 32
    %v4953 = vpop.permute.xlu0 %4952
    %v4954 = vsel %vm441, %v4953, %v4944
    %4955 = vrot.lane.b32.xlu0 %v4945, 32
    %v4956 = vpop.permute.xlu0 %4955
    %v4957 = vsel %vm441, %v4956, %v4945
    %4958 = vrot.lane.b32.xlu0 %v4948, 32
    %v4959 = vpop.permute.xlu0 %4958
    %4960 = vrot.lane.b32.xlu0 %v4951, 32
    %v4961 = vpop.permute.xlu0 %4960
    %4962 = vrot.lane.b32.xlu0 %v4954, 32
    %v4963 = vpop.permute.xlu0 %4962
    %4964 = vrot.lane.b32.xlu0 %v4957, 32
    %v4965 = vpop.permute.xlu0 %4964
    %v4966 = vsel %vm441, %v4959, %v4942
    %v4967 = vsel %vm441, %v4961, %v4943
    %v4968 = vsel %vm441, %v4963, %v4944
    %v4969 = vsel %vm441, %v4965, %v4945
    %4974 = vrot.lane.b32.xlu0 %v4910, 127
    %v4975 = vpop.permute.xlu0 %4974
    %4976 = vrot.lane.b32.xlu0 %v4911, 127
    %v4977 = vpop.permute.xlu0 %4976
    %4978 = vrot.lane.b32.xlu0 %v4912, 127
    %v4979 = vpop.permute.xlu0 %4978
    %4980 = vrot.lane.b32.xlu0 %v4913, 127
    %v4981 = vpop.permute.xlu0 %4980
    %v4986 = vadd.f32 %v4882, %v4975
    %v4987 = vadd.f32 %v4883, %v4977
    %v4988 = vadd.f32 %v4884, %v4979
    %v4989 = vadd.f32 %v4885, %v4981
    %4994 = vrot.lane.b32.xlu0 %v4938, 127
    %v4995 = vpop.permute.xlu0 %4994
    %4996 = vrot.lane.b32.xlu0 %v4939, 127
    %v4997 = vpop.permute.xlu0 %4996
    %4998 = vrot.lane.b32.xlu0 %v4940, 127
    %v4999 = vpop.permute.xlu0 %4998
    %5000 = vrot.lane.b32.xlu0 %v4941, 127
    %v5001 = vpop.permute.xlu0 %5000
    %v5006 = vadd.f32 %v4800, %v4995
    %v5007 = vadd.f32 %v4805, %v4997
    %v5008 = vadd.f32 %v4810, %v4999
    %v5009 = vadd.f32 %v4815, %v5001
    %5014 = vrot.lane.b32.xlu0 %v5006, 30
    %v5015 = vpop.permute.xlu0 %5014
    %5016 = vrot.lane.b32.xlu0 %v5007, 30
    %v5017 = vpop.permute.xlu0 %5016
    %5018 = vrot.lane.b32.xlu0 %v5008, 30
    %v5019 = vpop.permute.xlu0 %5018
    %5020 = vrot.lane.b32.xlu0 %v5009, 30
    %v5021 = vpop.permute.xlu0 %5020
    %v5026 = vadd.f32 %v4986, %v5015
    %v5027 = vadd.f32 %v4987, %v5017
    %v5028 = vadd.f32 %v4988, %v5019
    %v5029 = vadd.f32 %v4989, %v5021
    %5034 = vrot.lane.b32.xlu0 %v4966, 28
    %v5035 = vpop.permute.xlu0 %5034
    %5036 = vrot.lane.b32.xlu0 %v4967, 28
    %v5037 = vpop.permute.xlu0 %5036
    %5038 = vrot.lane.b32.xlu0 %v4968, 28
    %v5039 = vpop.permute.xlu0 %5038
    %5040 = vrot.lane.b32.xlu0 %v4969, 28
    %v5041 = vpop.permute.xlu0 %5040
    %v5046 = vadd.f32 %v5026, %v5035
    %v5047 = vadd.f32 %v5027, %v5037
    %v5048 = vadd.f32 %v5028, %v5039
    %v5049 = vadd.f32 %v5029, %v5041
    %s5050 = scalar_lea.vmem %s4, 288
    %v5051 = vld [vmem:[%s5050] sm:$0xff]
    %v5052 = vld [vmem:[%s5050 + $0x8] sm:$0xff]
    %v5053 = vld [vmem:[%s5050 + $0x10] sm:$0xff]
    %v5054 = vld [vmem:[%s5050 + $0x18] sm:$0xff]
    %5056 = vset.pattern.permute.xlu0 0
    %5057 = vperm.xlu0 %5056, %v5051
    %v5058 = vpop.permute.xlu0 %5057
    %5061 = vset.pattern.permute.xlu0 0
    %5062 = vperm.xlu0 %5061, %v5052
    %v5063 = vpop.permute.xlu0 %5062
    %5066 = vset.pattern.permute.xlu0 0
    %5067 = vperm.xlu0 %5066, %v5053
    %v5068 = vpop.permute.xlu0 %5067
    %5071 = vset.pattern.permute.xlu0 0
    %5072 = vperm.xlu0 %5071, %v5054
    %v5073 = vpop.permute.xlu0 %5072
    %v5075 = vadd.f32 %v5046, %v5058
    %v5076 = vadd.f32 %v5047, %v5063
    %v5077 = vadd.f32 %v5048, %v5068
    %v5078 = vadd.f32 %v5049, %v5073
    %v5079 = vmul.f32 %v5075, 0.3
    %v5080 = vmul.f32 %v5076, 0.3
    %v5081 = vmul.f32 %v5077, 0.3
    %v5082 = vmul.f32 %v5078, 0.3
    %5087 = vrot.lane.b32.xlu0 %v5079, 98
    %v5088 = vpop.permute.xlu0 %5087
    %5089 = vrot.lane.b32.xlu0 %v5080, 98
    %v5090 = vpop.permute.xlu0 %5089
    %5091 = vrot.lane.b32.xlu0 %v5081, 98
    %v5092 = vpop.permute.xlu0 %5091
    %5093 = vrot.lane.b32.xlu0 %v5082, 98
    %v5094 = vpop.permute.xlu0 %5093
    %v5099 = vadd.f32 %v4117, %v5088
    %v5100 = vadd.f32 %v4118, %v5090
    %v5101 = vadd.f32 %v4119, %v5092
    %v5102 = vadd.f32 %v4120, %v5094
    %v5103 = vld [vmem:[%s5] sm:$0xff]
    %v5104 = vld [vmem:[%s5 + $0x8] sm:$0xff]
    %v5105 = vld [vmem:[%s5 + $0x10] sm:$0xff]
    %v5106 = vld [vmem:[%s5 + $0x18] sm:$0xff]
    %v5107 = vmul.f32 %v5099, %v5103
    %v5108 = vmul.f32 %v5100, %v5104
    %v5109 = vmul.f32 %v5101, %v5105
    %v5110 = vmul.f32 %v5102, %v5106
    %v5111 = vld [vmem:[%s6] sm:$0xff]
    %v5112 = vld [vmem:[%s6 + $0x8] sm:$0xff]
    %v5113 = vld [vmem:[%s6 + $0x10] sm:$0xff]
    %v5114 = vld [vmem:[%s6 + $0x18] sm:$0xff]
    %v5116 = vsel %vm209, %v5107, 0
    %v5119 = vsel %vm209, %v5108, 0
    %v5122 = vsel %vm209, %v5109, 0
    %v5125 = vsel %vm209, %v5110, 0
    %5127 = vmatprep.subr.mxu0 0.0
    %5128 = vmatpush1.msra.mxu0 %v5111
    %5129 = vmatprep.subr.mxu0 0.0
    %5130 = vmatpush1.msra.mxu0 %v5112
    %5131 = vmatprep.subr.mxu0 0.0
    %5132 = vmatpush1.msra.mxu0 %v5113
    %5133 = vmatprep.subr.mxu0 0.0
    %5134 = vmatpush1.msra.mxu0 %v5114
    %5135 = vmatprep.subr.mxu0 0.0
    %5136 = vmatpush1.msra.mxu0 0.0
    %5137 = vmatprep.subr.mxu0 0.0
    %5138 = vmatpush1.msra.mxu0 0.0
    %5139 = vmatprep.subr.mxu0 0.0
    %5140 = vmatpush1.msra.mxu0 0.0
    %5141 = vmatprep.subr.mxu0 0.0
    %5142 = vmatpush1.msra.mxu0 0.0
    %5143 = vmatprep.subr.mxu0 0.0
    %5144 = vmatpush1.msra.mxu0 0.0
    %5145 = vmatprep.subr.mxu0 0.0
    %5146 = vmatpush1.msra.mxu0 0.0
    %5147 = vmatprep.subr.mxu0 0.0
    %5148 = vmatpush1.msra.mxu0 0.0
    %5149 = vmatprep.subr.mxu0 0.0
    %5150 = vmatpush1.msra.mxu0 0.0
    %5151 = vmatprep.subr.mxu0 0.0
    %5152 = vmatpush1.msra.mxu0 0.0
    %5153 = vmatprep.subr.mxu0 0.0
    %5154 = vmatpush1.msra.mxu0 0.0
    %5155 = vmatprep.subr.mxu0 0.0
    %5156 = vmatpush1.msra.mxu0 0.0
    %5157 = vmatprep.subr.mxu0 0.0
    %5158 = vmatpush1.msra.mxu0 0.0
    %5159 = vmatprep.subr.mxu0 0.0
    %5160 = vmatpush1.msra.mxu0 0.0
    %5161 = vmatprep.subr.mxu0 0.0
    %5162 = vmatpush1.msra.mxu0 0.0
    %5163 = vmatprep.subr.mxu0 0.0
    %5164 = vmatpush1.msra.mxu0 0.0
    %5165 = vmatprep.subr.mxu0 0.0
    %5166 = vmatpush1.msra.mxu0 0.0
    %5167 = vmatprep.subr.mxu0 0.0
    %5168 = vmatpush1.msra.mxu0 0.0
    %5169 = vmatprep.subr.mxu0 0.0
    %5170 = vmatpush1.msra.mxu0 0.0
    %5171 = vmatprep.subr.mxu0 0.0
    %5172 = vmatpush1.msra.mxu0 0.0
    %5173 = vmatprep.subr.mxu0 0.0
    %5174 = vmatpush1.msra.mxu0 0.0
    %5175 = vmatprep.subr.mxu0 0.0
    %5176 = vmatpush1.msra.mxu0 0.0
    %5177 = vmatprep.subr.mxu0 0.0
    %5178 = vmatpush1.msra.mxu0 0.0
    %5179 = vmatprep.subr.mxu0 0.0
    %5180 = vmatpush1.msra.mxu0 0.0
    %5181 = vmatprep.subr.mxu0 0.0
    %5182 = vmatpush1.msra.mxu0 0.0
    %5183 = vmatprep.subr.mxu0 0.0
    %5184 = vmatpush1.msra.mxu0 0.0
    %5185 = vmatprep.subr.mxu0 0.0
    %5186 = vmatpush1.msra.mxu0 0.0
    %5187 = vmatprep.subr.mxu0 0.0
    %5188 = vmatpush1.msra.mxu0 0.0
    %5189 = vmatprep.subr.mxu0 0.0
    %5190 = vmatpush1.msra.mxu0 0.0
    %5191 = vmatprep.mubr.f32.mxu0 0.0
    %5192 = vmatmul.mubr.f32.gmra.mrb[0].mxu0 %v5116
    %v5193 = vpop.f32.mrb[0].mxu0
    %v5194 = vadd.f32 0.0, %v5193
    %v5195 = vpop.f32.mrb[0].mxu0
    %5196 = vmatprep.mubr.f32.mxu0 0.0
    %5197 = vmatmul.mubr.f32.gmra.mrb[0].mxu0 %v5119
    %v5198 = vpop.f32.mrb[0].mxu0
    %v5199 = vadd.f32 0.0, %v5198
    %v5200 = vpop.f32.mrb[0].mxu0
    %5201 = vmatprep.mubr.f32.mxu0 0.0
    %5202 = vmatmul.mubr.f32.gmra.mrb[0].mxu0 %v5122
    %v5203 = vpop.f32.mrb[0].mxu0
    %v5204 = vadd.f32 0.0, %v5203
    %v5205 = vpop.f32.mrb[0].mxu0
    %5206 = vmatprep.mubr.f32.mxu0 0.0
    %5207 = vmatmul.mubr.f32.gmra.mrb[0].mxu0 %v5125
    %v5208 = vpop.f32.mrb[0].mxu0
    %v5209 = vadd.f32 0.0, %v5208
    %v5210 = vpop.f32.mrb[0].mxu0
    %5211 = vdwg.mxu0
    %vm5212 = vcmask 15360
    %v5213 = vsel %vm5212, %v5194, 0.0
    %v5214 = vsel %vm5212, %v5199, 0.0
    %v5215 = vadd.f32 %v5213, %v5214
    %v5216 = vsel %vm5212, %v5204, 0.0
    %v5217 = vadd.f32 %v5215, %v5216
    %v5218 = vsel %vm5212, %v5209, 0.0
    %v5219 = vadd.f32 %v5217, %v5218
    %v5220 = vrot.slane %v5219, 4
    %v5221 = vadd.f32 %v5219, %v5220
    %v5222 = vrot.slane %v5221, 2
    %v5223 = vadd.f32 %v5221, %v5222
    %v5224 = vrot.slane %v5223, 1
    %v5225 = vadd.f32 %v5223, %v5224
    %v5226 = vld [vmem:[#allocation2] sm:$0x1]
    %5228 = vset.pattern.permute.xlu0 0
    %5229 = vperm.xlu0 %5228, %v5226
    %v5230 = vpop.permute.xlu0 %5229
    %v5232 = vlaneseq
    %v5233 = vshrl.u32 %v5232, 7
    %v5234 = vsub.s32 0, %v5233
    %v5235 = vrot.slane %v5230, %v5234
    %v5236 = vadd.f32 %v5225, %v5235
    %vm5237 = vcmask 8192
    %5238 = vst.msk [vmem:[#allocation3] sm:$0x1] %vm5237, %v5236
    // Predicated region
    $region34: #{tpu_custom_call.1} parent=1 // pred_check
      _
    $region35: #{tpu_custom_call.1} parent=1 // pred_check_branch
      %5240 = sbr.rel (0) target = $region37
    $region36: #{tpu_custom_call.1} parent=1 // pred_region
      %s5242 = ssub.s32 16, 16
      %5243 = vsyncadd [#allocation4], %s5242
      %s5245 = sshll.u32 [#allocation3], 4
      %s5246 = int_to_ptr.vmem [resolvable:$true] %s5245
      %5248 = dma.vmem_to_hbm [thread:$0]  %s5246, 16, %s8, [#allocation4]
    $region37: #{tpu_custom_call.1} parent=1 // pred_fallthru
      _
    // Predicated region
    $region38: #{tpu_custom_call.1} parent=1 // pred_check
      _
    $region39: #{tpu_custom_call.1} parent=1 // pred_check_branch
      %5250 = sbr.rel (0) target = $region41
    $region40: #{tpu_custom_call.1} parent=1 // pred_region
      %5251 = dma.done [#allocation4], 16
    $region41: #{tpu_custom_call.1} parent=1 // pred_fallthru
      _
    %5252 = vsyncpa [#allocation4], 1

</llo_original>
